<compile_context>
chip_gen: v6e
topology: v6e:2x2x1
jax: 0.10.0
libtpu: 0.0.40
codegen_flags: <defaults>
</compile_context>

<pallas_src>
import functools

import jax
import jax.numpy as jnp
from jax import lax
from jax.experimental import pallas as pl
from jax.experimental.pallas import tpu as pltpu


# ----------------------------------------------------------------------------
# In-kernel helpers
# ----------------------------------------------------------------------------
def _layer_norm(x, w, b, eps=1e-5):
    # PyTorch nn.LayerNorm semantics: biased variance over last dim.
    mu = jnp.mean(x, axis=-1, keepdims=True)
    var = jnp.mean((x - mu) ** 2, axis=-1, keepdims=True)
    return (x - mu) * lax.rsqrt(var + eps) * w + b


# ----------------------------------------------------------------------------
# Pallas kernel: ALL encoder layers fused (grid axis = layer index)
# ----------------------------------------------------------------------------
def fused_encoder_kernel(x_ref,
                         wqkv_ref, bqkv_ref, wo_ref, bo_ref,
                         ln1w_ref, ln1b_ref,
                         w1_ref, b1_ref, w2_ref, b2_ref,
                         ln2w_ref, ln2b_ref,
                         o_ref, acc_ref, *, batch, seq, d_model, nhead):
    layer = pl.program_id(0)

    # Load the embedded input into the carried VMEM activation at the first layer.
    @pl.when(layer == 0)
    def _():
        acc_ref[...] = x_ref[...]

    x = acc_ref[...]                                   # (B*S, D) float32
    D = d_model
    hd = D // nhead
    scale = 1.0 / float(hd) ** 0.5

    # --- fused in_proj: one (B*S, D) @ (D, 3D) matmul, then static lane slices
    qkv = jnp.dot(x, wqkv_ref[0], preferred_element_type=jnp.float32) + bqkv_ref[0]
    q = qkv[:, 0:D]
    if scale != 1.0:                                   # scale == 1.0 when head_dim == 1
        q = q * scale
    k = qkv[:, D:2 * D]
    v = qkv[:, 2 * D:3 * D]

    attn_rows = []
    if hd == 1:
        # Degenerate head_dim=1 (d_model=5, nhead=5): scores/PV are outer products.
        # Do them on the VPU; one 2D transpose of k and v per layer gives row views.
        kT = k.T                                       # (D, B*S)
        vT = v.T                                       # (D, B*S)
        for b in range(batch):                         # static loop, B tiny
            r0 = b * seq
            qb = q[r0:r0 + seq, :]                     # (S, D)
            kbT = kT[:, r0:r0 + seq]                   # (D, S)
            vbT = vT[:, r0:r0 + seq]                   # (D, S)
            heads = []
            for h in range(nhead):                     # static loop over heads
                s = qb[:, h:h + 1] * kbT[h:h + 1, :]   # (S, S) outer product (VPU)
                m = jnp.max(s, axis=-1, keepdims=True)
                e = jnp.exp(s - m)
                p = e * pl.reciprocal(jnp.sum(e, axis=-1, keepdims=True), approx=True)
                heads.append(jnp.sum(p * vbT[h:h + 1, :], axis=-1, keepdims=True))
            attn_rows.append(jnp.concatenate(heads, axis=-1))   # (S, D)
    else:
        # General head_dim > 1 fallback (not used by this module's config).
        for b in range(batch):
            r0 = b * seq
            qb = q[r0:r0 + seq, :]
            kb = k[r0:r0 + seq, :]
            vb = v[r0:r0 + seq, :]
            heads = []
            for h in range(nhead):
                qh = qb[:, h * hd:(h + 1) * hd]
                kh = kb[:, h * hd:(h + 1) * hd]
                vh = vb[:, h * hd:(h + 1) * hd]
                s = lax.dot_general(qh, kh, (((1,), (1,)), ((), ())),
                                    preferred_element_type=jnp.float32)
                m = jnp.max(s, axis=-1, keepdims=True)
                e = jnp.exp(s - m)
                p = e * pl.reciprocal(jnp.sum(e, axis=-1, keepdims=True), approx=True)
                heads.append(jnp.dot(p, vh, preferred_element_type=jnp.float32))
            attn_rows.append(jnp.concatenate(heads, axis=-1))
    attn = jnp.concatenate(attn_rows, axis=0)          # (B*S, D)

    # --- output projection, residual + LayerNorm 1 (post-norm) ----------------
    attn = jnp.dot(attn, wo_ref[0], preferred_element_type=jnp.float32) + bo_ref[0]
    x1 = _layer_norm(x + attn, ln1w_ref[0], ln1b_ref[0])

    # --- feed-forward (Linear -> ReLU -> Linear) ------------------------------
    h1 = jnp.dot(x1, w1_ref[0], preferred_element_type=jnp.float32) + b1_ref[0]
    h1 = jnp.maximum(h1, 0.0)
    ff = jnp.dot(h1, w2_ref[0], preferred_element_type=jnp.float32) + b2_ref[0]

    # --- residual + LayerNorm 2, carry activation -----------------------------
    x2 = _layer_norm(x1 + ff, ln2w_ref[0], ln2b_ref[0])
    acc_ref[...] = x2

    # Write result to HBM once, at the last layer only.
    @pl.when(layer == pl.num_programs(0) - 1)
    def _():
        o_ref[...] = x2


def transformer_encoder(x, params, *, nhead):
    B, S, D = x.shape
    L = params['wqkv_t'].shape[0]
    x2d = x.reshape(B * S, D)

    weight_names = ('wqkv_t', 'bqkv', 'wo_t', 'bo', 'ln1_w', 'ln1_b',
                    'w1_t', 'b1', 'w2_t', 'b2', 'ln2_w', 'ln2_b')
    weights = [params[name] for name in weight_names]

    def per_layer_spec(arr):
        # One layer's slice of the stacked weight per grid step.
        return pl.BlockSpec((1,) + arr.shape[1:], lambda l: (l, 0, 0))

    kern = functools.partial(fused_encoder_kernel,
                             batch=B, seq=S, d_model=D, nhead=nhead)

    out = pl.pallas_call(
        kern,
        out_shape=jax.ShapeDtypeStruct((B * S, D), jnp.float32),
        grid=(L,),
        in_specs=[pl.BlockSpec((B * S, D), lambda l: (0, 0))]
                 + [per_layer_spec(w) for w in weights],
        out_specs=pl.BlockSpec((B * S, D), lambda l: (0, 0)),
        scratch_shapes=[pltpu.VMEM((B * S, D), jnp.float32)],   # carried activation
        compiler_params=pltpu.CompilerParams(
            dimension_semantics=("arbitrary",)),                # layers are sequential
    )(x2d, *weights)
    return out.reshape(B, S, D)


# ----------------------------------------------------------------------------
# Pallas kernel: Flatten -> Linear -> softmax (classifier head, single block)
# ----------------------------------------------------------------------------
def fc_softmax_kernel(x_ref, w_ref, b_ref, o_ref):
    logits = (jnp.dot(x_ref[...], w_ref[...], preferred_element_type=jnp.float32)
              + b_ref[...])
    m = jnp.max(logits, axis=-1, keepdims=True)
    e = jnp.exp(logits - m)
    o_ref[...] = e / jnp.sum(e, axis=-1, keepdims=True)


def fc_softmax(xf, w_fc_t, b_fc):
    B, Fin = xf.shape
    C = w_fc_t.shape[1]
    return pl.pallas_call(
        fc_softmax_kernel,
        out_shape=jax.ShapeDtypeStruct((B, C), jnp.float32),
        grid=(1,),
        in_specs=[pl.BlockSpec((B, Fin), lambda i: (0, 0)),
                  pl.BlockSpec((Fin, C), lambda i: (0, 0)),
                  pl.BlockSpec((1, C), lambda i: (0, 0))],
        out_specs=pl.BlockSpec((B, C), lambda i: (0, 0)),
    )(xf, w_fc_t, b_fc)


# ----------------------------------------------------------------------------
# Glue: embedding lookup with max_norm=True (== max_norm 1.0) renormalization
# ----------------------------------------------------------------------------
def embed(table, ids, max_norm=1.0):
    emb = jnp.take(table, ids, axis=0)                 # (B, S, D)
    norm = jnp.sqrt(jnp.sum(emb * emb, axis=-1, keepdims=True))
    scale = jnp.where(norm > max_norm, max_norm / (norm + 1e-7), 1.0)
    return emb * scale


# ----------------------------------------------------------------------------
# Parameters (deterministic synthetic init, stacked along a leading layer axis)
# ----------------------------------------------------------------------------
def init_params(key, vocab_size, d_model, dim_ff, num_layers, seq_len, n_classes):
    ks = jax.random.split(key, 6)
    n = lambda kk, shape, s: jax.random.normal(kk, shape, jnp.float32) * s
    L, D, F = num_layers, d_model, dim_ff

    emb_table = jax.random.normal(ks[0], (vocab_size, D), jnp.float32)
    params = dict(
        wqkv_t=n(ks[1], (L, D, 3 * D), 0.3),
        bqkv=jnp.zeros((L, 1, 3 * D), jnp.float32),
        wo_t=n(ks[2], (L, D, D), 0.3),
        bo=jnp.zeros((L, 1, D), jnp.float32),
        ln1_w=jnp.ones((L, 1, D), jnp.float32),
        ln1_b=jnp.zeros((L, 1, D), jnp.float32),
        w1_t=n(ks[3], (L, D, F), 0.1),
        b1=jnp.zeros((L, 1, F), jnp.float32),
        w2_t=n(ks[4], (L, F, D), 0.1),
        b2=jnp.zeros((L, 1, D), jnp.float32),
        ln2_w=jnp.ones((L, 1, D), jnp.float32),
        ln2_b=jnp.zeros((L, 1, D), jnp.float32),
    )
    w_fc_t = n(ks[5], (seq_len * D, n_classes), 0.05)
    b_fc = jnp.zeros((1, n_classes), jnp.float32)
    return emb_table, params, w_fc_t, b_fc


# ----------------------------------------------------------------------------
# Full forward pass
# ----------------------------------------------------------------------------
@functools.partial(jax.jit, static_argnames=("nhead",))
def forward(ids, emb_table, params, w_fc_t, b_fc, *, nhead):
    x = embed(emb_table, ids)                          # (B, S, D)   plain-JAX glue
    x = transformer_encoder(x, params, nhead=nhead)    # fused Pallas kernel (16 layers)
    B, S, D = x.shape
    xf = x.reshape(B, S * D)                           # Flatten (free in XLA)
    return fc_softmax(xf, w_fc_t, b_fc)                # tiny Pallas head kernel


if __name__ == "__main__":
    # Small shapes consistent with the module's forward:
    #   tokens (B, S) -> embed (B, S, D) -> 16 encoder layers -> flatten
    #   -> Linear(S*D, n_classes) -> softmax
    B, S = 2, 8
    VOCAB = 50
    D_MODEL = 5          # embed_dim default in the module
    NHEAD = 5            # nhead hard-coded to 5 in the module (head_dim == 1)
    DIM_FF = 2048        # nn.TransformerEncoderLayer default
    NUM_LAYERS = 16
    N_CLASSES = 4        # out_num_classes
    # Note: original fc1 is Linear(18600, C) i.e. seq_len 3720; shrunk to S=8
    # so fc1 in_features = S * D_MODEL = 40.

    key = jax.random.PRNGKey(0)
    k_params, k_ids = jax.random.split(key)
    emb_table, params, w_fc_t, b_fc = init_params(
        k_params, VOCAB, D_MODEL, DIM_FF, NUM_LAYERS, S, N_CLASSES)
    ids = jax.random.randint(k_ids, (B, S), 0, VOCAB, dtype=jnp.int32)

    out = forward(ids, emb_table, params, w_fc_t, b_fc, nhead=NHEAD)
    out = jax.block_until_ready(out)
    assert out.shape == (B, N_CLASSES)
    assert bool(jnp.all(jnp.isfinite(out)))
    # softmax rows should sum to ~1
    assert bool(jnp.all(jnp.abs(jnp.sum(out, axis=-1) - 1.0) < 1e-4))
    print("KERNEL_OK")
</pallas_src>

<mosaic_0001>
module attributes {stable_mosaic.version = 11 : i64} {
  func.func @fused_encoder_kernel(%arg0: i32, %arg1: memref<16x5xf32, #tpu.memory_space<vmem>>, %arg2: memref<1x5x15xf32, #tpu.memory_space<vmem>>, %arg3: memref<1x1x15xf32, #tpu.memory_space<vmem>>, %arg4: memref<1x5x5xf32, #tpu.memory_space<vmem>>, %arg5: memref<1x1x5xf32, #tpu.memory_space<vmem>>, %arg6: memref<1x1x5xf32, #tpu.memory_space<vmem>>, %arg7: memref<1x1x5xf32, #tpu.memory_space<vmem>>, %arg8: memref<1x5x2048xf32, #tpu.memory_space<vmem>>, %arg9: memref<1x1x2048xf32, #tpu.memory_space<vmem>>, %arg10: memref<1x2048x5xf32, #tpu.memory_space<vmem>>, %arg11: memref<1x1x5xf32, #tpu.memory_space<vmem>>, %arg12: memref<1x1x5xf32, #tpu.memory_space<vmem>>, %arg13: memref<1x1x5xf32, #tpu.memory_space<vmem>>, %arg14: memref<16x5xf32, #tpu.memory_space<vmem>>, %arg15: memref<16x5xf32, #tpu.memory_space<vmem>>) attributes {dimension_semantics = [#tpu.dimension_semantics<arbitrary>], iteration_bounds = array<i64: 16>, scalar_prefetch = 0 : i64, scratch_operands = 1 : i64, tpu.core_type = #tpu.core_type<tc>, window_params = [{pipeline_mode = #tpu.pipeline_mode<synchronous>, transform_indices = @transform_0, window_bounds = array<i64: 16, 5>}, {transform_indices = @transform_1, window_bounds = array<i64: 1, 5, 15>}, {transform_indices = @transform_2, window_bounds = array<i64: 1, 1, 15>}, {transform_indices = @transform_3, window_bounds = array<i64: 1, 5, 5>}, {transform_indices = @transform_4, window_bounds = array<i64: 1, 1, 5>}, {transform_indices = @transform_5, window_bounds = array<i64: 1, 1, 5>}, {transform_indices = @transform_6, window_bounds = array<i64: 1, 1, 5>}, {transform_indices = @transform_7, window_bounds = array<i64: 1, 5, 2048>}, {transform_indices = @transform_8, window_bounds = array<i64: 1, 1, 2048>}, {transform_indices = @transform_9, window_bounds = array<i64: 1, 2048, 5>}, {transform_indices = @transform_10, window_bounds = array<i64: 1, 1, 5>}, {transform_indices = @transform_11, window_bounds = array<i64: 1, 1, 5>}, {transform_indices = @transform_12, window_bounds = array<i64: 1, 1, 5>}, {pipeline_mode = #tpu.pipeline_mode<synchronous>, transform_indices = @transform_13, window_bounds = array<i64: 16, 5>}]} {
    %c0_i32 = arith.constant 0 : i32
    %0 = arith.cmpi eq, %arg0, %c0_i32 : i32
    %1 = arith.extui %0 : i1 to i32
    %c0_i32_0 = arith.constant 0 : i32
    %2 = arith.cmpi ne, %1, %c0_i32_0 : i32
    scf.if %2 {
      %c0_85 = arith.constant 0 : index
      %c0_86 = arith.constant 0 : index
      %306 = vector.load %arg1[%c0_85, %c0_86] : memref<16x5xf32, #tpu.memory_space<vmem>>, vector<16x5xf32>
      %c0_87 = arith.constant 0 : index
      %c0_88 = arith.constant 0 : index
      %307 = vector.load %arg15[%c0_87, %c0_88] : memref<16x5xf32, #tpu.memory_space<vmem>>, vector<16x5xf32>
      tpu.vector_store %arg15[%c0_87, %c0_88], %306 {strides = array<i32>} : memref<16x5xf32, #tpu.memory_space<vmem>>, vector<16x5xf32>,
    } else {
    }
    %c0 = arith.constant 0 : index
    %c0_1 = arith.constant 0 : index
    %3 = vector.load %arg15[%c0, %c0_1] : memref<16x5xf32, #tpu.memory_space<vmem>>, vector<16x5xf32>
    %c0_2 = arith.constant 0 : index
    %c0_3 = arith.constant 0 : index
    %c0_4 = arith.constant 0 : index
    %4 = vector.load %arg2[%c0_2, %c0_3, %c0_4] : memref<1x5x15xf32, #tpu.memory_space<vmem>>, vector<1x5x15xf32>
    %5 = vector.shape_cast %4 : vector<1x5x15xf32> to vector<5x15xf32>
    %cst = arith.constant dense<0.000000e+00> : vector<16x15xf32>
    %6 = tpu.matmul %3, %5, %cst {dimension_numbers = #tpu.dot_dimension_numbers<[1], [0], [0], [1], [0, 0, 1, 1], [], []>} : vector<16x5xf32>, vector<5x15xf32>, vector<16x15xf32> -> vector<16x15xf32>
    %c0_5 = arith.constant 0 : index
    %c0_6 = arith.constant 0 : index
    %c0_7 = arith.constant 0 : index
    %7 = vector.load %arg3[%c0_5, %c0_6, %c0_7] : memref<1x1x15xf32, #tpu.memory_space<vmem>>, vector<1x1x15xf32>
    %8 = vector.shape_cast %7 : vector<1x1x15xf32> to vector<1x15xf32>
    %9 = vector.broadcast %8 : vector<1x15xf32> to vector<16x15xf32>
    %10 = arith.addf %6, %9 : vector<16x15xf32>
    %11 = vector.extract_strided_slice %10 {offsets = [0, 0], sizes = [16, 5], strides = [1, 1]} : vector<16x15xf32> to vector<16x5xf32>
    %12 = vector.extract_strided_slice %10 {offsets = [0, 5], sizes = [16, 5], strides = [1, 1]} : vector<16x15xf32> to vector<16x5xf32>
    %13 = vector.extract_strided_slice %10 {offsets = [0, 10], sizes = [16, 5], strides = [1, 1]} : vector<16x15xf32> to vector<16x5xf32>
    %14 = tpu.transpose %12, [1, 0] : vector<16x5xf32> -> vector<5x16xf32>
    %15 = tpu.transpose %13, [1, 0] : vector<16x5xf32> -> vector<5x16xf32>
    %16 = vector.extract_strided_slice %11 {offsets = [0, 0], sizes = [8, 5], strides = [1, 1]} : vector<16x5xf32> to vector<8x5xf32>
    %17 = vector.extract_strided_slice %14 {offsets = [0, 0], sizes = [5, 8], strides = [1, 1]} : vector<5x16xf32> to vector<5x8xf32>
    %18 = vector.extract_strided_slice %15 {offsets = [0, 0], sizes = [5, 8], strides = [1, 1]} : vector<5x16xf32> to vector<5x8xf32>
    %19 = vector.extract_strided_slice %16 {offsets = [0, 0], sizes = [8, 1], strides = [1, 1]} : vector<8x5xf32> to vector<8x1xf32>
    %20 = vector.extract_strided_slice %17 {offsets = [0, 0], sizes = [1, 8], strides = [1, 1]} : vector<5x8xf32> to vector<1x8xf32>
    %21 = vector.broadcast %19 : vector<8x1xf32> to vector<8x8xf32>
    %22 = vector.broadcast %20 : vector<1x8xf32> to vector<8x8xf32>
    %23 = arith.mulf %21, %22 : vector<8x8xf32>
    %cst_8 = arith.constant dense<0xFF800000> : vector<8xf32>
    %24 = vector.multi_reduction <maximumf>, %23, %cst_8 [1] : vector<8x8xf32> to vector<8xf32>
    %25 = vector.shape_cast %24 : vector<8xf32> to vector<8x1xf32>
    %26 = vector.broadcast %25 : vector<8x1xf32> to vector<8x8xf32>
    %27 = arith.subf %23, %26 : vector<8x8xf32>
    %28 = math.exp %27 : vector<8x8xf32>
    %cst_9 = arith.constant dense<0.000000e+00> : vector<8xf32>
    %29 = vector.multi_reduction <add>, %28, %cst_9 [1] : vector<8x8xf32> to vector<8xf32>
    %30 = vector.shape_cast %29 : vector<8xf32> to vector<8x1xf32>
    %31 = tpu.reciprocal %30 {approx = true} : vector<8x1xf32> -> vector<8x1xf32>
    %32 = vector.broadcast %31 : vector<8x1xf32> to vector<8x8xf32>
    %33 = arith.mulf %28, %32 : vector<8x8xf32>
    %34 = vector.extract_strided_slice %18 {offsets = [0, 0], sizes = [1, 8], strides = [1, 1]} : vector<5x8xf32> to vector<1x8xf32>
    %35 = vector.broadcast %34 : vector<1x8xf32> to vector<8x8xf32>
    %36 = arith.mulf %33, %35 : vector<8x8xf32>
    %cst_10 = arith.constant dense<0.000000e+00> : vector<8xf32>
    %37 = vector.multi_reduction <add>, %36, %cst_10 [1] : vector<8x8xf32> to vector<8xf32>
    %38 = vector.shape_cast %37 : vector<8xf32> to vector<8x1xf32>
    %39 = vector.extract_strided_slice %16 {offsets = [0, 1], sizes = [8, 1], strides = [1, 1]} : vector<8x5xf32> to vector<8x1xf32>
    %40 = vector.extract_strided_slice %17 {offsets = [1, 0], sizes = [1, 8], strides = [1, 1]} : vector<5x8xf32> to vector<1x8xf32>
    %41 = vector.broadcast %39 : vector<8x1xf32> to vector<8x8xf32>
    %42 = vector.broadcast %40 : vector<1x8xf32> to vector<8x8xf32>
    %43 = arith.mulf %41, %42 : vector<8x8xf32>
    %cst_11 = arith.constant dense<0xFF800000> : vector<8xf32>
    %44 = vector.multi_reduction <maximumf>, %43, %cst_11 [1] : vector<8x8xf32> to vector<8xf32>
    %45 = vector.shape_cast %44 : vector<8xf32> to vector<8x1xf32>
    %46 = vector.broadcast %45 : vector<8x1xf32> to vector<8x8xf32>
    %47 = arith.subf %43, %46 : vector<8x8xf32>
    %48 = math.exp %47 : vector<8x8xf32>
    %cst_12 = arith.constant dense<0.000000e+00> : vector<8xf32>
    %49 = vector.multi_reduction <add>, %48, %cst_12 [1] : vector<8x8xf32> to vector<8xf32>
    %50 = vector.shape_cast %49 : vector<8xf32> to vector<8x1xf32>
    %51 = tpu.reciprocal %50 {approx = true} : vector<8x1xf32> -> vector<8x1xf32>
    %52 = vector.broadcast %51 : vector<8x1xf32> to vector<8x8xf32>
    %53 = arith.mulf %48, %52 : vector<8x8xf32>
    %54 = vector.extract_strided_slice %18 {offsets = [1, 0], sizes = [1, 8], strides = [1, 1]} : vector<5x8xf32> to vector<1x8xf32>
    %55 = vector.broadcast %54 : vector<1x8xf32> to vector<8x8xf32>
    %56 = arith.mulf %53, %55 : vector<8x8xf32>
    %cst_13 = arith.constant dense<0.000000e+00> : vector<8xf32>
    %57 = vector.multi_reduction <add>, %56, %cst_13 [1] : vector<8x8xf32> to vector<8xf32>
    %58 = vector.shape_cast %57 : vector<8xf32> to vector<8x1xf32>
    %59 = vector.extract_strided_slice %16 {offsets = [0, 2], sizes = [8, 1], strides = [1, 1]} : vector<8x5xf32> to vector<8x1xf32>
    %60 = vector.extract_strided_slice %17 {offsets = [2, 0], sizes = [1, 8], strides = [1, 1]} : vector<5x8xf32> to vector<1x8xf32>
    %61 = vector.broadcast %59 : vector<8x1xf32> to vector<8x8xf32>
    %62 = vector.broadcast %60 : vector<1x8xf32> to vector<8x8xf32>
    %63 = arith.mulf %61, %62 : vector<8x8xf32>
    %cst_14 = arith.constant dense<0xFF800000> : vector<8xf32>
    %64 = vector.multi_reduction <maximumf>, %63, %cst_14 [1] : vector<8x8xf32> to vector<8xf32>
    %65 = vector.shape_cast %64 : vector<8xf32> to vector<8x1xf32>
    %66 = vector.broadcast %65 : vector<8x1xf32> to vector<8x8xf32>
    %67 = arith.subf %63, %66 : vector<8x8xf32>
    %68 = math.exp %67 : vector<8x8xf32>
    %cst_15 = arith.constant dense<0.000000e+00> : vector<8xf32>
    %69 = vector.multi_reduction <add>, %68, %cst_15 [1] : vector<8x8xf32> to vector<8xf32>
    %70 = vector.shape_cast %69 : vector<8xf32> to vector<8x1xf32>
    %71 = tpu.reciprocal %70 {approx = true} : vector<8x1xf32> -> vector<8x1xf32>
    %72 = vector.broadcast %71 : vector<8x1xf32> to vector<8x8xf32>
    %73 = arith.mulf %68, %72 : vector<8x8xf32>
    %74 = vector.extract_strided_slice %18 {offsets = [2, 0], sizes = [1, 8], strides = [1, 1]} : vector<5x8xf32> to vector<1x8xf32>
    %75 = vector.broadcast %74 : vector<1x8xf32> to vector<8x8xf32>
    %76 = arith.mulf %73, %75 : vector<8x8xf32>
    %cst_16 = arith.constant dense<0.000000e+00> : vector<8xf32>
    %77 = vector.multi_reduction <add>, %76, %cst_16 [1] : vector<8x8xf32> to vector<8xf32>
    %78 = vector.shape_cast %77 : vector<8xf32> to vector<8x1xf32>
    %79 = vector.extract_strided_slice %16 {offsets = [0, 3], sizes = [8, 1], strides = [1, 1]} : vector<8x5xf32> to vector<8x1xf32>
    %80 = vector.extract_strided_slice %17 {offsets = [3, 0], sizes = [1, 8], strides = [1, 1]} : vector<5x8xf32> to vector<1x8xf32>
    %81 = vector.broadcast %79 : vector<8x1xf32> to vector<8x8xf32>
    %82 = vector.broadcast %80 : vector<1x8xf32> to vector<8x8xf32>
    %83 = arith.mulf %81, %82 : vector<8x8xf32>
    %cst_17 = arith.constant dense<0xFF800000> : vector<8xf32>
    %84 = vector.multi_reduction <maximumf>, %83, %cst_17 [1] : vector<8x8xf32> to vector<8xf32>
    %85 = vector.shape_cast %84 : vector<8xf32> to vector<8x1xf32>
    %86 = vector.broadcast %85 : vector<8x1xf32> to vector<8x8xf32>
    %87 = arith.subf %83, %86 : vector<8x8xf32>
    %88 = math.exp %87 : vector<8x8xf32>
    %cst_18 = arith.constant dense<0.000000e+00> : vector<8xf32>
    %89 = vector.multi_reduction <add>, %88, %cst_18 [1] : vector<8x8xf32> to vector<8xf32>
    %90 = vector.shape_cast %89 : vector<8xf32> to vector<8x1xf32>
    %91 = tpu.reciprocal %90 {approx = true} : vector<8x1xf32> -> vector<8x1xf32>
    %92 = vector.broadcast %91 : vector<8x1xf32> to vector<8x8xf32>
    %93 = arith.mulf %88, %92 : vector<8x8xf32>
    %94 = vector.extract_strided_slice %18 {offsets = [3, 0], sizes = [1, 8], strides = [1, 1]} : vector<5x8xf32> to vector<1x8xf32>
    %95 = vector.broadcast %94 : vector<1x8xf32> to vector<8x8xf32>
    %96 = arith.mulf %93, %95 : vector<8x8xf32>
    %cst_19 = arith.constant dense<0.000000e+00> : vector<8xf32>
    %97 = vector.multi_reduction <add>, %96, %cst_19 [1] : vector<8x8xf32> to vector<8xf32>
    %98 = vector.shape_cast %97 : vector<8xf32> to vector<8x1xf32>
    %99 = vector.extract_strided_slice %16 {offsets = [0, 4], sizes = [8, 1], strides = [1, 1]} : vector<8x5xf32> to vector<8x1xf32>
    %100 = vector.extract_strided_slice %17 {offsets = [4, 0], sizes = [1, 8], strides = [1, 1]} : vector<5x8xf32> to vector<1x8xf32>
    %101 = vector.broadcast %99 : vector<8x1xf32> to vector<8x8xf32>
    %102 = vector.broadcast %100 : vector<1x8xf32> to vector<8x8xf32>
    %103 = arith.mulf %101, %102 : vector<8x8xf32>
    %cst_20 = arith.constant dense<0xFF800000> : vector<8xf32>
    %104 = vector.multi_reduction <maximumf>, %103, %cst_20 [1] : vector<8x8xf32> to vector<8xf32>
    %105 = vector.shape_cast %104 : vector<8xf32> to vector<8x1xf32>
    %106 = vector.broadcast %105 : vector<8x1xf32> to vector<8x8xf32>
    %107 = arith.subf %103, %106 : vector<8x8xf32>
    %108 = math.exp %107 : vector<8x8xf32>
    %cst_21 = arith.constant dense<0.000000e+00> : vector<8xf32>
    %109 = vector.multi_reduction <add>, %108, %cst_21 [1] : vector<8x8xf32> to vector<8xf32>
    %110 = vector.shape_cast %109 : vector<8xf32> to vector<8x1xf32>
    %111 = tpu.reciprocal %110 {approx = true} : vector<8x1xf32> -> vector<8x1xf32>
    %112 = vector.broadcast %111 : vector<8x1xf32> to vector<8x8xf32>
    %113 = arith.mulf %108, %112 : vector<8x8xf32>
    %114 = vector.extract_strided_slice %18 {offsets = [4, 0], sizes = [1, 8], strides = [1, 1]} : vector<5x8xf32> to vector<1x8xf32>
    %115 = vector.broadcast %114 : vector<1x8xf32> to vector<8x8xf32>
    %116 = arith.mulf %113, %115 : vector<8x8xf32>
    %cst_22 = arith.constant dense<0.000000e+00> : vector<8xf32>
    %117 = vector.multi_reduction <add>, %116, %cst_22 [1] : vector<8x8xf32> to vector<8xf32>
    %118 = vector.shape_cast %117 : vector<8xf32> to vector<8x1xf32>
    %119 = tpu.concatenate %38, %58, %78, %98, %118 in 1 : vector<8x1xf32>, vector<8x1xf32>, vector<8x1xf32>, vector<8x1xf32>, vector<8x1xf32> -> vector<8x5xf32>
    %120 = vector.extract_strided_slice %11 {offsets = [8, 0], sizes = [8, 5], strides = [1, 1]} : vector<16x5xf32> to vector<8x5xf32>
    %121 = vector.extract_strided_slice %14 {offsets = [0, 8], sizes = [5, 8], strides = [1, 1]} : vector<5x16xf32> to vector<5x8xf32>
    %122 = vector.extract_strided_slice %15 {offsets = [0, 8], sizes = [5, 8], strides = [1, 1]} : vector<5x16xf32> to vector<5x8xf32>
    %123 = vector.extract_strided_slice %120 {offsets = [0, 0], sizes = [8, 1], strides = [1, 1]} : vector<8x5xf32> to vector<8x1xf32>
    %124 = vector.extract_strided_slice %121 {offsets = [0, 0], sizes = [1, 8], strides = [1, 1]} : vector<5x8xf32> to vector<1x8xf32>
    %125 = vector.broadcast %123 : vector<8x1xf32> to vector<8x8xf32>
    %126 = vector.broadcast %124 : vector<1x8xf32> to vector<8x8xf32>
    %127 = arith.mulf %125, %126 : vector<8x8xf32>
    %cst_23 = arith.constant dense<0xFF800000> : vector<8xf32>
    %128 = vector.multi_reduction <maximumf>, %127, %cst_23 [1] : vector<8x8xf32> to vector<8xf32>
    %129 = vector.shape_cast %128 : vector<8xf32> to vector<8x1xf32>
    %130 = vector.broadcast %129 : vector<8x1xf32> to vector<8x8xf32>
    %131 = arith.subf %127, %130 : vector<8x8xf32>
    %132 = math.exp %131 : vector<8x8xf32>
    %cst_24 = arith.constant dense<0.000000e+00> : vector<8xf32>
    %133 = vector.multi_reduction <add>, %132, %cst_24 [1] : vector<8x8xf32> to vector<8xf32>
    %134 = vector.shape_cast %133 : vector<8xf32> to vector<8x1xf32>
    %135 = tpu.reciprocal %134 {approx = true} : vector<8x1xf32> -> vector<8x1xf32>
    %136 = vector.broadcast %135 : vector<8x1xf32> to vector<8x8xf32>
    %137 = arith.mulf %132, %136 : vector<8x8xf32>
    %138 = vector.extract_strided_slice %122 {offsets = [0, 0], sizes = [1, 8], strides = [1, 1]} : vector<5x8xf32> to vector<1x8xf32>
    %139 = vector.broadcast %138 : vector<1x8xf32> to vector<8x8xf32>
    %140 = arith.mulf %137, %139 : vector<8x8xf32>
    %cst_25 = arith.constant dense<0.000000e+00> : vector<8xf32>
    %141 = vector.multi_reduction <add>, %140, %cst_25 [1] : vector<8x8xf32> to vector<8xf32>
    %142 = vector.shape_cast %141 : vector<8xf32> to vector<8x1xf32>
    %143 = vector.extract_strided_slice %120 {offsets = [0, 1], sizes = [8, 1], strides = [1, 1]} : vector<8x5xf32> to vector<8x1xf32>
    %144 = vector.extract_strided_slice %121 {offsets = [1, 0], sizes = [1, 8], strides = [1, 1]} : vector<5x8xf32> to vector<1x8xf32>
    %145 = vector.broadcast %143 : vector<8x1xf32> to vector<8x8xf32>
    %146 = vector.broadcast %144 : vector<1x8xf32> to vector<8x8xf32>
    %147 = arith.mulf %145, %146 : vector<8x8xf32>
    %cst_26 = arith.constant dense<0xFF800000> : vector<8xf32>
    %148 = vector.multi_reduction <maximumf>, %147, %cst_26 [1] : vector<8x8xf32> to vector<8xf32>
    %149 = vector.shape_cast %148 : vector<8xf32> to vector<8x1xf32>
    %150 = vector.broadcast %149 : vector<8x1xf32> to vector<8x8xf32>
    %151 = arith.subf %147, %150 : vector<8x8xf32>
    %152 = math.exp %151 : vector<8x8xf32>
    %cst_27 = arith.constant dense<0.000000e+00> : vector<8xf32>
    %153 = vector.multi_reduction <add>, %152, %cst_27 [1] : vector<8x8xf32> to vector<8xf32>
    %154 = vector.shape_cast %153 : vector<8xf32> to vector<8x1xf32>
    %155 = tpu.reciprocal %154 {approx = true} : vector<8x1xf32> -> vector<8x1xf32>
    %156 = vector.broadcast %155 : vector<8x1xf32> to vector<8x8xf32>
    %157 = arith.mulf %152, %156 : vector<8x8xf32>
    %158 = vector.extract_strided_slice %122 {offsets = [1, 0], sizes = [1, 8], strides = [1, 1]} : vector<5x8xf32> to vector<1x8xf32>
    %159 = vector.broadcast %158 : vector<1x8xf32> to vector<8x8xf32>
    %160 = arith.mulf %157, %159 : vector<8x8xf32>
    %cst_28 = arith.constant dense<0.000000e+00> : vector<8xf32>
    %161 = vector.multi_reduction <add>, %160, %cst_28 [1] : vector<8x8xf32> to vector<8xf32>
    %162 = vector.shape_cast %161 : vector<8xf32> to vector<8x1xf32>
    %163 = vector.extract_strided_slice %120 {offsets = [0, 2], sizes = [8, 1], strides = [1, 1]} : vector<8x5xf32> to vector<8x1xf32>
    %164 = vector.extract_strided_slice %121 {offsets = [2, 0], sizes = [1, 8], strides = [1, 1]} : vector<5x8xf32> to vector<1x8xf32>
    %165 = vector.broadcast %163 : vector<8x1xf32> to vector<8x8xf32>
    %166 = vector.broadcast %164 : vector<1x8xf32> to vector<8x8xf32>
    %167 = arith.mulf %165, %166 : vector<8x8xf32>
    %cst_29 = arith.constant dense<0xFF800000> : vector<8xf32>
    %168 = vector.multi_reduction <maximumf>, %167, %cst_29 [1] : vector<8x8xf32> to vector<8xf32>
    %169 = vector.shape_cast %168 : vector<8xf32> to vector<8x1xf32>
    %170 = vector.broadcast %169 : vector<8x1xf32> to vector<8x8xf32>
    %171 = arith.subf %167, %170 : vector<8x8xf32>
    %172 = math.exp %171 : vector<8x8xf32>
    %cst_30 = arith.constant dense<0.000000e+00> : vector<8xf32>
    %173 = vector.multi_reduction <add>, %172, %cst_30 [1] : vector<8x8xf32> to vector<8xf32>
    %174 = vector.shape_cast %173 : vector<8xf32> to vector<8x1xf32>
    %175 = tpu.reciprocal %174 {approx = true} : vector<8x1xf32> -> vector<8x1xf32>
    %176 = vector.broadcast %175 : vector<8x1xf32> to vector<8x8xf32>
    %177 = arith.mulf %172, %176 : vector<8x8xf32>
    %178 = vector.extract_strided_slice %122 {offsets = [2, 0], sizes = [1, 8], strides = [1, 1]} : vector<5x8xf32> to vector<1x8xf32>
    %179 = vector.broadcast %178 : vector<1x8xf32> to vector<8x8xf32>
    %180 = arith.mulf %177, %179 : vector<8x8xf32>
    %cst_31 = arith.constant dense<0.000000e+00> : vector<8xf32>
    %181 = vector.multi_reduction <add>, %180, %cst_31 [1] : vector<8x8xf32> to vector<8xf32>
    %182 = vector.shape_cast %181 : vector<8xf32> to vector<8x1xf32>
    %183 = vector.extract_strided_slice %120 {offsets = [0, 3], sizes = [8, 1], strides = [1, 1]} : vector<8x5xf32> to vector<8x1xf32>
    %184 = vector.extract_strided_slice %121 {offsets = [3, 0], sizes = [1, 8], strides = [1, 1]} : vector<5x8xf32> to vector<1x8xf32>
    %185 = vector.broadcast %183 : vector<8x1xf32> to vector<8x8xf32>
    %186 = vector.broadcast %184 : vector<1x8xf32> to vector<8x8xf32>
    %187 = arith.mulf %185, %186 : vector<8x8xf32>
    %cst_32 = arith.constant dense<0xFF800000> : vector<8xf32>
    %188 = vector.multi_reduction <maximumf>, %187, %cst_32 [1] : vector<8x8xf32> to vector<8xf32>
    %189 = vector.shape_cast %188 : vector<8xf32> to vector<8x1xf32>
    %190 = vector.broadcast %189 : vector<8x1xf32> to vector<8x8xf32>
    %191 = arith.subf %187, %190 : vector<8x8xf32>
    %192 = math.exp %191 : vector<8x8xf32>
    %cst_33 = arith.constant dense<0.000000e+00> : vector<8xf32>
    %193 = vector.multi_reduction <add>, %192, %cst_33 [1] : vector<8x8xf32> to vector<8xf32>
    %194 = vector.shape_cast %193 : vector<8xf32> to vector<8x1xf32>
    %195 = tpu.reciprocal %194 {approx = true} : vector<8x1xf32> -> vector<8x1xf32>
    %196 = vector.broadcast %195 : vector<8x1xf32> to vector<8x8xf32>
    %197 = arith.mulf %192, %196 : vector<8x8xf32>
    %198 = vector.extract_strided_slice %122 {offsets = [3, 0], sizes = [1, 8], strides = [1, 1]} : vector<5x8xf32> to vector<1x8xf32>
    %199 = vector.broadcast %198 : vector<1x8xf32> to vector<8x8xf32>
    %200 = arith.mulf %197, %199 : vector<8x8xf32>
    %cst_34 = arith.constant dense<0.000000e+00> : vector<8xf32>
    %201 = vector.multi_reduction <add>, %200, %cst_34 [1] : vector<8x8xf32> to vector<8xf32>
    %202 = vector.shape_cast %201 : vector<8xf32> to vector<8x1xf32>
    %203 = vector.extract_strided_slice %120 {offsets = [0, 4], sizes = [8, 1], strides = [1, 1]} : vector<8x5xf32> to vector<8x1xf32>
    %204 = vector.extract_strided_slice %121 {offsets = [4, 0], sizes = [1, 8], strides = [1, 1]} : vector<5x8xf32> to vector<1x8xf32>
    %205 = vector.broadcast %203 : vector<8x1xf32> to vector<8x8xf32>
    %206 = vector.broadcast %204 : vector<1x8xf32> to vector<8x8xf32>
    %207 = arith.mulf %205, %206 : vector<8x8xf32>
    %cst_35 = arith.constant dense<0xFF800000> : vector<8xf32>
    %208 = vector.multi_reduction <maximumf>, %207, %cst_35 [1] : vector<8x8xf32> to vector<8xf32>
    %209 = vector.shape_cast %208 : vector<8xf32> to vector<8x1xf32>
    %210 = vector.broadcast %209 : vector<8x1xf32> to vector<8x8xf32>
    %211 = arith.subf %207, %210 : vector<8x8xf32>
    %212 = math.exp %211 : vector<8x8xf32>
    %cst_36 = arith.constant dense<0.000000e+00> : vector<8xf32>
    %213 = vector.multi_reduction <add>, %212, %cst_36 [1] : vector<8x8xf32> to vector<8xf32>
    %214 = vector.shape_cast %213 : vector<8xf32> to vector<8x1xf32>
    %215 = tpu.reciprocal %214 {approx = true} : vector<8x1xf32> -> vector<8x1xf32>
    %216 = vector.broadcast %215 : vector<8x1xf32> to vector<8x8xf32>
    %217 = arith.mulf %212, %216 : vector<8x8xf32>
    %218 = vector.extract_strided_slice %122 {offsets = [4, 0], sizes = [1, 8], strides = [1, 1]} : vector<5x8xf32> to vector<1x8xf32>
    %219 = vector.broadcast %218 : vector<1x8xf32> to vector<8x8xf32>
    %220 = arith.mulf %217, %219 : vector<8x8xf32>
    %cst_37 = arith.constant dense<0.000000e+00> : vector<8xf32>
    %221 = vector.multi_reduction <add>, %220, %cst_37 [1] : vector<8x8xf32> to vector<8xf32>
    %222 = vector.shape_cast %221 : vector<8xf32> to vector<8x1xf32>
    %223 = tpu.concatenate %142, %162, %182, %202, %222 in 1 : vector<8x1xf32>, vector<8x1xf32>, vector<8x1xf32>, vector<8x1xf32>, vector<8x1xf32> -> vector<8x5xf32>
    %224 = tpu.concatenate %119, %223 in 0 : vector<8x5xf32>, vector<8x5xf32> -> vector<16x5xf32>
    %c0_38 = arith.constant 0 : index
    %c0_39 = arith.constant 0 : index
    %c0_40 = arith.constant 0 : index
    %225 = vector.load %arg4[%c0_38, %c0_39, %c0_40] : memref<1x5x5xf32, #tpu.memory_space<vmem>>, vector<1x5x5xf32>
    %226 = vector.shape_cast %225 : vector<1x5x5xf32> to vector<5x5xf32>
    %cst_41 = arith.constant dense<0.000000e+00> : vector<16x5xf32>
    %227 = tpu.matmul %224, %226, %cst_41 {dimension_numbers = #tpu.dot_dimension_numbers<[1], [0], [0], [1], [0, 0, 1, 1], [], []>} : vector<16x5xf32>, vector<5x5xf32>, vector<16x5xf32> -> vector<16x5xf32>
    %c0_42 = arith.constant 0 : index
    %c0_43 = arith.constant 0 : index
    %c0_44 = arith.constant 0 : index
    %228 = vector.load %arg5[%c0_42, %c0_43, %c0_44] : memref<1x1x5xf32, #tpu.memory_space<vmem>>, vector<1x1x5xf32>
    %229 = vector.shape_cast %228 : vector<1x1x5xf32> to vector<1x5xf32>
    %230 = vector.broadcast %229 : vector<1x5xf32> to vector<16x5xf32>
    %231 = arith.addf %227, %230 : vector<16x5xf32>
    %232 = arith.addf %3, %231 : vector<16x5xf32>
    %c0_45 = arith.constant 0 : index
    %c0_46 = arith.constant 0 : index
    %c0_47 = arith.constant 0 : index
    %233 = vector.load %arg6[%c0_45, %c0_46, %c0_47] : memref<1x1x5xf32, #tpu.memory_space<vmem>>, vector<1x1x5xf32>
    %234 = vector.shape_cast %233 : vector<1x1x5xf32> to vector<1x5xf32>
    %c0_48 = arith.constant 0 : index
    %c0_49 = arith.constant 0 : index
    %c0_50 = arith.constant 0 : index
    %235 = vector.load %arg7[%c0_48, %c0_49, %c0_50] : memref<1x1x5xf32, #tpu.memory_space<vmem>>, vector<1x1x5xf32>
    %236 = vector.shape_cast %235 : vector<1x1x5xf32> to vector<1x5xf32>
    %cst_51 = arith.constant dense<0.000000e+00> : vector<16xf32>
    %237 = vector.multi_reduction <add>, %232, %cst_51 [1] : vector<16x5xf32> to vector<16xf32>
    %238 = vector.shape_cast %237 : vector<16xf32> to vector<16x1xf32>
    %cst_52 = arith.constant 5.000000e+00 : f32
    %239 = vector.broadcast %cst_52 : f32 to vector<16x1xf32>
    %240 = arith.divf %238, %239 : vector<16x1xf32>
    %241 = vector.broadcast %240 : vector<16x1xf32> to vector<16x5xf32>
    %242 = arith.subf %232, %241 : vector<16x5xf32>
    %243 = arith.mulf %242, %242 : vector<16x5xf32>
    %cst_53 = arith.constant dense<0.000000e+00> : vector<16xf32>
    %244 = vector.multi_reduction <add>, %243, %cst_53 [1] : vector<16x5xf32> to vector<16xf32>
    %245 = vector.shape_cast %244 : vector<16xf32> to vector<16x1xf32>
    %cst_54 = arith.constant 5.000000e+00 : f32
    %246 = vector.broadcast %cst_54 : f32 to vector<16x1xf32>
    %247 = arith.divf %245, %246 : vector<16x1xf32>
    %248 = vector.broadcast %240 : vector<16x1xf32> to vector<16x5xf32>
    %249 = arith.subf %232, %248 : vector<16x5xf32>
    %cst_55 = arith.constant 9.99999974E-6 : f32
    %250 = vector.broadcast %cst_55 : f32 to vector<16x1xf32>
    %251 = arith.addf %247, %250 : vector<16x1xf32>
    %252 = math.rsqrt %251 : vector<16x1xf32>
    %253 = vector.broadcast %252 : vector<16x1xf32> to vector<16x5xf32>
    %254 = arith.mulf %249, %253 : vector<16x5xf32>
    %255 = vector.broadcast %234 : vector<1x5xf32> to vector<16x5xf32>
    %256 = arith.mulf %254, %255 : vector<16x5xf32>
    %257 = vector.broadcast %236 : vector<1x5xf32> to vector<16x5xf32>
    %258 = arith.addf %256, %257 : vector<16x5xf32>
    %c0_56 = arith.constant 0 : index
    %c0_57 = arith.constant 0 : index
    %c0_58 = arith.constant 0 : index
    %259 = vector.load %arg8[%c0_56, %c0_57, %c0_58] : memref<1x5x2048xf32, #tpu.memory_space<vmem>>, vector<1x5x2048xf32>
    %260 = vector.shape_cast %259 : vector<1x5x2048xf32> to vector<5x2048xf32>
    %cst_59 = arith.constant dense<0.000000e+00> : vector<16x2048xf32>
    %261 = tpu.matmul %258, %260, %cst_59 {dimension_numbers = #tpu.dot_dimension_numbers<[1], [0], [0], [1], [0, 0, 1, 1], [], []>} : vector<16x5xf32>, vector<5x2048xf32>, vector<16x2048xf32> -> vector<16x2048xf32>
    %c0_60 = arith.constant 0 : index
    %c0_61 = arith.constant 0 : index
    %c0_62 = arith.constant 0 : index
    %262 = vector.load %arg9[%c0_60, %c0_61, %c0_62] : memref<1x1x2048xf32, #tpu.memory_space<vmem>>, vector<1x1x2048xf32>
    %263 = vector.shape_cast %262 : vector<1x1x2048xf32> to vector<1x2048xf32>
    %264 = vector.broadcast %263 : vector<1x2048xf32> to vector<16x2048xf32>
    %265 = arith.addf %261, %264 : vector<16x2048xf32>
    %cst_63 = arith.constant 0.000000e+00 : f32
    %266 = vector.broadcast %cst_63 : f32 to vector<16x2048xf32>
    %267 = arith.maximumf %265, %266 : vector<16x2048xf32>
    %c0_64 = arith.constant 0 : index
    %c0_65 = arith.constant 0 : index
    %c0_66 = arith.constant 0 : index
    %268 = vector.load %arg10[%c0_64, %c0_65, %c0_66] : memref<1x2048x5xf32, #tpu.memory_space<vmem>>, vector<1x2048x5xf32>
    %269 = vector.shape_cast %268 : vector<1x2048x5xf32> to vector<2048x5xf32>
    %cst_67 = arith.constant dense<0.000000e+00> : vector<16x5xf32>
    %270 = tpu.matmul %267, %269, %cst_67 {dimension_numbers = #tpu.dot_dimension_numbers<[1], [0], [0], [1], [0, 0, 1, 1], [], []>} : vector<16x2048xf32>, vector<2048x5xf32>, vector<16x5xf32> -> vector<16x5xf32>
    %c0_68 = arith.constant 0 : index
    %c0_69 = arith.constant 0 : index
    %c0_70 = arith.constant 0 : index
    %271 = vector.load %arg11[%c0_68, %c0_69, %c0_70] : memref<1x1x5xf32, #tpu.memory_space<vmem>>, vector<1x1x5xf32>
    %272 = vector.shape_cast %271 : vector<1x1x5xf32> to vector<1x5xf32>
    %273 = vector.broadcast %272 : vector<1x5xf32> to vector<16x5xf32>
    %274 = arith.addf %270, %273 : vector<16x5xf32>
    %275 = arith.addf %258, %274 : vector<16x5xf32>
    %c0_71 = arith.constant 0 : index
    %c0_72 = arith.constant 0 : index
    %c0_73 = arith.constant 0 : index
    %276 = vector.load %arg12[%c0_71, %c0_72, %c0_73] : memref<1x1x5xf32, #tpu.memory_space<vmem>>, vector<1x1x5xf32>
    %277 = vector.shape_cast %276 : vector<1x1x5xf32> to vector<1x5xf32>
    %c0_74 = arith.constant 0 : index
    %c0_75 = arith.constant 0 : index
    %c0_76 = arith.constant 0 : index
    %278 = vector.load %arg13[%c0_74, %c0_75, %c0_76] : memref<1x1x5xf32, #tpu.memory_space<vmem>>, vector<1x1x5xf32>
    %279 = vector.shape_cast %278 : vector<1x1x5xf32> to vector<1x5xf32>
    %cst_77 = arith.constant dense<0.000000e+00> : vector<16xf32>
    %280 = vector.multi_reduction <add>, %275, %cst_77 [1] : vector<16x5xf32> to vector<16xf32>
    %281 = vector.shape_cast %280 : vector<16xf32> to vector<16x1xf32>
    %cst_78 = arith.constant 5.000000e+00 : f32
    %282 = vector.broadcast %cst_78 : f32 to vector<16x1xf32>
    %283 = arith.divf %281, %282 : vector<16x1xf32>
    %284 = vector.broadcast %283 : vector<16x1xf32> to vector<16x5xf32>
    %285 = arith.subf %275, %284 : vector<16x5xf32>
    %286 = arith.mulf %285, %285 : vector<16x5xf32>
    %cst_79 = arith.constant dense<0.000000e+00> : vector<16xf32>
    %287 = vector.multi_reduction <add>, %286, %cst_79 [1] : vector<16x5xf32> to vector<16xf32>
    %288 = vector.shape_cast %287 : vector<16xf32> to vector<16x1xf32>
    %cst_80 = arith.constant 5.000000e+00 : f32
    %289 = vector.broadcast %cst_80 : f32 to vector<16x1xf32>
    %290 = arith.divf %288, %289 : vector<16x1xf32>
    %291 = vector.broadcast %283 : vector<16x1xf32> to vector<16x5xf32>
    %292 = arith.subf %275, %291 : vector<16x5xf32>
    %cst_81 = arith.constant 9.99999974E-6 : f32
    %293 = vector.broadcast %cst_81 : f32 to vector<16x1xf32>
    %294 = arith.addf %290, %293 : vector<16x1xf32>
    %295 = math.rsqrt %294 : vector<16x1xf32>
    %296 = vector.broadcast %295 : vector<16x1xf32> to vector<16x5xf32>
    %297 = arith.mulf %292, %296 : vector<16x5xf32>
    %298 = vector.broadcast %277 : vector<1x5xf32> to vector<16x5xf32>
    %299 = arith.mulf %297, %298 : vector<16x5xf32>
    %300 = vector.broadcast %279 : vector<1x5xf32> to vector<16x5xf32>
    %301 = arith.addf %299, %300 : vector<16x5xf32>
    %c0_82 = arith.constant 0 : index
    %c0_83 = arith.constant 0 : index
    %302 = vector.load %arg15[%c0_82, %c0_83] : memref<16x5xf32, #tpu.memory_space<vmem>>, vector<16x5xf32>
    tpu.vector_store %arg15[%c0_82, %c0_83], %301 {strides = array<i32>} : memref<16x5xf32, #tpu.memory_space<vmem>>, vector<16x5xf32>,
    %c15_i32 = arith.constant 15 : i32
    %303 = arith.cmpi eq, %arg0, %c15_i32 : i32
    %304 = arith.extui %303 : i1 to i32
    %c0_i32_84 = arith.constant 0 : i32
    %305 = arith.cmpi ne, %304, %c0_i32_84 : i32
    scf.if %305 {
      %c0_85 = arith.constant 0 : index
      %c0_86 = arith.constant 0 : index
      %306 = vector.load %arg14[%c0_85, %c0_86] : memref<16x5xf32, #tpu.memory_space<vmem>>, vector<16x5xf32>
      tpu.vector_store %arg14[%c0_85, %c0_86], %301 {strides = array<i32>} : memref<16x5xf32, #tpu.memory_space<vmem>>, vector<16x5xf32>,
    } else {
    }
    return
  }
  func.func @transform_0(%arg0: i32) -> (i32, i32) {
    %c0_i32 = arith.constant 0 : i32
    %c0_i32_0 = arith.constant 0 : i32
    %c0_i32_1 = arith.constant 0 : i32
    return %c0_i32, %c0_i32_0 : i32, i32
  }
  func.func @transform_1(%arg0: i32) -> (i32, i32, i32) {
    %c0_i32 = arith.constant 0 : i32
    %c0_i32_0 = arith.constant 0 : i32
    %c0_i32_1 = arith.constant 0 : i32
    return %arg0, %c0_i32, %c0_i32_0 : i32, i32, i32
  }
  func.func @transform_2(%arg0: i32) -> (i32, i32, i32) {
    %c0_i32 = arith.constant 0 : i32
    %c0_i32_0 = arith.constant 0 : i32
    %c0_i32_1 = arith.constant 0 : i32
    return %arg0, %c0_i32, %c0_i32_0 : i32, i32, i32
  }
  func.func @transform_3(%arg0: i32) -> (i32, i32, i32) {
    %c0_i32 = arith.constant 0 : i32
    %c0_i32_0 = arith.constant 0 : i32
    %c0_i32_1 = arith.constant 0 : i32
    return %arg0, %c0_i32, %c0_i32_0 : i32, i32, i32
  }
  func.func @transform_4(%arg0: i32) -> (i32, i32, i32) {
    %c0_i32 = arith.constant 0 : i32
    %c0_i32_0 = arith.constant 0 : i32
    %c0_i32_1 = arith.constant 0 : i32
    return %arg0, %c0_i32, %c0_i32_0 : i32, i32, i32
  }
  func.func @transform_5(%arg0: i32) -> (i32, i32, i32) {
    %c0_i32 = arith.constant 0 : i32
    %c0_i32_0 = arith.constant 0 : i32
    %c0_i32_1 = arith.constant 0 : i32
    return %arg0, %c0_i32, %c0_i32_0 : i32, i32, i32
  }
  func.func @transform_6(%arg0: i32) -> (i32, i32, i32) {
    %c0_i32 = arith.constant 0 : i32
    %c0_i32_0 = arith.constant 0 : i32
    %c0_i32_1 = arith.constant 0 : i32
    return %arg0, %c0_i32, %c0_i32_0 : i32, i32, i32
  }
  func.func @transform_7(%arg0: i32) -> (i32, i32, i32) {
    %c0_i32 = arith.constant 0 : i32
    %c0_i32_0 = arith.constant 0 : i32
    %c0_i32_1 = arith.constant 0 : i32
    return %arg0, %c0_i32, %c0_i32_0 : i32, i32, i32
  }
  func.func @transform_8(%arg0: i32) -> (i32, i32, i32) {
    %c0_i32 = arith.constant 0 : i32
    %c0_i32_0 = arith.constant 0 : i32
    %c0_i32_1 = arith.constant 0 : i32
    return %arg0, %c0_i32, %c0_i32_0 : i32, i32, i32
  }
  func.func @transform_9(%arg0: i32) -> (i32, i32, i32) {
    %c0_i32 = arith.constant 0 : i32
    %c0_i32_0 = arith.constant 0 : i32
    %c0_i32_1 = arith.constant 0 : i32
    return %arg0, %c0_i32, %c0_i32_0 : i32, i32, i32
  }
  func.func @transform_10(%arg0: i32) -> (i32, i32, i32) {
    %c0_i32 = arith.constant 0 : i32
    %c0_i32_0 = arith.constant 0 : i32
    %c0_i32_1 = arith.constant 0 : i32
    return %arg0, %c0_i32, %c0_i32_0 : i32, i32, i32
  }
  func.func @transform_11(%arg0: i32) -> (i32, i32, i32) {
    %c0_i32 = arith.constant 0 : i32
    %c0_i32_0 = arith.constant 0 : i32
    %c0_i32_1 = arith.constant 0 : i32
    return %arg0, %c0_i32, %c0_i32_0 : i32, i32, i32
  }
  func.func @transform_12(%arg0: i32) -> (i32, i32, i32) {
    %c0_i32 = arith.constant 0 : i32
    %c0_i32_0 = arith.constant 0 : i32
    %c0_i32_1 = arith.constant 0 : i32
    return %arg0, %c0_i32, %c0_i32_0 : i32, i32, i32
  }
  func.func @transform_13(%arg0: i32) -> (i32, i32) {
    %c0_i32 = arith.constant 0 : i32
    %c0_i32_0 = arith.constant 0 : i32
    %c0_i32_1 = arith.constant 0 : i32
    return %c0_i32, %c0_i32_0 : i32, i32
  }
}

module attributes {stable_mosaic.version = 11 : i64} {
  func.func @fc_softmax_kernel(%arg0: i32, %arg1: memref<2x40xf32, #tpu.memory_space<vmem>>, %arg2: memref<40x4xf32, #tpu.memory_space<vmem>>, %arg3: memref<1x4xf32, #tpu.memory_space<vmem>>, %arg4: memref<2x4xf32, #tpu.memory_space<vmem>>) attributes {dimension_semantics = [#tpu.dimension_semantics<arbitrary>], iteration_bounds = array<i64: 1>, scalar_prefetch = 0 : i64, scratch_operands = 0 : i64, tpu.core_type = #tpu.core_type<tc>, window_params = [{pipeline_mode = #tpu.pipeline_mode<synchronous>, transform_indices = @transform_0, window_bounds = array<i64: 2, 40>}, {pipeline_mode = #tpu.pipeline_mode<synchronous>, transform_indices = @transform_1, window_bounds = array<i64: 40, 4>}, {pipeline_mode = #tpu.pipeline_mode<synchronous>, transform_indices = @transform_2, window_bounds = array<i64: 1, 4>}, {pipeline_mode = #tpu.pipeline_mode<synchronous>, transform_indices = @transform_3, window_bounds = array<i64: 2, 4>}]} {
    %c0 = arith.constant 0 : index
    %c0_0 = arith.constant 0 : index
    %0 = vector.load %arg1[%c0, %c0_0] : memref<2x40xf32, #tpu.memory_space<vmem>>, vector<2x40xf32>
    %c0_1 = arith.constant 0 : index
    %c0_2 = arith.constant 0 : index
    %1 = vector.load %arg2[%c0_1, %c0_2] : memref<40x4xf32, #tpu.memory_space<vmem>>, vector<40x4xf32>
    %cst = arith.constant dense<0.000000e+00> : vector<2x4xf32>
    %2 = tpu.matmul %0, %1, %cst {dimension_numbers = #tpu.dot_dimension_numbers<[1], [0], [0], [1], [0, 0, 1, 1], [], []>} : vector<2x40xf32>, vector<40x4xf32>, vector<2x4xf32> -> vector<2x4xf32>
    %c0_3 = arith.constant 0 : index
    %c0_4 = arith.constant 0 : index
    %3 = vector.load %arg3[%c0_3, %c0_4] : memref<1x4xf32, #tpu.memory_space<vmem>>, vector<1x4xf32>
    %4 = vector.broadcast %3 : vector<1x4xf32> to vector<2x4xf32>
    %5 = arith.addf %2, %4 : vector<2x4xf32>
    %cst_5 = arith.constant dense<0xFF800000> : vector<2xf32>
    %6 = vector.multi_reduction <maximumf>, %5, %cst_5 [1] : vector<2x4xf32> to vector<2xf32>
    %7 = vector.shape_cast %6 : vector<2xf32> to vector<2x1xf32>
    %8 = vector.broadcast %7 : vector<2x1xf32> to vector<2x4xf32>
    %9 = arith.subf %5, %8 : vector<2x4xf32>
    %10 = math.exp %9 : vector<2x4xf32>
    %cst_6 = arith.constant dense<0.000000e+00> : vector<2xf32>
    %11 = vector.multi_reduction <add>, %10, %cst_6 [1] : vector<2x4xf32> to vector<2xf32>
    %12 = vector.shape_cast %11 : vector<2xf32> to vector<2x1xf32>
    %13 = vector.broadcast %12 : vector<2x1xf32> to vector<2x4xf32>
    %14 = arith.divf %10, %13 : vector<2x4xf32>
    %c0_7 = arith.constant 0 : index
    %c0_8 = arith.constant 0 : index
    %15 = vector.load %arg4[%c0_7, %c0_8] : memref<2x4xf32, #tpu.memory_space<vmem>>, vector<2x4xf32>
    tpu.vector_store %arg4[%c0_7, %c0_8], %14 {strides = array<i32>} : memref<2x4xf32, #tpu.memory_space<vmem>>, vector<2x4xf32>,
    return
  }
  func.func @transform_0(%arg0: i32) -> (i32, i32) {
    %c0_i32 = arith.constant 0 : i32
    %c0_i32_0 = arith.constant 0 : i32
    %c0_i32_1 = arith.constant 0 : i32
    return %c0_i32, %c0_i32_0 : i32, i32
  }
  func.func @transform_1(%arg0: i32) -> (i32, i32) {
    %c0_i32 = arith.constant 0 : i32
    %c0_i32_0 = arith.constant 0 : i32
    %c0_i32_1 = arith.constant 0 : i32
    return %c0_i32, %c0_i32_0 : i32, i32
  }
  func.func @transform_2(%arg0: i32) -> (i32, i32) {
    %c0_i32 = arith.constant 0 : i32
    %c0_i32_0 = arith.constant 0 : i32
    %c0_i32_1 = arith.constant 0 : i32
    return %c0_i32, %c0_i32_0 : i32, i32
  }
  func.func @transform_3(%arg0: i32) -> (i32, i32) {
    %c0_i32 = arith.constant 0 : i32
    %c0_i32_0 = arith.constant 0 : i32
    %c0_i32_1 = arith.constant 0 : i32
    return %c0_i32, %c0_i32_0 : i32, i32
  }
}

</mosaic_0001>

<llo_original>
// kernel: forward.3
$region0: #{forward.3}
  #allocation0 [shape = 'u32[]', space=smem, size = 0x4, offset = 0x4, fixed_abs, tag = 'smem constant byte address 0x4 - core index']
  #allocation1 [shape = 'u32[144,128]{1,0:T(1,128)}', space=vmem, size = 0x12000, scoped, tag = 'internal scratch']
  %s0 = inlined_call_operand.vmem [shape: f32[2,40], index: 0, kind: input, shape index: {}]
  %s1 = inlined_call_operand.vmem [shape: f32[40,4], index: 1, kind: input, shape index: {}]
  %s2 = inlined_call_operand.vmem [shape: f32[1,4], index: 2, kind: input, shape index: {}]
  %s3 = inlined_call_operand.hbm [shape: f32[2,4], index: 3, kind: output, shape index: {}]
  %s4 = sld [smem:[#allocation0]]
  $region22: #{forward.3} parent=0
    _
  %s6 = ssub.s32 1, %s4
  %s7 = scalar_select 0, %s6, %s4
  $region1: #{forward.3} parent=0
    #allocation2 [shape = 'u8[1024]{0}', space=vmem, size = 0x400, scoped, tag = 'output window, operand 0, single buffered']
    #allocation3 [shape = 's32[1]{0}', space=sflag, size = 0x4, scoped, tag = 'scoped memory for forward.3']
    %8 = vsyncpa [#allocation3], 0
    // Predicated region
    $region2: #{forward.3} parent=1 // pred_check
      _
    $region3: #{forward.3} parent=1 // pred_check_branch
      %10 = sbr.rel (0) target = $region5
    $region4: #{forward.3} parent=1 // pred_region
      _
    $region5: #{forward.3} parent=1 // pred_fallthru
      _
    // Predicated region
    $region6: #{forward.3} parent=1 // pred_check
      _
    $region7: #{forward.3} parent=1 // pred_check_branch
      %12 = sbr.rel (0) target = $region9
    $region8: #{forward.3} parent=1 // pred_region
      _
    $region9: #{forward.3} parent=1 // pred_fallthru
      _
    // Predicated region
    $region10: #{forward.3} parent=1 // pred_check
      _
    $region11: #{forward.3} parent=1 // pred_check_branch
      %14 = sbr.rel (0) target = $region13
    $region12: #{forward.3} parent=1 // pred_region
      _
    $region13: #{forward.3} parent=1 // pred_fallthru
      _
    %v15 = vld [vmem:[%s0] sm:$0x3]
    %v16 = vld [vmem:[%s1] sm:$0xff]
    %v17 = vld [vmem:[%s1 + $0x8] sm:$0xff]
    %v18 = vld [vmem:[%s1 + $0x10] sm:$0xff]
    %v19 = vld [vmem:[%s1 + $0x18] sm:$0xff]
    %v20 = vld [vmem:[%s1 + $0x20] sm:$0xff]
    %v21 = vld [vmem:[%s2] sm:$0x1]
    %v23 = vlaneseq
    %v24 = vshrl.u32 %v23, 7
    %v25 = vsub.s32 0, %v24
    %v26 = vrot.slane %v21, %v25
    %vm28 = vcmask 326656
    %v30 = vsel %vm28, %v15, 0
    %32 = vmatprep.subr.mxu0 0.0
    %33 = vmatpush1.msra.mxu0 0.0
    %34 = vmatprep.subr.mxu0 0.0
    %35 = vmatpush1.msra.mxu0 0.0
    %36 = vmatprep.subr.mxu0 0.0
    %37 = vmatpush1.msra.mxu0 0.0
    %38 = vmatprep.subr.mxu0 0.0
    %39 = vmatpush1.msra.mxu0 0.0
    %40 = vmatprep.subr.mxu0 0.0
    %41 = vmatpush1.msra.mxu0 0.0
    %42 = vmatprep.subr.mxu0 0.0
    %43 = vmatpush1.msra.mxu0 0.0
    %44 = vmatprep.subr.mxu0 0.0
    %45 = vmatpush1.msra.mxu0 0.0
    %46 = vmatprep.subr.mxu0 0.0
    %47 = vmatpush1.msra.mxu0 0.0
    %48 = vmatprep.subr.mxu0 0.0
    %49 = vmatpush1.msra.mxu0 0.0
    %50 = vmatprep.subr.mxu0 0.0
    %51 = vmatpush1.msra.mxu0 0.0
    %52 = vmatprep.subr.mxu0 0.0
    %53 = vmatpush1.msra.mxu0 0.0
    %54 = vmatprep.subr.mxu0 0.0
    %55 = vmatpush1.msra.mxu0 %v20
    %56 = vmatprep.subr.mxu0 0.0
    %57 = vmatpush1.msra.mxu0 %v19
    %58 = vmatprep.subr.mxu0 0.0
    %59 = vmatpush1.msra.mxu0 %v18
    %60 = vmatprep.subr.mxu0 0.0
    %61 = vmatpush1.msra.mxu0 %v17
    %62 = vmatprep.subr.mxu0 0.0
    %63 = vmatpush1.msra.mxu0 %v16
    %64 = vmatprep.subr.mxu0 0.0
    %65 = vmatpush2.msra.mxu0 0.0
    %66 = vmatprep.subr.mxu0 0.0
    %67 = vmatpush2.msra.mxu0 0.0
    %68 = vmatprep.subr.mxu0 0.0
    %69 = vmatpush2.msra.mxu0 0.0
    %70 = vmatprep.subr.mxu0 0.0
    %71 = vmatpush2.msra.mxu0 0.0
    %72 = vmatprep.subr.mxu0 0.0
    %73 = vmatpush2.msra.mxu0 0.0
    %74 = vmatprep.subr.mxu0 0.0
    %75 = vmatpush2.msra.mxu0 0.0
    %76 = vmatprep.subr.mxu0 0.0
    %77 = vmatpush2.msra.mxu0 0.0
    %78 = vmatprep.subr.mxu0 0.0
    %79 = vmatpush2.msra.mxu0 0.0
    %80 = vmatprep.subr.mxu0 0.0
    %81 = vmatpush2.msra.mxu0 0.0
    %82 = vmatprep.subr.mxu0 0.0
    %83 = vmatpush2.msra.mxu0 0.0
    %84 = vmatprep.subr.mxu0 0.0
    %85 = vmatpush2.msra.mxu0 0.0
    %86 = vmatprep.subr.mxu0 0.0
    %87 = vmatpush2.msra.mxu0 0.0
    %88 = vmatprep.subr.mxu0 0.0
    %89 = vmatpush2.msra.mxu0 0.0
    %90 = vmatprep.subr.mxu0 0.0
    %91 = vmatpush2.msra.mxu0 0.0
    %92 = vmatprep.subr.mxu0 0.0
    %93 = vmatpush2.msra.mxu0 0.0
    %94 = vmatprep.subr.mxu0 0.0
    %95 = vmatpush2.msra.mxu0 0.0
    %96 = vmatprep.mubr.f32.mxu0 0.0
    %97 = vmatmul.mubr.f32.gmra.mxu0 %v30
    %v98 = vpop.f32.mrf.mxu0
    %v99 = vadd.f32 %v26, %v98
    %v100 = vpop.f32.mrf.mxu0
    %101 = vdwg.mxu0
    %vm102 = vcmask 25600
    %v103 = vsel %vm102, %v99, -inf
    %104 = vmax.xlane.f32.xlu0 %v103
    %v105 = vpop.xlane.xlu0 %104
    %v106 = vsub.f32 %v99, %v105
    %v107 = vmul.f32 %v106, 1.442695
    %v108 = vpow.pop %v107
    %v109 = vsel %vm102, %v108, 0.0
    %110 = vadd.xlane.f32.xlu0 %v109
    %v111 = vpop.xlane.xlu0 %110
    %v112 = vrcp.pop %v111
    %v113 = vmul.f32 %v108, %v112
    %114 = vst.msk [vmem:[#allocation2] sm:$0x3] %vm102, %v113
    // Predicated region
    $region14: #{forward.3} parent=1 // pred_check
      _
    $region15: #{forward.3} parent=1 // pred_check_branch
      %116 = sbr.rel (0) target = $region17
    $region16: #{forward.3} parent=1 // pred_region
      %s118 = ssub.s32 32, 32
      %119 = vsyncadd [#allocation3], %s118
      %s121 = sshll.u32 [#allocation2], 4
      %s122 = int_to_ptr.vmem [resolvable:$true] %s121
      %124 = dma.vmem_to_hbm [thread:$0]  %s122, 32, %s3, [#allocation3]
    $region17: #{forward.3} parent=1 // pred_fallthru
      _
    // Predicated region
    $region18: #{forward.3} parent=1 // pred_check
      _
    $region19: #{forward.3} parent=1 // pred_check_branch
      %126 = sbr.rel (0) target = $region21
    $region20: #{forward.3} parent=1 // pred_region
      %127 = dma.done [#allocation3], 32
    $region21: #{forward.3} parent=1 // pred_fallthru
      _
    %128 = vsyncpa [#allocation3], 1

// kernel: forward.2
$region0: #{forward.2}
  #allocation0 [shape = 'u32[]', space=smem, size = 0x4, offset = 0x4, fixed_abs, tag = 'smem constant byte address 0x4 - core index']
  #allocation1 [shape = 'u32[144,128]{1,0:T(1,128)}', space=vmem, size = 0x12000, scoped, tag = 'internal scratch']
  #allocation2 [shape = 'f32[16,5]{1,0:T(8,128)}', space=vmem, size = 0x2000, scoped, tag = 'scratch operand']
  %s0 = inlined_call_operand.vmem [shape: f32[16,5], index: 0, kind: input, shape index: {}]
  %s1 = inlined_call_operand.vmem [shape: f32[16,5,15], index: 1, kind: input, shape index: {}]
  %s2 = inlined_call_operand.vmem [shape: f32[16,1,15], index: 2, kind: input, shape index: {}]
  %s3 = inlined_call_operand.vmem [shape: f32[16,5,5], index: 3, kind: input, shape index: {}]
  %s4 = inlined_call_operand.vmem [shape: f32[16,1,5], index: 4, kind: input, shape index: {}]
  %s5 = inlined_call_operand.vmem [shape: f32[16,1,5], index: 5, kind: input, shape index: {}]
  %s6 = inlined_call_operand.vmem [shape: f32[16,1,5], index: 6, kind: input, shape index: {}]
  %s7 = inlined_call_operand.vmem [shape: f32[16,5,2048], index: 7, kind: input, shape index: {}]
  %s8 = inlined_call_operand.vmem [shape: f32[16,1,2048], index: 8, kind: input, shape index: {}]
  %s9 = inlined_call_operand.vmem [shape: f32[16,2048,5], index: 9, kind: input, shape index: {}]
  %s10 = inlined_call_operand.vmem [shape: f32[16,1,5], index: 10, kind: input, shape index: {}]
  %s11 = inlined_call_operand.vmem [shape: f32[16,1,5], index: 11, kind: input, shape index: {}]
  %s12 = inlined_call_operand.vmem [shape: f32[16,1,5], index: 12, kind: input, shape index: {}]
  %s13 = inlined_call_operand.vmem [shape: f32[16,5], index: 13, kind: output, shape index: {}]
  %s14 = sld [smem:[#allocation0]]
  $region93: #{forward.2} parent=0
    _
  %s16 = ssub.s32 1, %s14
  %s17 = scalar_select 0, %s16, %s14
  loop: start=0, step=1, limit=18
  $region2: #{forward.2} parent=0 // loop_pre_header
    _
  $region3: #{forward.2} parent=0 // loop_header
    %s19 = sphi 0, %s23
    %p20 = scmp.ge.s32.totalorder %s19, 18
    %s27 = sphi 0, %s27
    %s29 = sphi 0, %s27
    %s30 = sphi 0, %s29
    %s44 = sphi 0, %s30
    %s50 = sphi 0, %s52
    %s53 = sphi 0, %s50
    %s54 = sphi 0, %s53
    %s70 = sphi 0, %s54
    %s76 = sphi 0, %s78
    %s79 = sphi 0, %s76
    %s80 = sphi 0, %s79
    %s96 = sphi 0, %s80
    %s102 = sphi 0, %s104
    %s105 = sphi 0, %s102
    %s106 = sphi 0, %s105
    %s122 = sphi 0, %s106
    %s128 = sphi 0, %s130
    %s131 = sphi 0, %s128
    %s132 = sphi 0, %s131
    %s148 = sphi 0, %s132
    %s154 = sphi 0, %s156
    %s157 = sphi 0, %s154
    %s158 = sphi 0, %s157
    %s174 = sphi 0, %s158
    %s180 = sphi 0, %s182
    %s183 = sphi 0, %s180
    %s184 = sphi 0, %s183
    %s200 = sphi 0, %s184
    %s206 = sphi 0, %s208
    %s209 = sphi 0, %s206
    %s210 = sphi 0, %s209
    %s226 = sphi 0, %s210
    %s232 = sphi 0, %s234
    %s235 = sphi 0, %s232
    %s236 = sphi 0, %s235
    %s252 = sphi 0, %s236
    %s258 = sphi 0, %s260
    %s261 = sphi 0, %s258
    %s262 = sphi 0, %s261
    %s278 = sphi 0, %s262
    %s284 = sphi 0, %s286
    %s287 = sphi 0, %s284
    %s288 = sphi 0, %s287
    %s304 = sphi 0, %s288
    %s310 = sphi 0, %s312
    %s313 = sphi 0, %s310
    %s314 = sphi 0, %s313
    %s330 = sphi 0, %s314
    %s336 = sphi 0, %s338
    %s339 = sphi 0, %s336
    %s340 = sphi 0, %s339
    %s356 = sphi 0, %s340
    %s360 = sphi 0, %s360
    %s362 = sphi 0, %s360
    %s363 = sphi 0, %s362
    %s377 = sphi 0, %s363
  $region4: #{forward.2} parent=0 // loop_header_branch
    %22 = sbr.rel (%p20) target = $region8
  $region5: #{forward.2} parent=0 // loop_body
    %s24 = ssub.s32 %s19, 1
    %s25 = ssub.s32 %s19, 2
    %s26 = sadd.s32 %s19, 1
    %s28 = sadd.s32 %s27, 1
    %p31 = scmp.eq.s32.totalorder %s19, 15
    %p32 = scmp.ne.s32.totalorder %s27, %s29
    %p33 = scmp.eq.s32.totalorder %s19, 0
    %p34 = por %p32, %p33
    %p35 = scmp.ne.s32.totalorder %s27, %s29
    %p36 = scmp.eq.s32.totalorder %s24, 15
    %p37 = por %p35, %p36
    %p38 = scmp.ne.s32.totalorder %s29, %s30
    %p39 = scmp.eq.s32.totalorder %s24, 0
    %p40 = por %p38, %p39
    %p41 = scmp.ne.s32.totalorder %s29, %s30
    %p42 = scmp.eq.s32.totalorder %s25, 15
    %p43 = por %p41, %p42
    %p45 = scmp.ne.s32.totalorder %s30, %s44
    %p46 = scmp.eq.s32.totalorder %s25, 0
    %p47 = por %p45, %p46
    %s48 = ssub.s32 %s19, %s26
    %p49 = scmp.eq.s32.totalorder %s48, 0
    %s51 = sadd.s32 %s50, 1
    %s52 = scalar_select %p49, %s50, %s51
    %p55 = pneg %p49
    %p56 = scmp.eq.s32.totalorder %s19, 15
    %p57 = por %p55, %p56
    %p58 = scmp.ne.s32.totalorder %s50, %s53
    %p59 = scmp.eq.s32.totalorder %s19, 0
    %p60 = por %p58, %p59
    %p61 = scmp.ne.s32.totalorder %s50, %s53
    %p62 = scmp.eq.s32.totalorder %s24, 15
    %p63 = por %p61, %p62
    %p64 = scmp.ne.s32.totalorder %s53, %s54
    %p65 = scmp.eq.s32.totalorder %s24, 0
    %p66 = por %p64, %p65
    %p67 = scmp.ne.s32.totalorder %s53, %s54
    %p68 = scmp.eq.s32.totalorder %s25, 15
    %p69 = por %p67, %p68
    %p71 = scmp.ne.s32.totalorder %s54, %s70
    %p72 = scmp.eq.s32.totalorder %s25, 0
    %p73 = por %p71, %p72
    %s74 = ssub.s32 %s19, %s26
    %p75 = scmp.eq.s32.totalorder %s74, 0
    %s77 = sadd.s32 %s76, 1
    %s78 = scalar_select %p75, %s76, %s77
    %p81 = pneg %p75
    %p82 = scmp.eq.s32.totalorder %s19, 15
    %p83 = por %p81, %p82
    %p84 = scmp.ne.s32.totalorder %s76, %s79
    %p85 = scmp.eq.s32.totalorder %s19, 0
    %p86 = por %p84, %p85
    %p87 = scmp.ne.s32.totalorder %s76, %s79
    %p88 = scmp.eq.s32.totalorder %s24, 15
    %p89 = por %p87, %p88
    %p90 = scmp.ne.s32.totalorder %s79, %s80
    %p91 = scmp.eq.s32.totalorder %s24, 0
    %p92 = por %p90, %p91
    %p93 = scmp.ne.s32.totalorder %s79, %s80
    %p94 = scmp.eq.s32.totalorder %s25, 15
    %p95 = por %p93, %p94
    %p97 = scmp.ne.s32.totalorder %s80, %s96
    %p98 = scmp.eq.s32.totalorder %s25, 0
    %p99 = por %p97, %p98
    %s100 = ssub.s32 %s19, %s26
    %p101 = scmp.eq.s32.totalorder %s100, 0
    %s103 = sadd.s32 %s102, 1
    %s104 = scalar_select %p101, %s102, %s103
    %p107 = pneg %p101
    %p108 = scmp.eq.s32.totalorder %s19, 15
    %p109 = por %p107, %p108
    %p110 = scmp.ne.s32.totalorder %s102, %s105
    %p111 = scmp.eq.s32.totalorder %s19, 0
    %p112 = por %p110, %p111
    %p113 = scmp.ne.s32.totalorder %s102, %s105
    %p114 = scmp.eq.s32.totalorder %s24, 15
    %p115 = por %p113, %p114
    %p116 = scmp.ne.s32.totalorder %s105, %s106
    %p117 = scmp.eq.s32.totalorder %s24, 0
    %p118 = por %p116, %p117
    %p119 = scmp.ne.s32.totalorder %s105, %s106
    %p120 = scmp.eq.s32.totalorder %s25, 15
    %p121 = por %p119, %p120
    %p123 = scmp.ne.s32.totalorder %s106, %s122
    %p124 = scmp.eq.s32.totalorder %s25, 0
    %p125 = por %p123, %p124
    %s126 = ssub.s32 %s19, %s26
    %p127 = scmp.eq.s32.totalorder %s126, 0
    %s129 = sadd.s32 %s128, 1
    %s130 = scalar_select %p127, %s128, %s129
    %p133 = pneg %p127
    %p134 = scmp.eq.s32.totalorder %s19, 15
    %p135 = por %p133, %p134
    %p136 = scmp.ne.s32.totalorder %s128, %s131
    %p137 = scmp.eq.s32.totalorder %s19, 0
    %p138 = por %p136, %p137
    %p139 = scmp.ne.s32.totalorder %s128, %s131
    %p140 = scmp.eq.s32.totalorder %s24, 15
    %p141 = por %p139, %p140
    %p142 = scmp.ne.s32.totalorder %s131, %s132
    %p143 = scmp.eq.s32.totalorder %s24, 0
    %p144 = por %p142, %p143
    %p145 = scmp.ne.s32.totalorder %s131, %s132
    %p146 = scmp.eq.s32.totalorder %s25, 15
    %p147 = por %p145, %p146
    %p149 = scmp.ne.s32.totalorder %s132, %s148
    %p150 = scmp.eq.s32.totalorder %s25, 0
    %p151 = por %p149, %p150
    %s152 = ssub.s32 %s19, %s26
    %p153 = scmp.eq.s32.totalorder %s152, 0
    %s155 = sadd.s32 %s154, 1
    %s156 = scalar_select %p153, %s154, %s155
    %p159 = pneg %p153
    %p160 = scmp.eq.s32.totalorder %s19, 15
    %p161 = por %p159, %p160
    %p162 = scmp.ne.s32.totalorder %s154, %s157
    %p163 = scmp.eq.s32.totalorder %s19, 0
    %p164 = por %p162, %p163
    %p165 = scmp.ne.s32.totalorder %s154, %s157
    %p166 = scmp.eq.s32.totalorder %s24, 15
    %p167 = por %p165, %p166
    %p168 = scmp.ne.s32.totalorder %s157, %s158
    %p169 = scmp.eq.s32.totalorder %s24, 0
    %p170 = por %p168, %p169
    %p171 = scmp.ne.s32.totalorder %s157, %s158
    %p172 = scmp.eq.s32.totalorder %s25, 15
    %p173 = por %p171, %p172
    %p175 = scmp.ne.s32.totalorder %s158, %s174
    %p176 = scmp.eq.s32.totalorder %s25, 0
    %p177 = por %p175, %p176
    %s178 = ssub.s32 %s19, %s26
    %p179 = scmp.eq.s32.totalorder %s178, 0
    %s181 = sadd.s32 %s180, 1
    %s182 = scalar_select %p179, %s180, %s181
    %p185 = pneg %p179
    %p186 = scmp.eq.s32.totalorder %s19, 15
    %p187 = por %p185, %p186
    %p188 = scmp.ne.s32.totalorder %s180, %s183
    %p189 = scmp.eq.s32.totalorder %s19, 0
    %p190 = por %p188, %p189
    %p191 = scmp.ne.s32.totalorder %s180, %s183
    %p192 = scmp.eq.s32.totalorder %s24, 15
    %p193 = por %p191, %p192
    %p194 = scmp.ne.s32.totalorder %s183, %s184
    %p195 = scmp.eq.s32.totalorder %s24, 0
    %p196 = por %p194, %p195
    %p197 = scmp.ne.s32.totalorder %s183, %s184
    %p198 = scmp.eq.s32.totalorder %s25, 15
    %p199 = por %p197, %p198
    %p201 = scmp.ne.s32.totalorder %s184, %s200
    %p202 = scmp.eq.s32.totalorder %s25, 0
    %p203 = por %p201, %p202
    %s204 = ssub.s32 %s19, %s26
    %p205 = scmp.eq.s32.totalorder %s204, 0
    %s207 = sadd.s32 %s206, 1
    %s208 = scalar_select %p205, %s206, %s207
    %p211 = pneg %p205
    %p212 = scmp.eq.s32.totalorder %s19, 15
    %p213 = por %p211, %p212
    %p214 = scmp.ne.s32.totalorder %s206, %s209
    %p215 = scmp.eq.s32.totalorder %s19, 0
    %p216 = por %p214, %p215
    %p217 = scmp.ne.s32.totalorder %s206, %s209
    %p218 = scmp.eq.s32.totalorder %s24, 15
    %p219 = por %p217, %p218
    %p220 = scmp.ne.s32.totalorder %s209, %s210
    %p221 = scmp.eq.s32.totalorder %s24, 0
    %p222 = por %p220, %p221
    %p223 = scmp.ne.s32.totalorder %s209, %s210
    %p224 = scmp.eq.s32.totalorder %s25, 15
    %p225 = por %p223, %p224
    %p227 = scmp.ne.s32.totalorder %s210, %s226
    %p228 = scmp.eq.s32.totalorder %s25, 0
    %p229 = por %p227, %p228
    %s230 = ssub.s32 %s19, %s26
    %p231 = scmp.eq.s32.totalorder %s230, 0
    %s233 = sadd.s32 %s232, 1
    %s234 = scalar_select %p231, %s232, %s233
    %p237 = pneg %p231
    %p238 = scmp.eq.s32.totalorder %s19, 15
    %p239 = por %p237, %p238
    %p240 = scmp.ne.s32.totalorder %s232, %s235
    %p241 = scmp.eq.s32.totalorder %s19, 0
    %p242 = por %p240, %p241
    %p243 = scmp.ne.s32.totalorder %s232, %s235
    %p244 = scmp.eq.s32.totalorder %s24, 15
    %p245 = por %p243, %p244
    %p246 = scmp.ne.s32.totalorder %s235, %s236
    %p247 = scmp.eq.s32.totalorder %s24, 0
    %p248 = por %p246, %p247
    %p249 = scmp.ne.s32.totalorder %s235, %s236
    %p250 = scmp.eq.s32.totalorder %s25, 15
    %p251 = por %p249, %p250
    %p253 = scmp.ne.s32.totalorder %s236, %s252
    %p254 = scmp.eq.s32.totalorder %s25, 0
    %p255 = por %p253, %p254
    %s256 = ssub.s32 %s19, %s26
    %p257 = scmp.eq.s32.totalorder %s256, 0
    %s259 = sadd.s32 %s258, 1
    %s260 = scalar_select %p257, %s258, %s259
    %p263 = pneg %p257
    %p264 = scmp.eq.s32.totalorder %s19, 15
    %p265 = por %p263, %p264
    %p266 = scmp.ne.s32.totalorder %s258, %s261
    %p267 = scmp.eq.s32.totalorder %s19, 0
    %p268 = por %p266, %p267
    %p269 = scmp.ne.s32.totalorder %s258, %s261
    %p270 = scmp.eq.s32.totalorder %s24, 15
    %p271 = por %p269, %p270
    %p272 = scmp.ne.s32.totalorder %s261, %s262
    %p273 = scmp.eq.s32.totalorder %s24, 0
    %p274 = por %p272, %p273
    %p275 = scmp.ne.s32.totalorder %s261, %s262
    %p276 = scmp.eq.s32.totalorder %s25, 15
    %p277 = por %p275, %p276
    %p279 = scmp.ne.s32.totalorder %s262, %s278
    %p280 = scmp.eq.s32.totalorder %s25, 0
    %p281 = por %p279, %p280
    %s282 = ssub.s32 %s19, %s26
    %p283 = scmp.eq.s32.totalorder %s282, 0
    %s285 = sadd.s32 %s284, 1
    %s286 = scalar_select %p283, %s284, %s285
    %p289 = pneg %p283
    %p290 = scmp.eq.s32.totalorder %s19, 15
    %p291 = por %p289, %p290
    %p292 = scmp.ne.s32.totalorder %s284, %s287
    %p293 = scmp.eq.s32.totalorder %s19, 0
    %p294 = por %p292, %p293
    %p295 = scmp.ne.s32.totalorder %s284, %s287
    %p296 = scmp.eq.s32.totalorder %s24, 15
    %p297 = por %p295, %p296
    %p298 = scmp.ne.s32.totalorder %s287, %s288
    %p299 = scmp.eq.s32.totalorder %s24, 0
    %p300 = por %p298, %p299
    %p301 = scmp.ne.s32.totalorder %s287, %s288
    %p302 = scmp.eq.s32.totalorder %s25, 15
    %p303 = por %p301, %p302
    %p305 = scmp.ne.s32.totalorder %s288, %s304
    %p306 = scmp.eq.s32.totalorder %s25, 0
    %p307 = por %p305, %p306
    %s308 = ssub.s32 %s19, %s26
    %p309 = scmp.eq.s32.totalorder %s308, 0
    %s311 = sadd.s32 %s310, 1
    %s312 = scalar_select %p309, %s310, %s311
    %p315 = pneg %p309
    %p316 = scmp.eq.s32.totalorder %s19, 15
    %p317 = por %p315, %p316
    %p318 = scmp.ne.s32.totalorder %s310, %s313
    %p319 = scmp.eq.s32.totalorder %s19, 0
    %p320 = por %p318, %p319
    %p321 = scmp.ne.s32.totalorder %s310, %s313
    %p322 = scmp.eq.s32.totalorder %s24, 15
    %p323 = por %p321, %p322
    %p324 = scmp.ne.s32.totalorder %s313, %s314
    %p325 = scmp.eq.s32.totalorder %s24, 0
    %p326 = por %p324, %p325
    %p327 = scmp.ne.s32.totalorder %s313, %s314
    %p328 = scmp.eq.s32.totalorder %s25, 15
    %p329 = por %p327, %p328
    %p331 = scmp.ne.s32.totalorder %s314, %s330
    %p332 = scmp.eq.s32.totalorder %s25, 0
    %p333 = por %p331, %p332
    %s334 = ssub.s32 %s19, %s26
    %p335 = scmp.eq.s32.totalorder %s334, 0
    %s337 = sadd.s32 %s336, 1
    %s338 = scalar_select %p335, %s336, %s337
    %p341 = pneg %p335
    %p342 = scmp.eq.s32.totalorder %s19, 15
    %p343 = por %p341, %p342
    %p344 = scmp.ne.s32.totalorder %s336, %s339
    %p345 = scmp.eq.s32.totalorder %s19, 0
    %p346 = por %p344, %p345
    %p347 = scmp.ne.s32.totalorder %s336, %s339
    %p348 = scmp.eq.s32.totalorder %s24, 15
    %p349 = por %p347, %p348
    %p350 = scmp.ne.s32.totalorder %s339, %s340
    %p351 = scmp.eq.s32.totalorder %s24, 0
    %p352 = por %p350, %p351
    %p353 = scmp.ne.s32.totalorder %s339, %s340
    %p354 = scmp.eq.s32.totalorder %s25, 15
    %p355 = por %p353, %p354
    %p357 = scmp.ne.s32.totalorder %s340, %s356
    %p358 = scmp.eq.s32.totalorder %s25, 0
    %p359 = por %p357, %p358
    %s361 = sadd.s32 %s360, 1
    %p364 = scmp.eq.s32.totalorder %s19, 15
    %p365 = scmp.ne.s32.totalorder %s360, %s362
    %p366 = scmp.eq.s32.totalorder %s19, 0
    %p367 = por %p365, %p366
    %p368 = scmp.ne.s32.totalorder %s360, %s362
    %p369 = scmp.eq.s32.totalorder %s24, 15
    %p370 = por %p368, %p369
    %p371 = scmp.ne.s32.totalorder %s362, %s363
    %p372 = scmp.eq.s32.totalorder %s24, 0
    %p373 = por %p371, %p372
    %p374 = scmp.ne.s32.totalorder %s362, %s363
    %p375 = scmp.eq.s32.totalorder %s25, 15
    %p376 = por %p374, %p375
    %p378 = scmp.ne.s32.totalorder %s363, %s377
    %p379 = scmp.eq.s32.totalorder %s25, 0
    %p380 = por %p378, %p379
    %p381 = scmp.le.s32.totalorder 1, %s19
    %p382 = scmp.lt.s32.totalorder %s19, 17
    %p383 = pnand %p381, %p382
    %p384 = pneg %p383
    // Predicated region
    $region9: #{forward.2} parent=5 // pred_check
      _
    $region10: #{forward.2} parent=5 // pred_check_branch
      %386 = sbr.rel (%p383) target = $region12
    $region11: #{forward.2} parent=5 // pred_region
      %s387 = ssub.s32 %s19, 1
      // Predicated region
      $region13: #{forward.2} parent=11 // pred_check
        %p388 = pneg %p40
      $region14: #{forward.2} parent=11 // pred_check_branch
        %390 = sbr.rel (%p388) target = $region16
      $region15: #{forward.2} parent=11 // pred_region
        _
      $region16: #{forward.2} parent=11 // pred_fallthru
        _
    $region12: #{forward.2} parent=5 // pred_fallthru
      _
    %p391 = scmp.lt.s32.totalorder %s19, 16
    // Predicated region
    $region17: #{forward.2} parent=5 // pred_check
      %p392 = pneg %p391
    $region18: #{forward.2} parent=5 // pred_check_branch
      %394 = sbr.rel (%p392) target = $region20
    $region19: #{forward.2} parent=5 // pred_region
      // Predicated region
      $region21: #{forward.2} parent=19 // pred_check
        %p395 = pneg %p60
      $region22: #{forward.2} parent=19 // pred_check_branch
        %397 = sbr.rel (%p395) target = $region24
      $region23: #{forward.2} parent=19 // pred_region
        %p398 = scmp.lt.s32.totalorder %s19, 15
        %s399 = scalar_select %p398, %s19, 15
        %s400 = smul.addr %s399, 8
        %s401 = scalar_lea.vmem %s1, %s400
      $region24: #{forward.2} parent=19 // pred_fallthru
        _
      // Predicated region
      $region25: #{forward.2} parent=19 // pred_check
        %p402 = pneg %p86
      $region26: #{forward.2} parent=19 // pred_check_branch
        %404 = sbr.rel (%p402) target = $region28
      $region27: #{forward.2} parent=19 // pred_region
        %p405 = scmp.lt.s32.totalorder %s19, 15
        %s406 = scalar_select %p405, %s19, 15
        %s407 = scalar_lea.vmem %s2, %s406
      $region28: #{forward.2} parent=19 // pred_fallthru
        _
      // Predicated region
      $region29: #{forward.2} parent=19 // pred_check
        %p408 = pneg %p112
      $region30: #{forward.2} parent=19 // pred_check_branch
        %410 = sbr.rel (%p408) target = $region32
      $region31: #{forward.2} parent=19 // pred_region
        %p411 = scmp.lt.s32.totalorder %s19, 15
        %s412 = scalar_select %p411, %s19, 15
        %s413 = smul.addr %s412, 8
        %s414 = scalar_lea.vmem %s3, %s413
      $region32: #{forward.2} parent=19 // pred_fallthru
        _
      // Predicated region
      $region33: #{forward.2} parent=19 // pred_check
        %p415 = pneg %p138
      $region34: #{forward.2} parent=19 // pred_check_branch
        %417 = sbr.rel (%p415) target = $region36
      $region35: #{forward.2} parent=19 // pred_region
        %p418 = scmp.lt.s32.totalorder %s19, 15
        %s419 = scalar_select %p418, %s19, 15
        %s420 = scalar_lea.vmem %s4, %s419
      $region36: #{forward.2} parent=19 // pred_fallthru
        _
      // Predicated region
      $region37: #{forward.2} parent=19 // pred_check
        %p421 = pneg %p164
      $region38: #{forward.2} parent=19 // pred_check_branch
        %423 = sbr.rel (%p421) target = $region40
      $region39: #{forward.2} parent=19 // pred_region
        %p424 = scmp.lt.s32.totalorder %s19, 15
        %s425 = scalar_select %p424, %s19, 15
        %s426 = scalar_lea.vmem %s5, %s425
      $region40: #{forward.2} parent=19 // pred_fallthru
        _
      // Predicated region
      $region41: #{forward.2} parent=19 // pred_check
        %p427 = pneg %p190
      $region42: #{forward.2} parent=19 // pred_check_branch
        %429 = sbr.rel (%p427) target = $region44
      $region43: #{forward.2} parent=19 // pred_region
        %p430 = scmp.lt.s32.totalorder %s19, 15
        %s431 = scalar_select %p430, %s19, 15
        %s432 = scalar_lea.vmem %s6, %s431
      $region44: #{forward.2} parent=19 // pred_fallthru
        _
      // Predicated region
      $region45: #{forward.2} parent=19 // pred_check
        %p433 = pneg %p216
      $region46: #{forward.2} parent=19 // pred_check_branch
        %435 = sbr.rel (%p433) target = $region48
      $region47: #{forward.2} parent=19 // pred_region
        %p436 = scmp.lt.s32.totalorder %s19, 15
        %s437 = scalar_select %p436, %s19, 15
        %s438 = smul.addr %s437, 16
        %s439 = smul.addr %s438, 8
        %s440 = scalar_lea.vmem %s7, %s439
      $region48: #{forward.2} parent=19 // pred_fallthru
        _
      // Predicated region
      $region49: #{forward.2} parent=19 // pred_check
        %p441 = pneg %p242
      $region50: #{forward.2} parent=19 // pred_check_branch
        %443 = sbr.rel (%p441) target = $region52
      $region51: #{forward.2} parent=19 // pred_region
        %p444 = scmp.lt.s32.totalorder %s19, 15
        %s445 = scalar_select %p444, %s19, 15
        %s446 = smul.addr %s445, 16
        %s447 = scalar_lea.vmem %s8, %s446
      $region52: #{forward.2} parent=19 // pred_fallthru
        _
      // Predicated region
      $region53: #{forward.2} parent=19 // pred_check
        %p448 = pneg %p268
      $region54: #{forward.2} parent=19 // pred_check_branch
        %450 = sbr.rel (%p448) target = $region56
      $region55: #{forward.2} parent=19 // pred_region
        %p451 = scmp.lt.s32.totalorder %s19, 15
        %s452 = scalar_select %p451, %s19, 15
        %s453 = smul.addr %s452, 256
        %s454 = smul.addr %s453, 8
        %s455 = scalar_lea.vmem %s9, %s454
      $region56: #{forward.2} parent=19 // pred_fallthru
        _
      // Predicated region
      $region57: #{forward.2} parent=19 // pred_check
        %p456 = pneg %p294
      $region58: #{forward.2} parent=19 // pred_check_branch
        %458 = sbr.rel (%p456) target = $region60
      $region59: #{forward.2} parent=19 // pred_region
        %p459 = scmp.lt.s32.totalorder %s19, 15
        %s460 = scalar_select %p459, %s19, 15
        %s461 = scalar_lea.vmem %s10, %s460
      $region60: #{forward.2} parent=19 // pred_fallthru
        _
      // Predicated region
      $region61: #{forward.2} parent=19 // pred_check
        %p462 = pneg %p320
      $region62: #{forward.2} parent=19 // pred_check_branch
        %464 = sbr.rel (%p462) target = $region64
      $region63: #{forward.2} parent=19 // pred_region
        %p465 = scmp.lt.s32.totalorder %s19, 15
        %s466 = scalar_select %p465, %s19, 15
        %s467 = scalar_lea.vmem %s11, %s466
      $region64: #{forward.2} parent=19 // pred_fallthru
        _
      // Predicated region
      $region65: #{forward.2} parent=19 // pred_check
        %p468 = pneg %p346
      $region66: #{forward.2} parent=19 // pred_check_branch
        %470 = sbr.rel (%p468) target = $region68
      $region67: #{forward.2} parent=19 // pred_region
        %p471 = scmp.lt.s32.totalorder %s19, 15
        %s472 = scalar_select %p471, %s19, 15
        %s473 = scalar_lea.vmem %s12, %s472
      $region68: #{forward.2} parent=19 // pred_fallthru
        _
    $region20: #{forward.2} parent=5 // pred_fallthru
      _
    %p474 = scmp.le.s32.totalorder 1, %s19
    %p475 = scmp.lt.s32.totalorder %s19, 17
    %p476 = pnand %p474, %p475
    %p477 = pneg %p476
    // Predicated region
    $region69: #{forward.2} parent=5 // pred_check
      _
    $region70: #{forward.2} parent=5 // pred_check_branch
      %479 = sbr.rel (%p476) target = $region72
    $region71: #{forward.2} parent=5 // pred_region
      %s480 = ssub.s32 %s19, 1
      %p481 = pneg %p40
      %p482 = pneg %p37
      %p483 = scmp.lt.s32.totalorder %s24, 15
      %s484 = scalar_select %p483, %s24, 15
      %s485 = smul.addr %s484, 8
      %s486 = scalar_lea.vmem %s1, %s485
      %p487 = pneg %p66
      %p488 = pneg %p63
      %p489 = scmp.lt.s32.totalorder %s24, 15
      %s490 = scalar_select %p489, %s24, 15
      %s491 = scalar_lea.vmem %s2, %s490
      %p492 = pneg %p92
      %p493 = pneg %p89
      %p494 = scmp.lt.s32.totalorder %s24, 15
      %s495 = scalar_select %p494, %s24, 15
      %s496 = smul.addr %s495, 8
      %s497 = scalar_lea.vmem %s3, %s496
      %p498 = pneg %p118
      %p499 = pneg %p115
      %p500 = scmp.lt.s32.totalorder %s24, 15
      %s501 = scalar_select %p500, %s24, 15
      %s502 = scalar_lea.vmem %s4, %s501
      %p503 = pneg %p144
      %p504 = pneg %p141
      %p505 = scmp.lt.s32.totalorder %s24, 15
      %s506 = scalar_select %p505, %s24, 15
      %s507 = scalar_lea.vmem %s5, %s506
      %p508 = pneg %p170
      %p509 = pneg %p167
      %p510 = scmp.lt.s32.totalorder %s24, 15
      %s511 = scalar_select %p510, %s24, 15
      %s512 = scalar_lea.vmem %s6, %s511
      %p513 = pneg %p196
      %p514 = pneg %p193
      %p515 = scmp.lt.s32.totalorder %s24, 15
      %s516 = scalar_select %p515, %s24, 15
      %s517 = smul.addr %s516, 16
      %s518 = smul.addr %s517, 8
      %s519 = scalar_lea.vmem %s7, %s518
      %p520 = pneg %p222
      %p521 = pneg %p219
      %p522 = scmp.lt.s32.totalorder %s24, 15
      %s523 = scalar_select %p522, %s24, 15
      %s524 = smul.addr %s523, 16
      %s525 = scalar_lea.vmem %s8, %s524
      %p526 = pneg %p248
      %p527 = pneg %p245
      %p528 = scmp.lt.s32.totalorder %s24, 15
      %s529 = scalar_select %p528, %s24, 15
      %s530 = smul.addr %s529, 256
      %s531 = smul.addr %s530, 8
      %s532 = scalar_lea.vmem %s9, %s531
      %p533 = pneg %p274
      %p534 = pneg %p271
      %p535 = scmp.lt.s32.totalorder %s24, 15
      %s536 = scalar_select %p535, %s24, 15
      %s537 = scalar_lea.vmem %s10, %s536
      %p538 = pneg %p300
      %p539 = pneg %p297
      %p540 = scmp.lt.s32.totalorder %s24, 15
      %s541 = scalar_select %p540, %s24, 15
      %s542 = scalar_lea.vmem %s11, %s541
      %p543 = pneg %p326
      %p544 = pneg %p323
      %p545 = scmp.lt.s32.totalorder %s24, 15
      %s546 = scalar_select %p545, %s24, 15
      %s547 = scalar_lea.vmem %s12, %s546
      %p548 = pneg %p352
      %p549 = pneg %p349
      %p550 = pneg %p373
      %p551 = pneg %p370
      %p552 = scmp.lt.s32.totalorder %s24, 15
      %s553 = scalar_select %p552, %s24, 15
      %s554 = smul.addr %s553, 8
      %s555 = scalar_lea.vmem %s1, %s554
      %p556 = scmp.lt.s32.totalorder %s24, 15
      %s557 = scalar_select %p556, %s24, 15
      %s558 = scalar_lea.vmem %s2, %s557
      %p559 = scmp.lt.s32.totalorder %s24, 15
      %s560 = scalar_select %p559, %s24, 15
      %s561 = smul.addr %s560, 8
      %s562 = scalar_lea.vmem %s3, %s561
      %p563 = scmp.lt.s32.totalorder %s24, 15
      %s564 = scalar_select %p563, %s24, 15
      %s565 = scalar_lea.vmem %s4, %s564
      %p566 = scmp.lt.s32.totalorder %s24, 15
      %s567 = scalar_select %p566, %s24, 15
      %s568 = scalar_lea.vmem %s5, %s567
      %p569 = scmp.lt.s32.totalorder %s24, 15
      %s570 = scalar_select %p569, %s24, 15
      %s571 = scalar_lea.vmem %s6, %s570
      %p572 = scmp.lt.s32.totalorder %s24, 15
      %s573 = scalar_select %p572, %s24, 15
      %s574 = smul.addr %s573, 16
      %s575 = smul.addr %s574, 8
      %s576 = scalar_lea.vmem %s7, %s575
      %p577 = scmp.lt.s32.totalorder %s24, 15
      %s578 = scalar_select %p577, %s24, 15
      %s579 = smul.addr %s578, 16
      %s580 = scalar_lea.vmem %s8, %s579
      %p581 = scmp.lt.s32.totalorder %s24, 15
      %s582 = scalar_select %p581, %s24, 15
      %s583 = smul.addr %s582, 256
      %s584 = smul.addr %s583, 8
      %s585 = scalar_lea.vmem %s9, %s584
      %p586 = scmp.lt.s32.totalorder %s24, 15
      %s587 = scalar_select %p586, %s24, 15
      %s588 = scalar_lea.vmem %s10, %s587
      %p589 = scmp.lt.s32.totalorder %s24, 15
      %s590 = scalar_select %p589, %s24, 15
      %s591 = scalar_lea.vmem %s11, %s590
      %p592 = scmp.lt.s32.totalorder %s24, 15
      %s593 = scalar_select %p592, %s24, 15
      %s594 = scalar_lea.vmem %s12, %s593
      %p595 = scmp.eq.s32.totalorder %s24, 0
      // Predicated region
      $region73: #{forward.2} parent=71 // pred_check
        %p596 = pneg %p595
      $region74: #{forward.2} parent=71 // pred_check_branch
        %598 = sbr.rel (%p596) target = $region76
      $region75: #{forward.2} parent=71 // pred_region
        %v599 = vld [vmem:[%s0] sm:$0xff]
        %v600 = vld [vmem:[%s0 + $0x8] sm:$0xff]
        %vm601 = vcmask 39936
        %602 = vst.msk [vmem:[#allocation2] sm:$0xff] %vm601, %v599
        %603 = vst.msk [vmem:[#allocation2 + $0x8] sm:$0xff] %vm601, %v600
      $region76: #{forward.2} parent=71 // pred_fallthru
        _
      %v604 = vld [vmem:[#allocation2] sm:$0xff]
      %v605 = vld [vmem:[#allocation2 + $0x8] sm:$0xff]
      %v606 = vld [vmem:[%s555] sm:$0x1f]
      %v607 = vld [vmem:[%s558] sm:$0x1]
      %v609 = vlaneseq
      %v610 = vshrl.u32 %v609, 7
      %v611 = vsub.s32 0, %v610
      %v612 = vrot.slane %v607, %v611
      %vm614 = vcmask 39936
      %v616 = vsel %vm614, %v604, 0
      %v619 = vsel %vm614, %v605, 0
      %vm621 = vcmask 1044480
      %v623 = vsel %vm621, %v606, 0
      %625 = vmatprep.subr.mxu0 0.0
      %626 = vmatpush1.msra.mxu0 0.0
      %627 = vmatprep.subr.mxu0 0.0
      %628 = vmatpush1.msra.mxu0 0.0
      %629 = vmatprep.subr.mxu0 0.0
      %630 = vmatpush1.msra.mxu0 0.0
      %631 = vmatprep.subr.mxu0 0.0
      %632 = vmatpush1.msra.mxu0 0.0
      %633 = vmatprep.subr.mxu0 0.0
      %634 = vmatpush1.msra.mxu0 0.0
      %635 = vmatprep.subr.mxu0 0.0
      %636 = vmatpush1.msra.mxu0 0.0
      %637 = vmatprep.subr.mxu0 0.0
      %638 = vmatpush1.msra.mxu0 0.0
      %639 = vmatprep.subr.mxu0 0.0
      %640 = vmatpush1.msra.mxu0 0.0
      %641 = vmatprep.subr.mxu0 0.0
      %642 = vmatpush1.msra.mxu0 0.0
      %643 = vmatprep.subr.mxu0 0.0
      %644 = vmatpush1.msra.mxu0 0.0
      %645 = vmatprep.subr.mxu0 0.0
      %646 = vmatpush1.msra.mxu0 0.0
      %647 = vmatprep.subr.mxu0 0.0
      %648 = vmatpush1.msra.mxu0 0.0
      %649 = vmatprep.subr.mxu0 0.0
      %650 = vmatpush1.msra.mxu0 0.0
      %651 = vmatprep.subr.mxu0 0.0
      %652 = vmatpush1.msra.mxu0 0.0
      %653 = vmatprep.subr.mxu0 0.0
      %654 = vmatpush1.msra.mxu0 0.0
      %655 = vmatprep.subr.mxu0 0.0
      %656 = vmatpush1.msra.mxu0 %v623
      %657 = vmatprep.subr.mxu0 0.0
      %658 = vmatpush2.msra.mxu0 0.0
      %659 = vmatprep.subr.mxu0 0.0
      %660 = vmatpush2.msra.mxu0 0.0
      %661 = vmatprep.subr.mxu0 0.0
      %662 = vmatpush2.msra.mxu0 0.0
      %663 = vmatprep.subr.mxu0 0.0
      %664 = vmatpush2.msra.mxu0 0.0
      %665 = vmatprep.subr.mxu0 0.0
      %666 = vmatpush2.msra.mxu0 0.0
      %667 = vmatprep.subr.mxu0 0.0
      %668 = vmatpush2.msra.mxu0 0.0
      %669 = vmatprep.subr.mxu0 0.0
      %670 = vmatpush2.msra.mxu0 0.0
      %671 = vmatprep.subr.mxu0 0.0
      %672 = vmatpush2.msra.mxu0 0.0
      %673 = vmatprep.subr.mxu0 0.0
      %674 = vmatpush2.msra.mxu0 0.0
      %675 = vmatprep.subr.mxu0 0.0
      %676 = vmatpush2.msra.mxu0 0.0
      %677 = vmatprep.subr.mxu0 0.0
      %678 = vmatpush2.msra.mxu0 0.0
      %679 = vmatprep.subr.mxu0 0.0
      %680 = vmatpush2.msra.mxu0 0.0
      %681 = vmatprep.subr.mxu0 0.0
      %682 = vmatpush2.msra.mxu0 0.0
      %683 = vmatprep.subr.mxu0 0.0
      %684 = vmatpush2.msra.mxu0 0.0
      %685 = vmatprep.subr.mxu0 0.0
      %686 = vmatpush2.msra.mxu0 0.0
      %687 = vmatprep.subr.mxu0 0.0
      %688 = vmatpush2.msra.mxu0 0.0
      %689 = vmatprep.mubr.f32.mxu0 0.0
      %690 = vmatmul.mubr.f32.gmra.mxu0 %v616
      %v691 = vpop.f32.mrf.mxu0
      %v692 = vadd.f32 %v612, %v691
      %v693 = vpop.f32.mrf.mxu0
      %694 = vmatprep.mubr.f32.mxu0 0.0
      %695 = vmatmul.mubr.f32.gmra.mxu0 %v619
      %v696 = vpop.f32.mrf.mxu0
      %v697 = vadd.f32 %v612, %v696
      %v698 = vpop.f32.mrf.mxu0
      %699 = vdwg.mxu0
      %702 = vrot.lane.b32.xlu0 %v692, 123
      %v703 = vpop.permute.xlu0 %702
      %704 = vrot.lane.b32.xlu0 %v697, 123
      %v705 = vpop.permute.xlu0 %704
      %708 = vxpose.xlu0.b32.start [1/16] %v703, 128
      %709 = vxpose.xlu0.b32.cont [2/16] %v705, 128
      %710 = vxpose.xlu0.b32.cont [3/16] 0.0, 128
      %711 = vxpose.xlu0.b32.cont [4/16] 0.0, 128
      %712 = vxpose.xlu0.b32.cont [5/16] 0.0, 128
      %713 = vxpose.xlu0.b32.cont [6/16] 0.0, 128
      %714 = vxpose.xlu0.b32.cont [7/16] 0.0, 128
      %715 = vxpose.xlu0.b32.cont [8/16] 0.0, 128
      %716 = vxpose.xlu0.b32.cont [9/16] 0.0, 128
      %717 = vxpose.xlu0.b32.cont [10/16] 0.0, 128
      %718 = vxpose.xlu0.b32.cont [11/16] 0.0, 128
      %719 = vxpose.xlu0.b32.cont [12/16] 0.0, 128
      %720 = vxpose.xlu0.b32.cont [13/16] 0.0, 128
      %721 = vxpose.xlu0.b32.cont [14/16] 0.0, 128
      %722 = vxpose.xlu0.b32.cont [15/16] 0.0, 128
      %723 = vxpose.xlu0.b32.end [16/16] 0.0, 128
      %v724 = vpop.trf.xlu0
      %v725 = vpop.trf.xlu0
      %v726 = vpop.trf.xlu0
      %v727 = vpop.trf.xlu0
      %v728 = vpop.trf.xlu0
      %v729 = vpop.trf.xlu0
      %v730 = vpop.trf.xlu0
      %v731 = vpop.trf.xlu0
      %v732 = vpop.trf.xlu0
      %v733 = vpop.trf.xlu0
      %v734 = vpop.trf.xlu0
      %v735 = vpop.trf.xlu0
      %v736 = vpop.trf.xlu0
      %v737 = vpop.trf.xlu0
      %v738 = vpop.trf.xlu0
      %v739 = vpop.trf.xlu0
      %740 = vrot.lane.b32.xlu0 %v692, 118
      %v741 = vpop.permute.xlu0 %740
      %742 = vrot.lane.b32.xlu0 %v697, 118
      %v743 = vpop.permute.xlu0 %742
      %746 = vxpose.xlu0.b32.start [1/16] %v741, 128
      %747 = vxpose.xlu0.b32.cont [2/16] %v743, 128
      %748 = vxpose.xlu0.b32.cont [3/16] 0.0, 128
      %749 = vxpose.xlu0.b32.cont [4/16] 0.0, 128
      %750 = vxpose.xlu0.b32.cont [5/16] 0.0, 128
      %751 = vxpose.xlu0.b32.cont [6/16] 0.0, 128
      %752 = vxpose.xlu0.b32.cont [7/16] 0.0, 128
      %753 = vxpose.xlu0.b32.cont [8/16] 0.0, 128
      %754 = vxpose.xlu0.b32.cont [9/16] 0.0, 128
      %755 = vxpose.xlu0.b32.cont [10/16] 0.0, 128
      %756 = vxpose.xlu0.b32.cont [11/16] 0.0, 128
      %757 = vxpose.xlu0.b32.cont [12/16] 0.0, 128
      %758 = vxpose.xlu0.b32.cont [13/16] 0.0, 128
      %759 = vxpose.xlu0.b32.cont [14/16] 0.0, 128
      %760 = vxpose.xlu0.b32.cont [15/16] 0.0, 128
      %761 = vxpose.xlu0.b32.end [16/16] 0.0, 128
      %v762 = vpop.trf.xlu0
      %v763 = vpop.trf.xlu0
      %v764 = vpop.trf.xlu0
      %v765 = vpop.trf.xlu0
      %v766 = vpop.trf.xlu0
      %v767 = vpop.trf.xlu0
      %v768 = vpop.trf.xlu0
      %v769 = vpop.trf.xlu0
      %v770 = vpop.trf.xlu0
      %v771 = vpop.trf.xlu0
      %v772 = vpop.trf.xlu0
      %v773 = vpop.trf.xlu0
      %v774 = vpop.trf.xlu0
      %v775 = vpop.trf.xlu0
      %v776 = vpop.trf.xlu0
      %v777 = vpop.trf.xlu0
      %778 = vset.pattern.permute.xlu0 0
      %779 = vperm.xlu0 %778, %v692
      %v780 = vpop.permute.xlu0 %779
      %v782 = vlaneseq
      %v783 = vshrl.u32 %v782, 7
      %v784 = vsub.s32 0, %v783
      %v785 = vrot.slane %v724, %v784
      %v786 = vmul.f32 %v780, %v785
      %vm787 = vcmask 64512
      %v788 = vsel %vm787, %v786, -inf
      %789 = vmax.xlane.f32.xlu0 %v788
      %v790 = vpop.xlane.xlu0 %789
      %v791 = vsub.f32 %v786, %v790
      %v792 = vmul.f32 %v791, 1.442695
      %v793 = vpow.pop %v792
      %v794 = vsel %vm787, %v793, 0.0
      %795 = vadd.xlane.f32.xlu0 %v794
      %v796 = vpop.xlane.xlu0 %795
      %v797 = vrcp.pop %v796
      %v798 = vmul.f32 %v793, %v797
      %v799 = vlaneseq
      %v800 = vshrl.u32 %v799, 7
      %v801 = vsub.s32 0, %v800
      %v802 = vrot.slane %v762, %v801
      %v803 = vmul.f32 %v798, %v802
      %v804 = vsel %vm787, %v803, 0.0
      %805 = vadd.xlane.f32.xlu0 %v804
      %v806 = vpop.xlane.xlu0 %805
      %807 = vset.pattern.permute.xlu0 1
      %808 = vperm.xlu0 %807, %v692
      %v809 = vpop.permute.xlu0 %808
      %v811 = vlaneseq
      %v812 = vshrl.u32 %v811, 7
      %v813 = vsub.s32 1, %v812
      %v814 = vrot.slane %v724, %v813
      %v815 = vmul.f32 %v809, %v814
      %v816 = vsel %vm787, %v815, -inf
      %817 = vmax.xlane.f32.xlu0 %v816
      %v818 = vpop.xlane.xlu0 %817
      %v819 = vsub.f32 %v815, %v818
      %v820 = vmul.f32 %v819, 1.442695
      %v821 = vpow.pop %v820
      %v822 = vsel %vm787, %v821, 0.0
      %823 = vadd.xlane.f32.xlu0 %v822
      %v824 = vpop.xlane.xlu0 %823
      %v825 = vrcp.pop %v824
      %v826 = vmul.f32 %v821, %v825
      %v827 = vlaneseq
      %v828 = vshrl.u32 %v827, 7
      %v829 = vsub.s32 1, %v828
      %v830 = vrot.slane %v762, %v829
      %v831 = vmul.f32 %v826, %v830
      %v832 = vsel %vm787, %v831, 0.0
      %833 = vadd.xlane.f32.xlu0 %v832
      %v834 = vpop.xlane.xlu0 %833
      %835 = vset.pattern.permute.xlu0 2
      %836 = vperm.xlu0 %835, %v692
      %v837 = vpop.permute.xlu0 %836
      %v839 = vlaneseq
      %v840 = vshrl.u32 %v839, 7
      %v841 = vsub.s32 2, %v840
      %v842 = vrot.slane %v724, %v841
      %v843 = vmul.f32 %v837, %v842
      %v844 = vsel %vm787, %v843, -inf
      %845 = vmax.xlane.f32.xlu0 %v844
      %v846 = vpop.xlane.xlu0 %845
      %v847 = vsub.f32 %v843, %v846
      %v848 = vmul.f32 %v847, 1.442695
      %v849 = vpow.pop %v848
      %v850 = vsel %vm787, %v849, 0.0
      %851 = vadd.xlane.f32.xlu0 %v850
      %v852 = vpop.xlane.xlu0 %851
      %v853 = vrcp.pop %v852
      %v854 = vmul.f32 %v849, %v853
      %v855 = vlaneseq
      %v856 = vshrl.u32 %v855, 7
      %v857 = vsub.s32 2, %v856
      %v858 = vrot.slane %v762, %v857
      %v859 = vmul.f32 %v854, %v858
      %v860 = vsel %vm787, %v859, 0.0
      %861 = vadd.xlane.f32.xlu0 %v860
      %v862 = vpop.xlane.xlu0 %861
      %863 = vset.pattern.permute.xlu0 3
      %864 = vperm.xlu0 %863, %v692
      %v865 = vpop.permute.xlu0 %864
      %v867 = vlaneseq
      %v868 = vshrl.u32 %v867, 7
      %v869 = vsub.s32 3, %v868
      %v870 = vrot.slane %v724, %v869
      %v871 = vmul.f32 %v865, %v870
      %v872 = vsel %vm787, %v871, -inf
      %873 = vmax.xlane.f32.xlu0 %v872
      %v874 = vpop.xlane.xlu0 %873
      %v875 = vsub.f32 %v871, %v874
      %v876 = vmul.f32 %v875, 1.442695
      %v877 = vpow.pop %v876
      %v878 = vsel %vm787, %v877, 0.0
      %879 = vadd.xlane.f32.xlu0 %v878
      %v880 = vpop.xlane.xlu0 %879
      %v881 = vrcp.pop %v880
      %v882 = vmul.f32 %v877, %v881
      %v883 = vlaneseq
      %v884 = vshrl.u32 %v883, 7
      %v885 = vsub.s32 3, %v884
      %v886 = vrot.slane %v762, %v885
      %v887 = vmul.f32 %v882, %v886
      %v888 = vsel %vm787, %v887, 0.0
      %889 = vadd.xlane.f32.xlu0 %v888
      %v890 = vpop.xlane.xlu0 %889
      %891 = vset.pattern.permute.xlu0 4
      %892 = vperm.xlu0 %891, %v692
      %v893 = vpop.permute.xlu0 %892
      %v895 = vlaneseq
      %v896 = vshrl.u32 %v895, 7
      %v897 = vsub.s32 4, %v896
      %v898 = vrot.slane %v724, %v897
      %v899 = vmul.f32 %v893, %v898
      %v900 = vsel %vm787, %v899, -inf
      %901 = vmax.xlane.f32.xlu0 %v900
      %v902 = vpop.xlane.xlu0 %901
      %v903 = vsub.f32 %v899, %v902
      %v904 = vmul.f32 %v903, 1.442695
      %v905 = vpow.pop %v904
      %v906 = vsel %vm787, %v905, 0.0
      %907 = vadd.xlane.f32.xlu0 %v906
      %v908 = vpop.xlane.xlu0 %907
      %v909 = vrcp.pop %v908
      %v910 = vmul.f32 %v905, %v909
      %v911 = vlaneseq
      %v912 = vshrl.u32 %v911, 7
      %v913 = vsub.s32 4, %v912
      %v914 = vrot.slane %v762, %v913
      %v915 = vmul.f32 %v910, %v914
      %v916 = vsel %vm787, %v915, 0.0
      %917 = vadd.xlane.f32.xlu0 %v916
      %v918 = vpop.xlane.xlu0 %917
      %vm919 = vcmask 7168
      %v920 = vsel %vm919, %v806, %v834
      %vm921 = vcmask 15360
      %v922 = vsel %vm921, %v920, %v862
      %vm923 = vcmask 23552
      %v924 = vsel %vm923, %v922, %v890
      %vm925 = vcmask 31744
      %v926 = vsel %vm925, %v924, %v918
      %927 = vset.pattern.permute.xlu0 0
      %928 = vperm.xlu0 %927, %v697
      %v929 = vpop.permute.xlu0 %928
      %v931 = vmul.f32 %v929, %v785
      %vm932 = vcmask 130112
      %v933 = vsel %vm932, %v931, -inf
      %934 = vmax.xlane.f32.xlu0 %v933
      %v935 = vpop.xlane.xlu0 %934
      %v936 = vsub.f32 %v931, %v935
      %v937 = vmul.f32 %v936, 1.442695
      %v938 = vpow.pop %v937
      %940 = vrot.lane.b32.xlu0 %v938, 120
      %v941 = vpop.permute.xlu0 %940
      %v943 = vsel %vm787, %v941, 0.0
      %944 = vadd.xlane.f32.xlu0 %v943
      %v945 = vpop.xlane.xlu0 %944
      %v946 = vrcp.pop %v945
      %v947 = vmul.f32 %v938, %v946
      %v948 = vmul.f32 %v947, %v802
      %950 = vrot.lane.b32.xlu0 %v948, 120
      %v951 = vpop.permute.xlu0 %950
      %v953 = vsel %vm787, %v951, 0.0
      %954 = vadd.xlane.f32.xlu0 %v953
      %v955 = vpop.xlane.xlu0 %954
      %956 = vset.pattern.permute.xlu0 1
      %957 = vperm.xlu0 %956, %v697
      %v958 = vpop.permute.xlu0 %957
      %v960 = vmul.f32 %v958, %v814
      %v961 = vsel %vm932, %v960, -inf
      %962 = vmax.xlane.f32.xlu0 %v961
      %v963 = vpop.xlane.xlu0 %962
      %v964 = vsub.f32 %v960, %v963
      %v965 = vmul.f32 %v964, 1.442695
      %v966 = vpow.pop %v965
      %968 = vrot.lane.b32.xlu0 %v966, 120
      %v969 = vpop.permute.xlu0 %968
      %v971 = vsel %vm787, %v969, 0.0
      %972 = vadd.xlane.f32.xlu0 %v971
      %v973 = vpop.xlane.xlu0 %972
      %v974 = vrcp.pop %v973
      %v975 = vmul.f32 %v966, %v974
      %v976 = vmul.f32 %v975, %v830
      %978 = vrot.lane.b32.xlu0 %v976, 120
      %v979 = vpop.permute.xlu0 %978
      %v981 = vsel %vm787, %v979, 0.0
      %982 = vadd.xlane.f32.xlu0 %v981
      %v983 = vpop.xlane.xlu0 %982
      %984 = vset.pattern.permute.xlu0 2
      %985 = vperm.xlu0 %984, %v697
      %v986 = vpop.permute.xlu0 %985
      %v988 = vmul.f32 %v986, %v842
      %v989 = vsel %vm932, %v988, -inf
      %990 = vmax.xlane.f32.xlu0 %v989
      %v991 = vpop.xlane.xlu0 %990
      %v992 = vsub.f32 %v988, %v991
      %v993 = vmul.f32 %v992, 1.442695
      %v994 = vpow.pop %v993
      %996 = vrot.lane.b32.xlu0 %v994, 120
      %v997 = vpop.permute.xlu0 %996
      %v999 = vsel %vm787, %v997, 0.0
      %1000 = vadd.xlane.f32.xlu0 %v999
      %v1001 = vpop.xlane.xlu0 %1000
      %v1002 = vrcp.pop %v1001
      %v1003 = vmul.f32 %v994, %v1002
      %v1004 = vmul.f32 %v1003, %v858
      %1006 = vrot.lane.b32.xlu0 %v1004, 120
      %v1007 = vpop.permute.xlu0 %1006
      %v1009 = vsel %vm787, %v1007, 0.0
      %1010 = vadd.xlane.f32.xlu0 %v1009
      %v1011 = vpop.xlane.xlu0 %1010
      %1012 = vset.pattern.permute.xlu0 3
      %1013 = vperm.xlu0 %1012, %v697
      %v1014 = vpop.permute.xlu0 %1013
      %v1016 = vmul.f32 %v1014, %v870
      %v1017 = vsel %vm932, %v1016, -inf
      %1018 = vmax.xlane.f32.xlu0 %v1017
      %v1019 = vpop.xlane.xlu0 %1018
      %v1020 = vsub.f32 %v1016, %v1019
      %v1021 = vmul.f32 %v1020, 1.442695
      %v1022 = vpow.pop %v1021
      %1024 = vrot.lane.b32.xlu0 %v1022, 120
      %v1025 = vpop.permute.xlu0 %1024
      %v1027 = vsel %vm787, %v1025, 0.0
      %1028 = vadd.xlane.f32.xlu0 %v1027
      %v1029 = vpop.xlane.xlu0 %1028
      %v1030 = vrcp.pop %v1029
      %v1031 = vmul.f32 %v1022, %v1030
      %v1032 = vmul.f32 %v1031, %v886
      %1034 = vrot.lane.b32.xlu0 %v1032, 120
      %v1035 = vpop.permute.xlu0 %1034
      %v1037 = vsel %vm787, %v1035, 0.0
      %1038 = vadd.xlane.f32.xlu0 %v1037
      %v1039 = vpop.xlane.xlu0 %1038
      %1040 = vset.pattern.permute.xlu0 4
      %1041 = vperm.xlu0 %1040, %v697
      %v1042 = vpop.permute.xlu0 %1041
      %v1044 = vmul.f32 %v1042, %v898
      %v1045 = vsel %vm932, %v1044, -inf
      %1046 = vmax.xlane.f32.xlu0 %v1045
      %v1047 = vpop.xlane.xlu0 %1046
      %v1048 = vsub.f32 %v1044, %v1047
      %v1049 = vmul.f32 %v1048, 1.442695
      %v1050 = vpow.pop %v1049
      %1052 = vrot.lane.b32.xlu0 %v1050, 120
      %v1053 = vpop.permute.xlu0 %1052
      %v1055 = vsel %vm787, %v1053, 0.0
      %1056 = vadd.xlane.f32.xlu0 %v1055
      %v1057 = vpop.xlane.xlu0 %1056
      %v1058 = vrcp.pop %v1057
      %v1059 = vmul.f32 %v1050, %v1058
      %v1060 = vmul.f32 %v1059, %v914
      %1062 = vrot.lane.b32.xlu0 %v1060, 120
      %v1063 = vpop.permute.xlu0 %1062
      %v1065 = vsel %vm787, %v1063, 0.0
      %1066 = vadd.xlane.f32.xlu0 %v1065
      %v1067 = vpop.xlane.xlu0 %1066
      %v1068 = vsel %vm919, %v955, %v983
      %v1069 = vsel %vm921, %v1068, %v1011
      %v1070 = vsel %vm923, %v1069, %v1039
      %v1071 = vsel %vm925, %v1070, %v1067
      %v1072 = vld [vmem:[%s562] sm:$0x1f]
      %v1073 = vld [vmem:[%s565] sm:$0x1]
      %v1075 = vlaneseq
      %v1076 = vshrl.u32 %v1075, 7
      %v1077 = vsub.s32 0, %v1076
      %v1078 = vrot.slane %v1073, %v1077
      %v1081 = vsel %vm614, %v926, 0
      %v1084 = vsel %vm614, %v1071, 0
      %v1087 = vsel %vm621, %v1072, 0
      %1089 = vmatprep.subr.mxu0 0.0
      %1090 = vmatpush1.msra.mxu0 0.0
      %1091 = vmatprep.subr.mxu0 0.0
      %1092 = vmatpush1.msra.mxu0 0.0
      %1093 = vmatprep.subr.mxu0 0.0
      %1094 = vmatpush1.msra.mxu0 0.0
      %1095 = vmatprep.subr.mxu0 0.0
      %1096 = vmatpush1.msra.mxu0 0.0
      %1097 = vmatprep.subr.mxu0 0.0
      %1098 = vmatpush1.msra.mxu0 0.0
      %1099 = vmatprep.subr.mxu0 0.0
      %1100 = vmatpush1.msra.mxu0 0.0
      %1101 = vmatprep.subr.mxu0 0.0
      %1102 = vmatpush1.msra.mxu0 0.0
      %1103 = vmatprep.subr.mxu0 0.0
      %1104 = vmatpush1.msra.mxu0 0.0
      %1105 = vmatprep.subr.mxu0 0.0
      %1106 = vmatpush1.msra.mxu0 0.0
      %1107 = vmatprep.subr.mxu0 0.0
      %1108 = vmatpush1.msra.mxu0 0.0
      %1109 = vmatprep.subr.mxu0 0.0
      %1110 = vmatpush1.msra.mxu0 0.0
      %1111 = vmatprep.subr.mxu0 0.0
      %1112 = vmatpush1.msra.mxu0 0.0
      %1113 = vmatprep.subr.mxu0 0.0
      %1114 = vmatpush1.msra.mxu0 0.0
      %1115 = vmatprep.subr.mxu0 0.0
      %1116 = vmatpush1.msra.mxu0 0.0
      %1117 = vmatprep.subr.mxu0 0.0
      %1118 = vmatpush1.msra.mxu0 0.0
      %1119 = vmatprep.subr.mxu0 0.0
      %1120 = vmatpush1.msra.mxu0 %v1087
      %1121 = vmatprep.subr.mxu0 0.0
      %1122 = vmatpush2.msra.mxu0 0.0
      %1123 = vmatprep.subr.mxu0 0.0
      %1124 = vmatpush2.msra.mxu0 0.0
      %1125 = vmatprep.subr.mxu0 0.0
      %1126 = vmatpush2.msra.mxu0 0.0
      %1127 = vmatprep.subr.mxu0 0.0
      %1128 = vmatpush2.msra.mxu0 0.0
      %1129 = vmatprep.subr.mxu0 0.0
      %1130 = vmatpush2.msra.mxu0 0.0
      %1131 = vmatprep.subr.mxu0 0.0
      %1132 = vmatpush2.msra.mxu0 0.0
      %1133 = vmatprep.subr.mxu0 0.0
      %1134 = vmatpush2.msra.mxu0 0.0
      %1135 = vmatprep.subr.mxu0 0.0
      %1136 = vmatpush2.msra.mxu0 0.0
      %1137 = vmatprep.subr.mxu0 0.0
      %1138 = vmatpush2.msra.mxu0 0.0
      %1139 = vmatprep.subr.mxu0 0.0
      %1140 = vmatpush2.msra.mxu0 0.0
      %1141 = vmatprep.subr.mxu0 0.0
      %1142 = vmatpush2.msra.mxu0 0.0
      %1143 = vmatprep.subr.mxu0 0.0
      %1144 = vmatpush2.msra.mxu0 0.0
      %1145 = vmatprep.subr.mxu0 0.0
      %1146 = vmatpush2.msra.mxu0 0.0
      %1147 = vmatprep.subr.mxu0 0.0
      %1148 = vmatpush2.msra.mxu0 0.0
      %1149 = vmatprep.subr.mxu0 0.0
      %1150 = vmatpush2.msra.mxu0 0.0
      %1151 = vmatprep.subr.mxu0 0.0
      %1152 = vmatpush2.msra.mxu0 0.0
      %1153 = vmatprep.mubr.f32.mxu0 0.0
      %1154 = vmatmul.mubr.f32.gmra.mxu0 %v1081
      %v1155 = vpop.f32.mrf.mxu0
      %v1156 = vadd.f32 %v1078, %v1155
      %v1157 = vpop.f32.mrf.mxu0
      %1158 = vmatprep.mubr.f32.mxu0 0.0
      %1159 = vmatmul.mubr.f32.gmra.mxu0 %v1084
      %v1160 = vpop.f32.mrf.mxu0
      %v1161 = vadd.f32 %v1078, %v1160
      %v1162 = vpop.f32.mrf.mxu0
      %1163 = vdwg.mxu0
      %v1164 = vadd.f32 %v604, %v1156
      %v1165 = vadd.f32 %v605, %v1161
      %v1166 = vld [vmem:[%s568] sm:$0x1]
      %v1167 = vld [vmem:[%s571] sm:$0x1]
      %v1168 = vsel %vm614, %v1164, 0.0
      %1169 = vadd.xlane.f32.xlu0 %v1168
      %v1170 = vpop.xlane.xlu0 %1169
      %v1171 = vsel %vm614, %v1165, 0.0
      %1172 = vadd.xlane.f32.xlu0 %v1171
      %v1173 = vpop.xlane.xlu0 %1172
      %v1174 = vrcp.pop 5.0
      %v1175 = vmul.f32 %v1170, %v1174
      %v1176 = vmul.f32 %v1173, %v1174
      %v1177 = vsub.f32 %v1164, %v1175
      %v1178 = vsub.f32 %v1165, %v1176
      %v1179 = vmul.f32 %v1177, %v1177
      %v1180 = vmul.f32 %v1178, %v1178
      %v1181 = vsel %vm614, %v1179, 0.0
      %1182 = vadd.xlane.f32.xlu0 %v1181
      %v1183 = vpop.xlane.xlu0 %1182
      %v1184 = vsel %vm614, %v1180, 0.0
      %1185 = vadd.xlane.f32.xlu0 %v1184
      %v1186 = vpop.xlane.xlu0 %1185
      %v1187 = vmul.f32 %v1183, %v1174
      %v1188 = vmul.f32 %v1186, %v1174
      %v1189 = vadd.f32 %v1187, 1e-05
      %v1190 = vadd.f32 %v1188, 1e-05
      %v1191 = vrsqrt.pop %v1189
      %v1192 = vrsqrt.pop %v1190
      %v1193 = vmul.f32 %v1177, %v1191
      %v1194 = vmul.f32 %v1178, %v1192
      %v1196 = vlaneseq
      %v1197 = vshrl.u32 %v1196, 7
      %v1198 = vsub.s32 0, %v1197
      %v1199 = vrot.slane %v1166, %v1198
      %v1201 = vmul.f32 %v1193, %v1199
      %v1202 = vmul.f32 %v1194, %v1199
      %v1204 = vlaneseq
      %v1205 = vshrl.u32 %v1204, 7
      %v1206 = vsub.s32 0, %v1205
      %v1207 = vrot.slane %v1167, %v1206
      %v1209 = vadd.f32 %v1201, %v1207
      %v1210 = vadd.f32 %v1202, %v1207
      %v1211 = vld [vmem:[%s576] sm:$0x1f]
      %v1212 = vld [vmem:[%s576 + $0x8] sm:$0x1f]
      %v1213 = vld [vmem:[%s576 + $0x10] sm:$0x1f]
      %v1214 = vld [vmem:[%s576 + $0x18] sm:$0x1f]
      %v1215 = vld [vmem:[%s576 + $0x20] sm:$0x1f]
      %v1216 = vld [vmem:[%s576 + $0x28] sm:$0x1f]
      %v1217 = vld [vmem:[%s576 + $0x30] sm:$0x1f]
      %v1218 = vld [vmem:[%s576 + $0x38] sm:$0x1f]
      %v1219 = vld [vmem:[%s576 + $0x40] sm:$0x1f]
      %v1220 = vld [vmem:[%s576 + $0x48] sm:$0x1f]
      %v1221 = vld [vmem:[%s576 + $0x50] sm:$0x1f]
      %v1222 = vld [vmem:[%s576 + $0x58] sm:$0x1f]
      %v1223 = vld [vmem:[%s576 + $0x60] sm:$0x1f]
      %v1224 = vld [vmem:[%s576 + $0x68] sm:$0x1f]
      %v1225 = vld [vmem:[%s576 + $0x70] sm:$0x1f]
      %v1226 = vld [vmem:[%s576 + $0x78] sm:$0x1f]
      %v1227 = vld [vmem:[%s580] sm:$0xff]
      %v1228 = vld [vmem:[%s580 + $0x8] sm:$0xff]
      %v1231 = vlaneseq
      %v1232 = vshrl.u32 %v1231, 7
      %v1233 = vsub.s32 0, %v1232
      %v1234 = vrot.slane %v1227, %v1233
      %v1235 = vlaneseq
      %v1236 = vshrl.u32 %v1235, 7
      %v1237 = vsub.s32 1, %v1236
      %v1238 = vrot.slane %v1227, %v1237
      %v1239 = vlaneseq
      %v1240 = vshrl.u32 %v1239, 7
      %v1241 = vsub.s32 2, %v1240
      %v1242 = vrot.slane %v1227, %v1241
      %v1243 = vlaneseq
      %v1244 = vshrl.u32 %v1243, 7
      %v1245 = vsub.s32 3, %v1244
      %v1246 = vrot.slane %v1227, %v1245
      %v1247 = vlaneseq
      %v1248 = vshrl.u32 %v1247, 7
      %v1249 = vsub.s32 4, %v1248
      %v1250 = vrot.slane %v1227, %v1249
      %v1251 = vlaneseq
      %v1252 = vshrl.u32 %v1251, 7
      %v1253 = vsub.s32 5, %v1252
      %v1254 = vrot.slane %v1227, %v1253
      %v1255 = vlaneseq
      %v1256 = vshrl.u32 %v1255, 7
      %v1257 = vsub.s32 6, %v1256
      %v1258 = vrot.slane %v1227, %v1257
      %v1259 = vlaneseq
      %v1260 = vshrl.u32 %v1259, 7
      %v1261 = vsub.s32 7, %v1260
      %v1262 = vrot.slane %v1227, %v1261
      %v1263 = vlaneseq
      %v1264 = vshrl.u32 %v1263, 7
      %v1265 = vsub.s32 0, %v1264
      %v1266 = vrot.slane %v1228, %v1265
      %v1267 = vlaneseq
      %v1268 = vshrl.u32 %v1267, 7
      %v1269 = vsub.s32 1, %v1268
      %v1270 = vrot.slane %v1228, %v1269
      %v1271 = vlaneseq
      %v1272 = vshrl.u32 %v1271, 7
      %v1273 = vsub.s32 2, %v1272
      %v1274 = vrot.slane %v1228, %v1273
      %v1275 = vlaneseq
      %v1276 = vshrl.u32 %v1275, 7
      %v1277 = vsub.s32 3, %v1276
      %v1278 = vrot.slane %v1228, %v1277
      %v1279 = vlaneseq
      %v1280 = vshrl.u32 %v1279, 7
      %v1281 = vsub.s32 4, %v1280
      %v1282 = vrot.slane %v1228, %v1281
      %v1283 = vlaneseq
      %v1284 = vshrl.u32 %v1283, 7
      %v1285 = vsub.s32 5, %v1284
      %v1286 = vrot.slane %v1228, %v1285
      %v1287 = vlaneseq
      %v1288 = vshrl.u32 %v1287, 7
      %v1289 = vsub.s32 6, %v1288
      %v1290 = vrot.slane %v1228, %v1289
      %v1291 = vlaneseq
      %v1292 = vshrl.u32 %v1291, 7
      %v1293 = vsub.s32 7, %v1292
      %v1294 = vrot.slane %v1228, %v1293
      %v1312 = vsel %vm614, %v1209, 0
      %v1315 = vsel %vm614, %v1210, 0
      %v1318 = vsel %vm621, %v1211, 0
      %v1321 = vsel %vm621, %v1212, 0
      %v1324 = vsel %vm621, %v1213, 0
      %v1327 = vsel %vm621, %v1214, 0
      %v1330 = vsel %vm621, %v1215, 0
      %v1333 = vsel %vm621, %v1216, 0
      %v1336 = vsel %vm621, %v1217, 0
      %v1339 = vsel %vm621, %v1218, 0
      %v1342 = vsel %vm621, %v1219, 0
      %v1345 = vsel %vm621, %v1220, 0
      %v1348 = vsel %vm621, %v1221, 0
      %v1351 = vsel %vm621, %v1222, 0
      %v1354 = vsel %vm621, %v1223, 0
      %v1357 = vsel %vm621, %v1224, 0
      %v1360 = vsel %vm621, %v1225, 0
      %v1363 = vsel %vm621, %v1226, 0
      %1365 = vmatprep.subr.mxu0 0.0
      %1366 = vmatpush1.msra.mxu0 0.0
      %1367 = vmatprep.subr.mxu0 0.0
      %1368 = vmatpush1.msra.mxu0 0.0
      %1369 = vmatprep.subr.mxu0 0.0
      %1370 = vmatpush1.msra.mxu0 0.0
      %1371 = vmatprep.subr.mxu0 0.0
      %1372 = vmatpush1.msra.mxu0 0.0
      %1373 = vmatprep.subr.mxu0 0.0
      %1374 = vmatpush1.msra.mxu0 0.0
      %1375 = vmatprep.subr.mxu0 0.0
      %1376 = vmatpush1.msra.mxu0 0.0
      %1377 = vmatprep.subr.mxu0 0.0
      %1378 = vmatpush1.msra.mxu0 0.0
      %1379 = vmatprep.subr.mxu0 0.0
      %1380 = vmatpush1.msra.mxu0 0.0
      %1381 = vmatprep.subr.mxu0 0.0
      %1382 = vmatpush1.msra.mxu0 0.0
      %1383 = vmatprep.subr.mxu0 0.0
      %1384 = vmatpush1.msra.mxu0 0.0
      %1385 = vmatprep.subr.mxu0 0.0
      %1386 = vmatpush1.msra.mxu0 0.0
      %1387 = vmatprep.subr.mxu0 0.0
      %1388 = vmatpush1.msra.mxu0 0.0
      %1389 = vmatprep.subr.mxu0 0.0
      %1390 = vmatpush1.msra.mxu0 0.0
      %1391 = vmatprep.subr.mxu0 0.0
      %1392 = vmatpush1.msra.mxu0 0.0
      %1393 = vmatprep.subr.mxu0 0.0
      %1394 = vmatpush1.msra.mxu0 0.0
      %1395 = vmatprep.subr.mxu0 %v1321
      %1396 = vmatpush1.msra.mxu0 %v1318
      %1397 = vmatprep.subr.mxu0 0.0
      %1398 = vmatpush2.msra.mxu0 0.0
      %1399 = vmatprep.subr.mxu0 0.0
      %1400 = vmatpush2.msra.mxu0 0.0
      %1401 = vmatprep.subr.mxu0 0.0
      %1402 = vmatpush2.msra.mxu0 0.0
      %1403 = vmatprep.subr.mxu0 0.0
      %1404 = vmatpush2.msra.mxu0 0.0
      %1405 = vmatprep.subr.mxu0 0.0
      %1406 = vmatpush2.msra.mxu0 0.0
      %1407 = vmatprep.subr.mxu0 0.0
      %1408 = vmatpush2.msra.mxu0 0.0
      %1409 = vmatprep.subr.mxu0 0.0
      %1410 = vmatpush2.msra.mxu0 0.0
      %1411 = vmatprep.subr.mxu0 0.0
      %1412 = vmatpush2.msra.mxu0 0.0
      %1413 = vmatprep.subr.mxu0 0.0
      %1414 = vmatpush2.msra.mxu0 0.0
      %1415 = vmatprep.subr.mxu0 0.0
      %1416 = vmatpush2.msra.mxu0 0.0
      %1417 = vmatprep.subr.mxu0 0.0
      %1418 = vmatpush2.msra.mxu0 0.0
      %1419 = vmatprep.subr.mxu0 0.0
      %1420 = vmatpush2.msra.mxu0 0.0
      %1421 = vmatprep.subr.mxu0 0.0
      %1422 = vmatpush2.msra.mxu0 0.0
      %1423 = vmatprep.subr.mxu0 0.0
      %1424 = vmatpush2.msra.mxu0 0.0
      %1425 = vmatprep.subr.mxu0 0.0
      %1426 = vmatpush2.msra.mxu0 0.0
      %1427 = vmatprep.subr.mxu0 0.0
      %1428 = vmatpush2.msra.mxu0 0.0
      %1429 = vmatprep.mubr.f32.mxu0 0.0
      %1430 = vmatmul.mubr.f32.gmra.mxu0 %v1312
      %v1431 = vpop.f32.mrf.mxu0
      %v1432 = vadd.f32 %v1234, %v1431
      %v1433 = vpop.f32.mrf.mxu0
      %v1434 = vadd.f32 %v1238, %v1433
      %1435 = vmatprep.mubr.f32.mxu0 0.0
      %1436 = vmatmul.mubr.f32.gmra.mxu0 %v1315
      %v1437 = vpop.f32.mrf.mxu0
      %v1438 = vadd.f32 %v1234, %v1437
      %v1439 = vpop.f32.mrf.mxu0
      %v1440 = vadd.f32 %v1238, %v1439
      %1441 = vdwg.mxu0
      %1442 = vmatprep.subr.mxu0 0.0
      %1443 = vmatpush1.msra.mxu0 0.0
      %1444 = vmatprep.subr.mxu0 0.0
      %1445 = vmatpush1.msra.mxu0 0.0
      %1446 = vmatprep.subr.mxu0 0.0
      %1447 = vmatpush1.msra.mxu0 0.0
      %1448 = vmatprep.subr.mxu0 0.0
      %1449 = vmatpush1.msra.mxu0 0.0
      %1450 = vmatprep.subr.mxu0 0.0
      %1451 = vmatpush1.msra.mxu0 0.0
      %1452 = vmatprep.subr.mxu0 0.0
      %1453 = vmatpush1.msra.mxu0 0.0
      %1454 = vmatprep.subr.mxu0 0.0
      %1455 = vmatpush1.msra.mxu0 0.0
      %1456 = vmatprep.subr.mxu0 0.0
      %1457 = vmatpush1.msra.mxu0 0.0
      %1458 = vmatprep.subr.mxu0 0.0
      %1459 = vmatpush1.msra.mxu0 0.0
      %1460 = vmatprep.subr.mxu0 0.0
      %1461 = vmatpush1.msra.mxu0 0.0
      %1462 = vmatprep.subr.mxu0 0.0
      %1463 = vmatpush1.msra.mxu0 0.0
      %1464 = vmatprep.subr.mxu0 0.0
      %1465 = vmatpush1.msra.mxu0 0.0
      %1466 = vmatprep.subr.mxu0 0.0
      %1467 = vmatpush1.msra.mxu0 0.0
      %1468 = vmatprep.subr.mxu0 0.0
      %1469 = vmatpush1.msra.mxu0 0.0
      %1470 = vmatprep.subr.mxu0 0.0
      %1471 = vmatpush1.msra.mxu0 0.0
      %1472 = vmatprep.subr.mxu0 %v1327
      %1473 = vmatpush1.msra.mxu0 %v1324
      %1474 = vmatprep.subr.mxu0 0.0
      %1475 = vmatpush2.msra.mxu0 0.0
      %1476 = vmatprep.subr.mxu0 0.0
      %1477 = vmatpush2.msra.mxu0 0.0
      %1478 = vmatprep.subr.mxu0 0.0
      %1479 = vmatpush2.msra.mxu0 0.0
      %1480 = vmatprep.subr.mxu0 0.0
      %1481 = vmatpush2.msra.mxu0 0.0
      %1482 = vmatprep.subr.mxu0 0.0
      %1483 = vmatpush2.msra.mxu0 0.0
      %1484 = vmatprep.subr.mxu0 0.0
      %1485 = vmatpush2.msra.mxu0 0.0
      %1486 = vmatprep.subr.mxu0 0.0
      %1487 = vmatpush2.msra.mxu0 0.0
      %1488 = vmatprep.subr.mxu0 0.0
      %1489 = vmatpush2.msra.mxu0 0.0
      %1490 = vmatprep.subr.mxu0 0.0
      %1491 = vmatpush2.msra.mxu0 0.0
      %1492 = vmatprep.subr.mxu0 0.0
      %1493 = vmatpush2.msra.mxu0 0.0
      %1494 = vmatprep.subr.mxu0 0.0
      %1495 = vmatpush2.msra.mxu0 0.0
      %1496 = vmatprep.subr.mxu0 0.0
      %1497 = vmatpush2.msra.mxu0 0.0
      %1498 = vmatprep.subr.mxu0 0.0
      %1499 = vmatpush2.msra.mxu0 0.0
      %1500 = vmatprep.subr.mxu0 0.0
      %1501 = vmatpush2.msra.mxu0 0.0
      %1502 = vmatprep.subr.mxu0 0.0
      %1503 = vmatpush2.msra.mxu0 0.0
      %1504 = vmatprep.subr.mxu0 0.0
      %1505 = vmatpush2.msra.mxu0 0.0
      %1506 = vmatprep.mubr.f32.mxu0 0.0
      %1507 = vmatmul.mubr.f32.gmra.mxu0 %v1312
      %v1508 = vpop.f32.mrf.mxu0
      %v1509 = vadd.f32 %v1242, %v1508
      %v1510 = vpop.f32.mrf.mxu0
      %v1511 = vadd.f32 %v1246, %v1510
      %1512 = vmatprep.mubr.f32.mxu0 0.0
      %1513 = vmatmul.mubr.f32.gmra.mxu0 %v1315
      %v1514 = vpop.f32.mrf.mxu0
      %v1515 = vadd.f32 %v1242, %v1514
      %v1516 = vpop.f32.mrf.mxu0
      %v1517 = vadd.f32 %v1246, %v1516
      %1518 = vdwg.mxu0
      %1519 = vmatprep.subr.mxu0 0.0
      %1520 = vmatpush1.msra.mxu0 0.0
      %1521 = vmatprep.subr.mxu0 0.0
      %1522 = vmatpush1.msra.mxu0 0.0
      %1523 = vmatprep.subr.mxu0 0.0
      %1524 = vmatpush1.msra.mxu0 0.0
      %1525 = vmatprep.subr.mxu0 0.0
      %1526 = vmatpush1.msra.mxu0 0.0
      %1527 = vmatprep.subr.mxu0 0.0
      %1528 = vmatpush1.msra.mxu0 0.0
      %1529 = vmatprep.subr.mxu0 0.0
      %1530 = vmatpush1.msra.mxu0 0.0
      %1531 = vmatprep.subr.mxu0 0.0
      %1532 = vmatpush1.msra.mxu0 0.0
      %1533 = vmatprep.subr.mxu0 0.0
      %1534 = vmatpush1.msra.mxu0 0.0
      %1535 = vmatprep.subr.mxu0 0.0
      %1536 = vmatpush1.msra.mxu0 0.0
      %1537 = vmatprep.subr.mxu0 0.0
      %1538 = vmatpush1.msra.mxu0 0.0
      %1539 = vmatprep.subr.mxu0 0.0
      %1540 = vmatpush1.msra.mxu0 0.0
      %1541 = vmatprep.subr.mxu0 0.0
      %1542 = vmatpush1.msra.mxu0 0.0
      %1543 = vmatprep.subr.mxu0 0.0
      %1544 = vmatpush1.msra.mxu0 0.0
      %1545 = vmatprep.subr.mxu0 0.0
      %1546 = vmatpush1.msra.mxu0 0.0
      %1547 = vmatprep.subr.mxu0 0.0
      %1548 = vmatpush1.msra.mxu0 0.0
      %1549 = vmatprep.subr.mxu0 %v1333
      %1550 = vmatpush1.msra.mxu0 %v1330
      %1551 = vmatprep.subr.mxu0 0.0
      %1552 = vmatpush2.msra.mxu0 0.0
      %1553 = vmatprep.subr.mxu0 0.0
      %1554 = vmatpush2.msra.mxu0 0.0
      %1555 = vmatprep.subr.mxu0 0.0
      %1556 = vmatpush2.msra.mxu0 0.0
      %1557 = vmatprep.subr.mxu0 0.0
      %1558 = vmatpush2.msra.mxu0 0.0
      %1559 = vmatprep.subr.mxu0 0.0
      %1560 = vmatpush2.msra.mxu0 0.0
      %1561 = vmatprep.subr.mxu0 0.0
      %1562 = vmatpush2.msra.mxu0 0.0
      %1563 = vmatprep.subr.mxu0 0.0
      %1564 = vmatpush2.msra.mxu0 0.0
      %1565 = vmatprep.subr.mxu0 0.0
      %1566 = vmatpush2.msra.mxu0 0.0
      %1567 = vmatprep.subr.mxu0 0.0
      %1568 = vmatpush2.msra.mxu0 0.0
      %1569 = vmatprep.subr.mxu0 0.0
      %1570 = vmatpush2.msra.mxu0 0.0
      %1571 = vmatprep.subr.mxu0 0.0
      %1572 = vmatpush2.msra.mxu0 0.0
      %1573 = vmatprep.subr.mxu0 0.0
      %1574 = vmatpush2.msra.mxu0 0.0
      %1575 = vmatprep.subr.mxu0 0.0
      %1576 = vmatpush2.msra.mxu0 0.0
      %1577 = vmatprep.subr.mxu0 0.0
      %1578 = vmatpush2.msra.mxu0 0.0
      %1579 = vmatprep.subr.mxu0 0.0
      %1580 = vmatpush2.msra.mxu0 0.0
      %1581 = vmatprep.subr.mxu0 0.0
      %1582 = vmatpush2.msra.mxu0 0.0
      %1583 = vmatprep.mubr.f32.mxu0 0.0
      %1584 = vmatmul.mubr.f32.gmra.mxu0 %v1312
      %v1585 = vpop.f32.mrf.mxu0
      %v1586 = vadd.f32 %v1250, %v1585
      %v1587 = vpop.f32.mrf.mxu0
      %v1588 = vadd.f32 %v1254, %v1587
      %1589 = vmatprep.mubr.f32.mxu0 0.0
      %1590 = vmatmul.mubr.f32.gmra.mxu0 %v1315
      %v1591 = vpop.f32.mrf.mxu0
      %v1592 = vadd.f32 %v1250, %v1591
      %v1593 = vpop.f32.mrf.mxu0
      %v1594 = vadd.f32 %v1254, %v1593
      %1595 = vdwg.mxu0
      %1596 = vmatprep.subr.mxu0 0.0
      %1597 = vmatpush1.msra.mxu0 0.0
      %1598 = vmatprep.subr.mxu0 0.0
      %1599 = vmatpush1.msra.mxu0 0.0
      %1600 = vmatprep.subr.mxu0 0.0
      %1601 = vmatpush1.msra.mxu0 0.0
      %1602 = vmatprep.subr.mxu0 0.0
      %1603 = vmatpush1.msra.mxu0 0.0
      %1604 = vmatprep.subr.mxu0 0.0
      %1605 = vmatpush1.msra.mxu0 0.0
      %1606 = vmatprep.subr.mxu0 0.0
      %1607 = vmatpush1.msra.mxu0 0.0
      %1608 = vmatprep.subr.mxu0 0.0
      %1609 = vmatpush1.msra.mxu0 0.0
      %1610 = vmatprep.subr.mxu0 0.0
      %1611 = vmatpush1.msra.mxu0 0.0
      %1612 = vmatprep.subr.mxu0 0.0
      %1613 = vmatpush1.msra.mxu0 0.0
      %1614 = vmatprep.subr.mxu0 0.0
      %1615 = vmatpush1.msra.mxu0 0.0
      %1616 = vmatprep.subr.mxu0 0.0
      %1617 = vmatpush1.msra.mxu0 0.0
      %1618 = vmatprep.subr.mxu0 0.0
      %1619 = vmatpush1.msra.mxu0 0.0
      %1620 = vmatprep.subr.mxu0 0.0
      %1621 = vmatpush1.msra.mxu0 0.0
      %1622 = vmatprep.subr.mxu0 0.0
      %1623 = vmatpush1.msra.mxu0 0.0
      %1624 = vmatprep.subr.mxu0 0.0
      %1625 = vmatpush1.msra.mxu0 0.0
      %1626 = vmatprep.subr.mxu0 %v1339
      %1627 = vmatpush1.msra.mxu0 %v1336
      %1628 = vmatprep.subr.mxu0 0.0
      %1629 = vmatpush2.msra.mxu0 0.0
      %1630 = vmatprep.subr.mxu0 0.0
      %1631 = vmatpush2.msra.mxu0 0.0
      %1632 = vmatprep.subr.mxu0 0.0
      %1633 = vmatpush2.msra.mxu0 0.0
      %1634 = vmatprep.subr.mxu0 0.0
      %1635 = vmatpush2.msra.mxu0 0.0
      %1636 = vmatprep.subr.mxu0 0.0
      %1637 = vmatpush2.msra.mxu0 0.0
      %1638 = vmatprep.subr.mxu0 0.0
      %1639 = vmatpush2.msra.mxu0 0.0
      %1640 = vmatprep.subr.mxu0 0.0
      %1641 = vmatpush2.msra.mxu0 0.0
      %1642 = vmatprep.subr.mxu0 0.0
      %1643 = vmatpush2.msra.mxu0 0.0
      %1644 = vmatprep.subr.mxu0 0.0
      %1645 = vmatpush2.msra.mxu0 0.0
      %1646 = vmatprep.subr.mxu0 0.0
      %1647 = vmatpush2.msra.mxu0 0.0
      %1648 = vmatprep.subr.mxu0 0.0
      %1649 = vmatpush2.msra.mxu0 0.0
      %1650 = vmatprep.subr.mxu0 0.0
      %1651 = vmatpush2.msra.mxu0 0.0
      %1652 = vmatprep.subr.mxu0 0.0
      %1653 = vmatpush2.msra.mxu0 0.0
      %1654 = vmatprep.subr.mxu0 0.0
      %1655 = vmatpush2.msra.mxu0 0.0
      %1656 = vmatprep.subr.mxu0 0.0
      %1657 = vmatpush2.msra.mxu0 0.0
      %1658 = vmatprep.subr.mxu0 0.0
      %1659 = vmatpush2.msra.mxu0 0.0
      %1660 = vmatprep.mubr.f32.mxu0 0.0
      %1661 = vmatmul.mubr.f32.gmra.mxu0 %v1312
      %v1662 = vpop.f32.mrf.mxu0
      %v1663 = vadd.f32 %v1258, %v1662
      %v1664 = vpop.f32.mrf.mxu0
      %v1665 = vadd.f32 %v1262, %v1664
      %1666 = vmatprep.mubr.f32.mxu0 0.0
      %1667 = vmatmul.mubr.f32.gmra.mxu0 %v1315
      %v1668 = vpop.f32.mrf.mxu0
      %v1669 = vadd.f32 %v1258, %v1668
      %v1670 = vpop.f32.mrf.mxu0
      %v1671 = vadd.f32 %v1262, %v1670
      %1672 = vdwg.mxu0
      %1673 = vmatprep.subr.mxu0 0.0
      %1674 = vmatpush1.msra.mxu0 0.0
      %1675 = vmatprep.subr.mxu0 0.0
      %1676 = vmatpush1.msra.mxu0 0.0
      %1677 = vmatprep.subr.mxu0 0.0
      %1678 = vmatpush1.msra.mxu0 0.0
      %1679 = vmatprep.subr.mxu0 0.0
      %1680 = vmatpush1.msra.mxu0 0.0
      %1681 = vmatprep.subr.mxu0 0.0
      %1682 = vmatpush1.msra.mxu0 0.0
      %1683 = vmatprep.subr.mxu0 0.0
      %1684 = vmatpush1.msra.mxu0 0.0
      %1685 = vmatprep.subr.mxu0 0.0
      %1686 = vmatpush1.msra.mxu0 0.0
      %1687 = vmatprep.subr.mxu0 0.0
      %1688 = vmatpush1.msra.mxu0 0.0
      %1689 = vmatprep.subr.mxu0 0.0
      %1690 = vmatpush1.msra.mxu0 0.0
      %1691 = vmatprep.subr.mxu0 0.0
      %1692 = vmatpush1.msra.mxu0 0.0
      %1693 = vmatprep.subr.mxu0 0.0
      %1694 = vmatpush1.msra.mxu0 0.0
      %1695 = vmatprep.subr.mxu0 0.0
      %1696 = vmatpush1.msra.mxu0 0.0
      %1697 = vmatprep.subr.mxu0 0.0
      %1698 = vmatpush1.msra.mxu0 0.0
      %1699 = vmatprep.subr.mxu0 0.0
      %1700 = vmatpush1.msra.mxu0 0.0
      %1701 = vmatprep.subr.mxu0 0.0
      %1702 = vmatpush1.msra.mxu0 0.0
      %1703 = vmatprep.subr.mxu0 %v1345
      %1704 = vmatpush1.msra.mxu0 %v1342
      %1705 = vmatprep.subr.mxu0 0.0
      %1706 = vmatpush2.msra.mxu0 0.0
      %1707 = vmatprep.subr.mxu0 0.0
      %1708 = vmatpush2.msra.mxu0 0.0
      %1709 = vmatprep.subr.mxu0 0.0
      %1710 = vmatpush2.msra.mxu0 0.0
      %1711 = vmatprep.subr.mxu0 0.0
      %1712 = vmatpush2.msra.mxu0 0.0
      %1713 = vmatprep.subr.mxu0 0.0
      %1714 = vmatpush2.msra.mxu0 0.0
      %1715 = vmatprep.subr.mxu0 0.0
      %1716 = vmatpush2.msra.mxu0 0.0
      %1717 = vmatprep.subr.mxu0 0.0
      %1718 = vmatpush2.msra.mxu0 0.0
      %1719 = vmatprep.subr.mxu0 0.0
      %1720 = vmatpush2.msra.mxu0 0.0
      %1721 = vmatprep.subr.mxu0 0.0
      %1722 = vmatpush2.msra.mxu0 0.0
      %1723 = vmatprep.subr.mxu0 0.0
      %1724 = vmatpush2.msra.mxu0 0.0
      %1725 = vmatprep.subr.mxu0 0.0
      %1726 = vmatpush2.msra.mxu0 0.0
      %1727 = vmatprep.subr.mxu0 0.0
      %1728 = vmatpush2.msra.mxu0 0.0
      %1729 = vmatprep.subr.mxu0 0.0
      %1730 = vmatpush2.msra.mxu0 0.0
      %1731 = vmatprep.subr.mxu0 0.0
      %1732 = vmatpush2.msra.mxu0 0.0
      %1733 = vmatprep.subr.mxu0 0.0
      %1734 = vmatpush2.msra.mxu0 0.0
      %1735 = vmatprep.subr.mxu0 0.0
      %1736 = vmatpush2.msra.mxu0 0.0
      %1737 = vmatprep.mubr.f32.mxu0 0.0
      %1738 = vmatmul.mubr.f32.gmra.mxu0 %v1312
      %v1739 = vpop.f32.mrf.mxu0
      %v1740 = vadd.f32 %v1266, %v1739
      %v1741 = vpop.f32.mrf.mxu0
      %v1742 = vadd.f32 %v1270, %v1741
      %1743 = vmatprep.mubr.f32.mxu0 0.0
      %1744 = vmatmul.mubr.f32.gmra.mxu0 %v1315
      %v1745 = vpop.f32.mrf.mxu0
      %v1746 = vadd.f32 %v1266, %v1745
      %v1747 = vpop.f32.mrf.mxu0
      %v1748 = vadd.f32 %v1270, %v1747
      %1749 = vdwg.mxu0
      %1750 = vmatprep.subr.mxu0 0.0
      %1751 = vmatpush1.msra.mxu0 0.0
      %1752 = vmatprep.subr.mxu0 0.0
      %1753 = vmatpush1.msra.mxu0 0.0
      %1754 = vmatprep.subr.mxu0 0.0
      %1755 = vmatpush1.msra.mxu0 0.0
      %1756 = vmatprep.subr.mxu0 0.0
      %1757 = vmatpush1.msra.mxu0 0.0
      %1758 = vmatprep.subr.mxu0 0.0
      %1759 = vmatpush1.msra.mxu0 0.0
      %1760 = vmatprep.subr.mxu0 0.0
      %1761 = vmatpush1.msra.mxu0 0.0
      %1762 = vmatprep.subr.mxu0 0.0
      %1763 = vmatpush1.msra.mxu0 0.0
      %1764 = vmatprep.subr.mxu0 0.0
      %1765 = vmatpush1.msra.mxu0 0.0
      %1766 = vmatprep.subr.mxu0 0.0
      %1767 = vmatpush1.msra.mxu0 0.0
      %1768 = vmatprep.subr.mxu0 0.0
      %1769 = vmatpush1.msra.mxu0 0.0
      %1770 = vmatprep.subr.mxu0 0.0
      %1771 = vmatpush1.msra.mxu0 0.0
      %1772 = vmatprep.subr.mxu0 0.0
      %1773 = vmatpush1.msra.mxu0 0.0
      %1774 = vmatprep.subr.mxu0 0.0
      %1775 = vmatpush1.msra.mxu0 0.0
      %1776 = vmatprep.subr.mxu0 0.0
      %1777 = vmatpush1.msra.mxu0 0.0
      %1778 = vmatprep.subr.mxu0 0.0
      %1779 = vmatpush1.msra.mxu0 0.0
      %1780 = vmatprep.subr.mxu0 %v1351
      %1781 = vmatpush1.msra.mxu0 %v1348
      %1782 = vmatprep.subr.mxu0 0.0
      %1783 = vmatpush2.msra.mxu0 0.0
      %1784 = vmatprep.subr.mxu0 0.0
      %1785 = vmatpush2.msra.mxu0 0.0
      %1786 = vmatprep.subr.mxu0 0.0
      %1787 = vmatpush2.msra.mxu0 0.0
      %1788 = vmatprep.subr.mxu0 0.0
      %1789 = vmatpush2.msra.mxu0 0.0
      %1790 = vmatprep.subr.mxu0 0.0
      %1791 = vmatpush2.msra.mxu0 0.0
      %1792 = vmatprep.subr.mxu0 0.0
      %1793 = vmatpush2.msra.mxu0 0.0
      %1794 = vmatprep.subr.mxu0 0.0
      %1795 = vmatpush2.msra.mxu0 0.0
      %1796 = vmatprep.subr.mxu0 0.0
      %1797 = vmatpush2.msra.mxu0 0.0
      %1798 = vmatprep.subr.mxu0 0.0
      %1799 = vmatpush2.msra.mxu0 0.0
      %1800 = vmatprep.subr.mxu0 0.0
      %1801 = vmatpush2.msra.mxu0 0.0
      %1802 = vmatprep.subr.mxu0 0.0
      %1803 = vmatpush2.msra.mxu0 0.0
      %1804 = vmatprep.subr.mxu0 0.0
      %1805 = vmatpush2.msra.mxu0 0.0
      %1806 = vmatprep.subr.mxu0 0.0
      %1807 = vmatpush2.msra.mxu0 0.0
      %1808 = vmatprep.subr.mxu0 0.0
      %1809 = vmatpush2.msra.mxu0 0.0
      %1810 = vmatprep.subr.mxu0 0.0
      %1811 = vmatpush2.msra.mxu0 0.0
      %1812 = vmatprep.subr.mxu0 0.0
      %1813 = vmatpush2.msra.mxu0 0.0
      %1814 = vmatprep.mubr.f32.mxu0 0.0
      %1815 = vmatmul.mubr.f32.gmra.mxu0 %v1312
      %v1816 = vpop.f32.mrf.mxu0
      %v1817 = vadd.f32 %v1274, %v1816
      %v1818 = vpop.f32.mrf.mxu0
      %v1819 = vadd.f32 %v1278, %v1818
      %1820 = vmatprep.mubr.f32.mxu0 0.0
      %1821 = vmatmul.mubr.f32.gmra.mxu0 %v1315
      %v1822 = vpop.f32.mrf.mxu0
      %v1823 = vadd.f32 %v1274, %v1822
      %v1824 = vpop.f32.mrf.mxu0
      %v1825 = vadd.f32 %v1278, %v1824
      %1826 = vdwg.mxu0
      %1827 = vmatprep.subr.mxu0 0.0
      %1828 = vmatpush1.msra.mxu0 0.0
      %1829 = vmatprep.subr.mxu0 0.0
      %1830 = vmatpush1.msra.mxu0 0.0
      %1831 = vmatprep.subr.mxu0 0.0
      %1832 = vmatpush1.msra.mxu0 0.0
      %1833 = vmatprep.subr.mxu0 0.0
      %1834 = vmatpush1.msra.mxu0 0.0
      %1835 = vmatprep.subr.mxu0 0.0
      %1836 = vmatpush1.msra.mxu0 0.0
      %1837 = vmatprep.subr.mxu0 0.0
      %1838 = vmatpush1.msra.mxu0 0.0
      %1839 = vmatprep.subr.mxu0 0.0
      %1840 = vmatpush1.msra.mxu0 0.0
      %1841 = vmatprep.subr.mxu0 0.0
      %1842 = vmatpush1.msra.mxu0 0.0
      %1843 = vmatprep.subr.mxu0 0.0
      %1844 = vmatpush1.msra.mxu0 0.0
      %1845 = vmatprep.subr.mxu0 0.0
      %1846 = vmatpush1.msra.mxu0 0.0
      %1847 = vmatprep.subr.mxu0 0.0
      %1848 = vmatpush1.msra.mxu0 0.0
      %1849 = vmatprep.subr.mxu0 0.0
      %1850 = vmatpush1.msra.mxu0 0.0
      %1851 = vmatprep.subr.mxu0 0.0
      %1852 = vmatpush1.msra.mxu0 0.0
      %1853 = vmatprep.subr.mxu0 0.0
      %1854 = vmatpush1.msra.mxu0 0.0
      %1855 = vmatprep.subr.mxu0 0.0
      %1856 = vmatpush1.msra.mxu0 0.0
      %1857 = vmatprep.subr.mxu0 %v1357
      %1858 = vmatpush1.msra.mxu0 %v1354
      %1859 = vmatprep.subr.mxu0 0.0
      %1860 = vmatpush2.msra.mxu0 0.0
      %1861 = vmatprep.subr.mxu0 0.0
      %1862 = vmatpush2.msra.mxu0 0.0
      %1863 = vmatprep.subr.mxu0 0.0
      %1864 = vmatpush2.msra.mxu0 0.0
      %1865 = vmatprep.subr.mxu0 0.0
      %1866 = vmatpush2.msra.mxu0 0.0
      %1867 = vmatprep.subr.mxu0 0.0
      %1868 = vmatpush2.msra.mxu0 0.0
      %1869 = vmatprep.subr.mxu0 0.0
      %1870 = vmatpush2.msra.mxu0 0.0
      %1871 = vmatprep.subr.mxu0 0.0
      %1872 = vmatpush2.msra.mxu0 0.0
      %1873 = vmatprep.subr.mxu0 0.0
      %1874 = vmatpush2.msra.mxu0 0.0
      %1875 = vmatprep.subr.mxu0 0.0
      %1876 = vmatpush2.msra.mxu0 0.0
      %1877 = vmatprep.subr.mxu0 0.0
      %1878 = vmatpush2.msra.mxu0 0.0
      %1879 = vmatprep.subr.mxu0 0.0
      %1880 = vmatpush2.msra.mxu0 0.0
      %1881 = vmatprep.subr.mxu0 0.0
      %1882 = vmatpush2.msra.mxu0 0.0
      %1883 = vmatprep.subr.mxu0 0.0
      %1884 = vmatpush2.msra.mxu0 0.0
      %1885 = vmatprep.subr.mxu0 0.0
      %1886 = vmatpush2.msra.mxu0 0.0
      %1887 = vmatprep.subr.mxu0 0.0
      %1888 = vmatpush2.msra.mxu0 0.0
      %1889 = vmatprep.subr.mxu0 0.0
      %1890 = vmatpush2.msra.mxu0 0.0
      %1891 = vmatprep.mubr.f32.mxu0 0.0
      %1892 = vmatmul.mubr.f32.gmra.mxu0 %v1312
      %v1893 = vpop.f32.mrf.mxu0
      %v1894 = vadd.f32 %v1282, %v1893
      %v1895 = vpop.f32.mrf.mxu0
      %v1896 = vadd.f32 %v1286, %v1895
      %1897 = vmatprep.mubr.f32.mxu0 0.0
      %1898 = vmatmul.mubr.f32.gmra.mxu0 %v1315
      %v1899 = vpop.f32.mrf.mxu0
      %v1900 = vadd.f32 %v1282, %v1899
      %v1901 = vpop.f32.mrf.mxu0
      %v1902 = vadd.f32 %v1286, %v1901
      %1903 = vdwg.mxu0
      %1904 = vmatprep.subr.mxu0 0.0
      %1905 = vmatpush1.msra.mxu0 0.0
      %1906 = vmatprep.subr.mxu0 0.0
      %1907 = vmatpush1.msra.mxu0 0.0
      %1908 = vmatprep.subr.mxu0 0.0
      %1909 = vmatpush1.msra.mxu0 0.0
      %1910 = vmatprep.subr.mxu0 0.0
      %1911 = vmatpush1.msra.mxu0 0.0
      %1912 = vmatprep.subr.mxu0 0.0
      %1913 = vmatpush1.msra.mxu0 0.0
      %1914 = vmatprep.subr.mxu0 0.0
      %1915 = vmatpush1.msra.mxu0 0.0
      %1916 = vmatprep.subr.mxu0 0.0
      %1917 = vmatpush1.msra.mxu0 0.0
      %1918 = vmatprep.subr.mxu0 0.0
      %1919 = vmatpush1.msra.mxu0 0.0
      %1920 = vmatprep.subr.mxu0 0.0
      %1921 = vmatpush1.msra.mxu0 0.0
      %1922 = vmatprep.subr.mxu0 0.0
      %1923 = vmatpush1.msra.mxu0 0.0
      %1924 = vmatprep.subr.mxu0 0.0
      %1925 = vmatpush1.msra.mxu0 0.0
      %1926 = vmatprep.subr.mxu0 0.0
      %1927 = vmatpush1.msra.mxu0 0.0
      %1928 = vmatprep.subr.mxu0 0.0
      %1929 = vmatpush1.msra.mxu0 0.0
      %1930 = vmatprep.subr.mxu0 0.0
      %1931 = vmatpush1.msra.mxu0 0.0
      %1932 = vmatprep.subr.mxu0 0.0
      %1933 = vmatpush1.msra.mxu0 0.0
      %1934 = vmatprep.subr.mxu0 %v1363
      %1935 = vmatpush1.msra.mxu0 %v1360
      %1936 = vmatprep.subr.mxu0 0.0
      %1937 = vmatpush2.msra.mxu0 0.0
      %1938 = vmatprep.subr.mxu0 0.0
      %1939 = vmatpush2.msra.mxu0 0.0
      %1940 = vmatprep.subr.mxu0 0.0
      %1941 = vmatpush2.msra.mxu0 0.0
      %1942 = vmatprep.subr.mxu0 0.0
      %1943 = vmatpush2.msra.mxu0 0.0
      %1944 = vmatprep.subr.mxu0 0.0
      %1945 = vmatpush2.msra.mxu0 0.0
      %1946 = vmatprep.subr.mxu0 0.0
      %1947 = vmatpush2.msra.mxu0 0.0
      %1948 = vmatprep.subr.mxu0 0.0
      %1949 = vmatpush2.msra.mxu0 0.0
      %1950 = vmatprep.subr.mxu0 0.0
      %1951 = vmatpush2.msra.mxu0 0.0
      %1952 = vmatprep.subr.mxu0 0.0
      %1953 = vmatpush2.msra.mxu0 0.0
      %1954 = vmatprep.subr.mxu0 0.0
      %1955 = vmatpush2.msra.mxu0 0.0
      %1956 = vmatprep.subr.mxu0 0.0
      %1957 = vmatpush2.msra.mxu0 0.0
      %1958 = vmatprep.subr.mxu0 0.0
      %1959 = vmatpush2.msra.mxu0 0.0
      %1960 = vmatprep.subr.mxu0 0.0
      %1961 = vmatpush2.msra.mxu0 0.0
      %1962 = vmatprep.subr.mxu0 0.0
      %1963 = vmatpush2.msra.mxu0 0.0
      %1964 = vmatprep.subr.mxu0 0.0
      %1965 = vmatpush2.msra.mxu0 0.0
      %1966 = vmatprep.subr.mxu0 0.0
      %1967 = vmatpush2.msra.mxu0 0.0
      %1968 = vmatprep.mubr.f32.mxu0 0.0
      %1969 = vmatmul.mubr.f32.gmra.mxu0 %v1312
      %v1970 = vpop.f32.mrf.mxu0
      %v1971 = vadd.f32 %v1290, %v1970
      %v1972 = vpop.f32.mrf.mxu0
      %v1973 = vadd.f32 %v1294, %v1972
      %1974 = vmatprep.mubr.f32.mxu0 0.0
      %1975 = vmatmul.mubr.f32.gmra.mxu0 %v1315
      %v1976 = vpop.f32.mrf.mxu0
      %v1977 = vadd.f32 %v1290, %v1976
      %v1978 = vpop.f32.mrf.mxu0
      %v1979 = vadd.f32 %v1294, %v1978
      %1980 = vdwg.mxu0
      %v1981 = vmax.f32 %v1432, 0.0
      %v1982 = vmax.f32 %v1434, 0.0
      %v1983 = vmax.f32 %v1509, 0.0
      %v1984 = vmax.f32 %v1511, 0.0
      %v1985 = vmax.f32 %v1586, 0.0
      %v1986 = vmax.f32 %v1588, 0.0
      %v1987 = vmax.f32 %v1663, 0.0
      %v1988 = vmax.f32 %v1665, 0.0
      %v1989 = vmax.f32 %v1740, 0.0
      %v1990 = vmax.f32 %v1742, 0.0
      %v1991 = vmax.f32 %v1817, 0.0
      %v1992 = vmax.f32 %v1819, 0.0
      %v1993 = vmax.f32 %v1894, 0.0
      %v1994 = vmax.f32 %v1896, 0.0
      %v1995 = vmax.f32 %v1971, 0.0
      %v1996 = vmax.f32 %v1973, 0.0
      %v1997 = vmax.f32 %v1438, 0.0
      %v1998 = vmax.f32 %v1440, 0.0
      %v1999 = vmax.f32 %v1515, 0.0
      %v2000 = vmax.f32 %v1517, 0.0
      %v2001 = vmax.f32 %v1592, 0.0
      %v2002 = vmax.f32 %v1594, 0.0
      %v2003 = vmax.f32 %v1669, 0.0
      %v2004 = vmax.f32 %v1671, 0.0
      %v2005 = vmax.f32 %v1746, 0.0
      %v2006 = vmax.f32 %v1748, 0.0
      %v2007 = vmax.f32 %v1823, 0.0
      %v2008 = vmax.f32 %v1825, 0.0
      %v2009 = vmax.f32 %v1900, 0.0
      %v2010 = vmax.f32 %v1902, 0.0
      %v2011 = vmax.f32 %v1977, 0.0
      %v2012 = vmax.f32 %v1979, 0.0
      %v2013 = vld [vmem:[%s585] sm:$0xff]
      %v2014 = vld [vmem:[%s585 + $0x8] sm:$0xff]
      %v2015 = vld [vmem:[%s585 + $0x10] sm:$0xff]
      %v2016 = vld [vmem:[%s585 + $0x18] sm:$0xff]
      %v2017 = vld [vmem:[%s585 + $0x20] sm:$0xff]
      %v2018 = vld [vmem:[%s585 + $0x28] sm:$0xff]
      %v2019 = vld [vmem:[%s585 + $0x30] sm:$0xff]
      %v2020 = vld [vmem:[%s585 + $0x38] sm:$0xff]
      %v2021 = vld [vmem:[%s585 + $0x40] sm:$0xff]
      %v2022 = vld [vmem:[%s585 + $0x48] sm:$0xff]
      %v2023 = vld [vmem:[%s585 + $0x50] sm:$0xff]
      %v2024 = vld [vmem:[%s585 + $0x58] sm:$0xff]
      %v2025 = vld [vmem:[%s585 + $0x60] sm:$0xff]
      %v2026 = vld [vmem:[%s585 + $0x68] sm:$0xff]
      %v2027 = vld [vmem:[%s585 + $0x70] sm:$0xff]
      %v2028 = vld [vmem:[%s585 + $0x78] sm:$0xff]
      %v2029 = vld [vmem:[%s585 + $0x80] sm:$0xff]
      %v2030 = vld [vmem:[%s585 + $0x88] sm:$0xff]
      %v2031 = vld [vmem:[%s585 + $0x90] sm:$0xff]
      %v2032 = vld [vmem:[%s585 + $0x98] sm:$0xff]
      %v2033 = vld [vmem:[%s585 + $0xa0] sm:$0xff]
      %v2034 = vld [vmem:[%s585 + $0xa8] sm:$0xff]
      %v2035 = vld [vmem:[%s585 + $0xb0] sm:$0xff]
      %v2036 = vld [vmem:[%s585 + $0xb8] sm:$0xff]
      %v2037 = vld [vmem:[%s585 + $0xc0] sm:$0xff]
      %v2038 = vld [vmem:[%s585 + $0xc8] sm:$0xff]
      %v2039 = vld [vmem:[%s585 + $0xd0] sm:$0xff]
      %v2040 = vld [vmem:[%s585 + $0xd8] sm:$0xff]
      %v2041 = vld [vmem:[%s585 + $0xe0] sm:$0xff]
      %v2042 = vld [vmem:[%s585 + $0xe8] sm:$0xff]
      %v2043 = vld [vmem:[%s585 + $0xf0] sm:$0xff]
      %v2044 = vld [vmem:[%s585 + $0xf8] sm:$0xff]
      %v2045 = vld [vmem:[%s585 + $0x100] sm:$0xff]
      %v2046 = vld [vmem:[%s585 + $0x108] sm:$0xff]
      %v2047 = vld [vmem:[%s585 + $0x110] sm:$0xff]
      %v2048 = vld [vmem:[%s585 + $0x118] sm:$0xff]
      %v2049 = vld [vmem:[%s585 + $0x120] sm:$0xff]
      %v2050 = vld [vmem:[%s585 + $0x128] sm:$0xff]
      %v2051 = vld [vmem:[%s585 + $0x130] sm:$0xff]
      %v2052 = vld [vmem:[%s585 + $0x138] sm:$0xff]
      %v2053 = vld [vmem:[%s585 + $0x140] sm:$0xff]
      %v2054 = vld [vmem:[%s585 + $0x148] sm:$0xff]
      %v2055 = vld [vmem:[%s585 + $0x150] sm:$0xff]
      %v2056 = vld [vmem:[%s585 + $0x158] sm:$0xff]
      %v2057 = vld [vmem:[%s585 + $0x160] sm:$0xff]
      %v2058 = vld [vmem:[%s585 + $0x168] sm:$0xff]
      %v2059 = vld [vmem:[%s585 + $0x170] sm:$0xff]
      %v2060 = vld [vmem:[%s585 + $0x178] sm:$0xff]
      %v2061 = vld [vmem:[%s585 + $0x180] sm:$0xff]
      %v2062 = vld [vmem:[%s585 + $0x188] sm:$0xff]
      %v2063 = vld [vmem:[%s585 + $0x190] sm:$0xff]
      %v2064 = vld [vmem:[%s585 + $0x198] sm:$0xff]
      %v2065 = vld [vmem:[%s585 + $0x1a0] sm:$0xff]
      %v2066 = vld [vmem:[%s585 + $0x1a8] sm:$0xff]
      %v2067 = vld [vmem:[%s585 + $0x1b0] sm:$0xff]
      %v2068 = vld [vmem:[%s585 + $0x1b8] sm:$0xff]
      %v2069 = vld [vmem:[%s585 + $0x1c0] sm:$0xff]
      %v2070 = vld [vmem:[%s585 + $0x1c8] sm:$0xff]
      %v2071 = vld [vmem:[%s585 + $0x1d0] sm:$0xff]
      %v2072 = vld [vmem:[%s585 + $0x1d8] sm:$0xff]
      %v2073 = vld [vmem:[%s585 + $0x1e0] sm:$0xff]
      %v2074 = vld [vmem:[%s585 + $0x1e8] sm:$0xff]
      %v2075 = vld [vmem:[%s585 + $0x1f0] sm:$0xff]
      %v2076 = vld [vmem:[%s585 + $0x1f8] sm:$0xff]
      %v2077 = vld [vmem:[%s585 + $0x200] sm:$0xff]
      %v2078 = vld [vmem:[%s585 + $0x208] sm:$0xff]
      %v2079 = vld [vmem:[%s585 + $0x210] sm:$0xff]
      %v2080 = vld [vmem:[%s585 + $0x218] sm:$0xff]
      %v2081 = vld [vmem:[%s585 + $0x220] sm:$0xff]
      %v2082 = vld [vmem:[%s585 + $0x228] sm:$0xff]
      %v2083 = vld [vmem:[%s585 + $0x230] sm:$0xff]
      %v2084 = vld [vmem:[%s585 + $0x238] sm:$0xff]
      %v2085 = vld [vmem:[%s585 + $0x240] sm:$0xff]
      %v2086 = vld [vmem:[%s585 + $0x248] sm:$0xff]
      %v2087 = vld [vmem:[%s585 + $0x250] sm:$0xff]
      %v2088 = vld [vmem:[%s585 + $0x258] sm:$0xff]
      %v2089 = vld [vmem:[%s585 + $0x260] sm:$0xff]
      %v2090 = vld [vmem:[%s585 + $0x268] sm:$0xff]
      %v2091 = vld [vmem:[%s585 + $0x270] sm:$0xff]
      %v2092 = vld [vmem:[%s585 + $0x278] sm:$0xff]
      %v2093 = vld [vmem:[%s585 + $0x280] sm:$0xff]
      %v2094 = vld [vmem:[%s585 + $0x288] sm:$0xff]
      %v2095 = vld [vmem:[%s585 + $0x290] sm:$0xff]
      %v2096 = vld [vmem:[%s585 + $0x298] sm:$0xff]
      %v2097 = vld [vmem:[%s585 + $0x2a0] sm:$0xff]
      %v2098 = vld [vmem:[%s585 + $0x2a8] sm:$0xff]
      %v2099 = vld [vmem:[%s585 + $0x2b0] sm:$0xff]
      %v2100 = vld [vmem:[%s585 + $0x2b8] sm:$0xff]
      %v2101 = vld [vmem:[%s585 + $0x2c0] sm:$0xff]
      %v2102 = vld [vmem:[%s585 + $0x2c8] sm:$0xff]
      %v2103 = vld [vmem:[%s585 + $0x2d0] sm:$0xff]
      %v2104 = vld [vmem:[%s585 + $0x2d8] sm:$0xff]
      %v2105 = vld [vmem:[%s585 + $0x2e0] sm:$0xff]
      %v2106 = vld [vmem:[%s585 + $0x2e8] sm:$0xff]
      %v2107 = vld [vmem:[%s585 + $0x2f0] sm:$0xff]
      %v2108 = vld [vmem:[%s585 + $0x2f8] sm:$0xff]
      %v2109 = vld [vmem:[%s585 + $0x300] sm:$0xff]
      %v2110 = vld [vmem:[%s585 + $0x308] sm:$0xff]
      %v2111 = vld [vmem:[%s585 + $0x310] sm:$0xff]
      %v2112 = vld [vmem:[%s585 + $0x318] sm:$0xff]
      %v2113 = vld [vmem:[%s585 + $0x320] sm:$0xff]
      %v2114 = vld [vmem:[%s585 + $0x328] sm:$0xff]
      %v2115 = vld [vmem:[%s585 + $0x330] sm:$0xff]
      %v2116 = vld [vmem:[%s585 + $0x338] sm:$0xff]
      %v2117 = vld [vmem:[%s585 + $0x340] sm:$0xff]
      %v2118 = vld [vmem:[%s585 + $0x348] sm:$0xff]
      %v2119 = vld [vmem:[%s585 + $0x350] sm:$0xff]
      %v2120 = vld [vmem:[%s585 + $0x358] sm:$0xff]
      %v2121 = vld [vmem:[%s585 + $0x360] sm:$0xff]
      %v2122 = vld [vmem:[%s585 + $0x368] sm:$0xff]
      %v2123 = vld [vmem:[%s585 + $0x370] sm:$0xff]
      %v2124 = vld [vmem:[%s585 + $0x378] sm:$0xff]
      %v2125 = vld [vmem:[%s585 + $0x380] sm:$0xff]
      %v2126 = vld [vmem:[%s585 + $0x388] sm:$0xff]
      %v2127 = vld [vmem:[%s585 + $0x390] sm:$0xff]
      %v2128 = vld [vmem:[%s585 + $0x398] sm:$0xff]
      %v2129 = vld [vmem:[%s585 + $0x3a0] sm:$0xff]
      %v2130 = vld [vmem:[%s585 + $0x3a8] sm:$0xff]
      %v2131 = vld [vmem:[%s585 + $0x3b0] sm:$0xff]
      %v2132 = vld [vmem:[%s585 + $0x3b8] sm:$0xff]
      %v2133 = vld [vmem:[%s585 + $0x3c0] sm:$0xff]
      %v2134 = vld [vmem:[%s585 + $0x3c8] sm:$0xff]
      %v2135 = vld [vmem:[%s585 + $0x3d0] sm:$0xff]
      %v2136 = vld [vmem:[%s585 + $0x3d8] sm:$0xff]
      %v2137 = vld [vmem:[%s585 + $0x3e0] sm:$0xff]
      %v2138 = vld [vmem:[%s585 + $0x3e8] sm:$0xff]
      %v2139 = vld [vmem:[%s585 + $0x3f0] sm:$0xff]
      %v2140 = vld [vmem:[%s585 + $0x3f8] sm:$0xff]
      %v2141 = vld [vmem:[%s585 + $0x400] sm:$0xff]
      %v2142 = vld [vmem:[%s585 + $0x408] sm:$0xff]
      %v2143 = vld [vmem:[%s585 + $0x410] sm:$0xff]
      %v2144 = vld [vmem:[%s585 + $0x418] sm:$0xff]
      %v2145 = vld [vmem:[%s585 + $0x420] sm:$0xff]
      %v2146 = vld [vmem:[%s585 + $0x428] sm:$0xff]
      %v2147 = vld [vmem:[%s585 + $0x430] sm:$0xff]
      %v2148 = vld [vmem:[%s585 + $0x438] sm:$0xff]
      %v2149 = vld [vmem:[%s585 + $0x440] sm:$0xff]
      %v2150 = vld [vmem:[%s585 + $0x448] sm:$0xff]
      %v2151 = vld [vmem:[%s585 + $0x450] sm:$0xff]
      %v2152 = vld [vmem:[%s585 + $0x458] sm:$0xff]
      %v2153 = vld [vmem:[%s585 + $0x460] sm:$0xff]
      %v2154 = vld [vmem:[%s585 + $0x468] sm:$0xff]
      %v2155 = vld [vmem:[%s585 + $0x470] sm:$0xff]
      %v2156 = vld [vmem:[%s585 + $0x478] sm:$0xff]
      %v2157 = vld [vmem:[%s585 + $0x480] sm:$0xff]
      %v2158 = vld [vmem:[%s585 + $0x488] sm:$0xff]
      %v2159 = vld [vmem:[%s585 + $0x490] sm:$0xff]
      %v2160 = vld [vmem:[%s585 + $0x498] sm:$0xff]
      %v2161 = vld [vmem:[%s585 + $0x4a0] sm:$0xff]
      %v2162 = vld [vmem:[%s585 + $0x4a8] sm:$0xff]
      %v2163 = vld [vmem:[%s585 + $0x4b0] sm:$0xff]
      %v2164 = vld [vmem:[%s585 + $0x4b8] sm:$0xff]
      %v2165 = vld [vmem:[%s585 + $0x4c0] sm:$0xff]
      %v2166 = vld [vmem:[%s585 + $0x4c8] sm:$0xff]
      %v2167 = vld [vmem:[%s585 + $0x4d0] sm:$0xff]
      %v2168 = vld [vmem:[%s585 + $0x4d8] sm:$0xff]
      %v2169 = vld [vmem:[%s585 + $0x4e0] sm:$0xff]
      %v2170 = vld [vmem:[%s585 + $0x4e8] sm:$0xff]
      %v2171 = vld [vmem:[%s585 + $0x4f0] sm:$0xff]
      %v2172 = vld [vmem:[%s585 + $0x4f8] sm:$0xff]
      %v2173 = vld [vmem:[%s585 + $0x500] sm:$0xff]
      %v2174 = vld [vmem:[%s585 + $0x508] sm:$0xff]
      %v2175 = vld [vmem:[%s585 + $0x510] sm:$0xff]
      %v2176 = vld [vmem:[%s585 + $0x518] sm:$0xff]
      %v2177 = vld [vmem:[%s585 + $0x520] sm:$0xff]
      %v2178 = vld [vmem:[%s585 + $0x528] sm:$0xff]
      %v2179 = vld [vmem:[%s585 + $0x530] sm:$0xff]
      %v2180 = vld [vmem:[%s585 + $0x538] sm:$0xff]
      %v2181 = vld [vmem:[%s585 + $0x540] sm:$0xff]
      %v2182 = vld [vmem:[%s585 + $0x548] sm:$0xff]
      %v2183 = vld [vmem:[%s585 + $0x550] sm:$0xff]
      %v2184 = vld [vmem:[%s585 + $0x558] sm:$0xff]
      %v2185 = vld [vmem:[%s585 + $0x560] sm:$0xff]
      %v2186 = vld [vmem:[%s585 + $0x568] sm:$0xff]
      %v2187 = vld [vmem:[%s585 + $0x570] sm:$0xff]
      %v2188 = vld [vmem:[%s585 + $0x578] sm:$0xff]
      %v2189 = vld [vmem:[%s585 + $0x580] sm:$0xff]
      %v2190 = vld [vmem:[%s585 + $0x588] sm:$0xff]
      %v2191 = vld [vmem:[%s585 + $0x590] sm:$0xff]
      %v2192 = vld [vmem:[%s585 + $0x598] sm:$0xff]
      %v2193 = vld [vmem:[%s585 + $0x5a0] sm:$0xff]
      %v2194 = vld [vmem:[%s585 + $0x5a8] sm:$0xff]
      %v2195 = vld [vmem:[%s585 + $0x5b0] sm:$0xff]
      %v2196 = vld [vmem:[%s585 + $0x5b8] sm:$0xff]
      %v2197 = vld [vmem:[%s585 + $0x5c0] sm:$0xff]
      %v2198 = vld [vmem:[%s585 + $0x5c8] sm:$0xff]
      %v2199 = vld [vmem:[%s585 + $0x5d0] sm:$0xff]
      %v2200 = vld [vmem:[%s585 + $0x5d8] sm:$0xff]
      %v2201 = vld [vmem:[%s585 + $0x5e0] sm:$0xff]
      %v2202 = vld [vmem:[%s585 + $0x5e8] sm:$0xff]
      %v2203 = vld [vmem:[%s585 + $0x5f0] sm:$0xff]
      %v2204 = vld [vmem:[%s585 + $0x5f8] sm:$0xff]
      %v2205 = vld [vmem:[%s585 + $0x600] sm:$0xff]
      %v2206 = vld [vmem:[%s585 + $0x608] sm:$0xff]
      %v2207 = vld [vmem:[%s585 + $0x610] sm:$0xff]
      %v2208 = vld [vmem:[%s585 + $0x618] sm:$0xff]
      %v2209 = vld [vmem:[%s585 + $0x620] sm:$0xff]
      %v2210 = vld [vmem:[%s585 + $0x628] sm:$0xff]
      %v2211 = vld [vmem:[%s585 + $0x630] sm:$0xff]
      %v2212 = vld [vmem:[%s585 + $0x638] sm:$0xff]
      %v2213 = vld [vmem:[%s585 + $0x640] sm:$0xff]
      %v2214 = vld [vmem:[%s585 + $0x648] sm:$0xff]
      %v2215 = vld [vmem:[%s585 + $0x650] sm:$0xff]
      %v2216 = vld [vmem:[%s585 + $0x658] sm:$0xff]
      %v2217 = vld [vmem:[%s585 + $0x660] sm:$0xff]
      %v2218 = vld [vmem:[%s585 + $0x668] sm:$0xff]
      %v2219 = vld [vmem:[%s585 + $0x670] sm:$0xff]
      %v2220 = vld [vmem:[%s585 + $0x678] sm:$0xff]
      %v2221 = vld [vmem:[%s585 + $0x680] sm:$0xff]
      %v2222 = vld [vmem:[%s585 + $0x688] sm:$0xff]
      %v2223 = vld [vmem:[%s585 + $0x690] sm:$0xff]
      %v2224 = vld [vmem:[%s585 + $0x698] sm:$0xff]
      %v2225 = vld [vmem:[%s585 + $0x6a0] sm:$0xff]
      %v2226 = vld [vmem:[%s585 + $0x6a8] sm:$0xff]
      %v2227 = vld [vmem:[%s585 + $0x6b0] sm:$0xff]
      %v2228 = vld [vmem:[%s585 + $0x6b8] sm:$0xff]
      %v2229 = vld [vmem:[%s585 + $0x6c0] sm:$0xff]
      %v2230 = vld [vmem:[%s585 + $0x6c8] sm:$0xff]
      %v2231 = vld [vmem:[%s585 + $0x6d0] sm:$0xff]
      %v2232 = vld [vmem:[%s585 + $0x6d8] sm:$0xff]
      %v2233 = vld [vmem:[%s585 + $0x6e0] sm:$0xff]
      %v2234 = vld [vmem:[%s585 + $0x6e8] sm:$0xff]
      %v2235 = vld [vmem:[%s585 + $0x6f0] sm:$0xff]
      %v2236 = vld [vmem:[%s585 + $0x6f8] sm:$0xff]
      %v2237 = vld [vmem:[%s585 + $0x700] sm:$0xff]
      %v2238 = vld [vmem:[%s585 + $0x708] sm:$0xff]
      %v2239 = vld [vmem:[%s585 + $0x710] sm:$0xff]
      %v2240 = vld [vmem:[%s585 + $0x718] sm:$0xff]
      %v2241 = vld [vmem:[%s585 + $0x720] sm:$0xff]
      %v2242 = vld [vmem:[%s585 + $0x728] sm:$0xff]
      %v2243 = vld [vmem:[%s585 + $0x730] sm:$0xff]
      %v2244 = vld [vmem:[%s585 + $0x738] sm:$0xff]
      %v2245 = vld [vmem:[%s585 + $0x740] sm:$0xff]
      %v2246 = vld [vmem:[%s585 + $0x748] sm:$0xff]
      %v2247 = vld [vmem:[%s585 + $0x750] sm:$0xff]
      %v2248 = vld [vmem:[%s585 + $0x758] sm:$0xff]
      %v2249 = vld [vmem:[%s585 + $0x760] sm:$0xff]
      %v2250 = vld [vmem:[%s585 + $0x768] sm:$0xff]
      %v2251 = vld [vmem:[%s585 + $0x770] sm:$0xff]
      %v2252 = vld [vmem:[%s585 + $0x778] sm:$0xff]
      %v2253 = vld [vmem:[%s585 + $0x780] sm:$0xff]
      %v2254 = vld [vmem:[%s585 + $0x788] sm:$0xff]
      %v2255 = vld [vmem:[%s585 + $0x790] sm:$0xff]
      %v2256 = vld [vmem:[%s585 + $0x798] sm:$0xff]
      %v2257 = vld [vmem:[%s585 + $0x7a0] sm:$0xff]
      %v2258 = vld [vmem:[%s585 + $0x7a8] sm:$0xff]
      %v2259 = vld [vmem:[%s585 + $0x7b0] sm:$0xff]
      %v2260 = vld [vmem:[%s585 + $0x7b8] sm:$0xff]
      %v2261 = vld [vmem:[%s585 + $0x7c0] sm:$0xff]
      %v2262 = vld [vmem:[%s585 + $0x7c8] sm:$0xff]
      %v2263 = vld [vmem:[%s585 + $0x7d0] sm:$0xff]
      %v2264 = vld [vmem:[%s585 + $0x7d8] sm:$0xff]
      %v2265 = vld [vmem:[%s585 + $0x7e0] sm:$0xff]
      %v2266 = vld [vmem:[%s585 + $0x7e8] sm:$0xff]
      %v2267 = vld [vmem:[%s585 + $0x7f0] sm:$0xff]
      %v2268 = vld [vmem:[%s585 + $0x7f8] sm:$0xff]
      %v2269 = vld [vmem:[%s588] sm:$0x1]
      %v2271 = vlaneseq
      %v2272 = vshrl.u32 %v2271, 7
      %v2273 = vsub.s32 0, %v2272
      %v2274 = vrot.slane %v2269, %v2273
      %2276 = vmatprep.subr.mxu0 0.0
      %2277 = vmatpush1.msra.mxu0 %v2028
      %2278 = vmatprep.subr.mxu0 0.0
      %2279 = vmatpush1.msra.mxu0 %v2027
      %2280 = vmatprep.subr.mxu0 0.0
      %2281 = vmatpush1.msra.mxu0 %v2026
      %2282 = vmatprep.subr.mxu0 0.0
      %2283 = vmatpush1.msra.mxu0 %v2025
      %2284 = vmatprep.subr.mxu0 0.0
      %2285 = vmatpush1.msra.mxu0 %v2024
      %2286 = vmatprep.subr.mxu0 0.0
      %2287 = vmatpush1.msra.mxu0 %v2023
      %2288 = vmatprep.subr.mxu0 0.0
      %2289 = vmatpush1.msra.mxu0 %v2022
      %2290 = vmatprep.subr.mxu0 0.0
      %2291 = vmatpush1.msra.mxu0 %v2021
      %2292 = vmatprep.subr.mxu0 0.0
      %2293 = vmatpush1.msra.mxu0 %v2020
      %2294 = vmatprep.subr.mxu0 0.0
      %2295 = vmatpush1.msra.mxu0 %v2019
      %2296 = vmatprep.subr.mxu0 0.0
      %2297 = vmatpush1.msra.mxu0 %v2018
      %2298 = vmatprep.subr.mxu0 0.0
      %2299 = vmatpush1.msra.mxu0 %v2017
      %2300 = vmatprep.subr.mxu0 0.0
      %2301 = vmatpush1.msra.mxu0 %v2016
      %2302 = vmatprep.subr.mxu0 0.0
      %2303 = vmatpush1.msra.mxu0 %v2015
      %2304 = vmatprep.subr.mxu0 0.0
      %2305 = vmatpush1.msra.mxu0 %v2014
      %2306 = vmatprep.subr.mxu0 0.0
      %2307 = vmatpush1.msra.mxu0 %v2013
      %2308 = vmatprep.subr.mxu0 0.0
      %2309 = vmatpush2.msra.mxu0 %v2044
      %2310 = vmatprep.subr.mxu0 0.0
      %2311 = vmatpush2.msra.mxu0 %v2043
      %2312 = vmatprep.subr.mxu0 0.0
      %2313 = vmatpush2.msra.mxu0 %v2042
      %2314 = vmatprep.subr.mxu0 0.0
      %2315 = vmatpush2.msra.mxu0 %v2041
      %2316 = vmatprep.subr.mxu0 0.0
      %2317 = vmatpush2.msra.mxu0 %v2040
      %2318 = vmatprep.subr.mxu0 0.0
      %2319 = vmatpush2.msra.mxu0 %v2039
      %2320 = vmatprep.subr.mxu0 0.0
      %2321 = vmatpush2.msra.mxu0 %v2038
      %2322 = vmatprep.subr.mxu0 0.0
      %2323 = vmatpush2.msra.mxu0 %v2037
      %2324 = vmatprep.subr.mxu0 0.0
      %2325 = vmatpush2.msra.mxu0 %v2036
      %2326 = vmatprep.subr.mxu0 0.0
      %2327 = vmatpush2.msra.mxu0 %v2035
      %2328 = vmatprep.subr.mxu0 0.0
      %2329 = vmatpush2.msra.mxu0 %v2034
      %2330 = vmatprep.subr.mxu0 0.0
      %2331 = vmatpush2.msra.mxu0 %v2033
      %2332 = vmatprep.subr.mxu0 0.0
      %2333 = vmatpush2.msra.mxu0 %v2032
      %2334 = vmatprep.subr.mxu0 0.0
      %2335 = vmatpush2.msra.mxu0 %v2031
      %2336 = vmatprep.subr.mxu0 0.0
      %2337 = vmatpush2.msra.mxu0 %v2030
      %2338 = vmatprep.subr.mxu0 0.0
      %2339 = vmatpush2.msra.mxu0 %v2029
      %2340 = vmatprep.mubr.f32.mxu0 %v1982
      %2341 = vmatmul.mubr.f32.gmra.mxu0 %v1981
      %v2342 = vpop.f32.mrf.mxu0
      %v2343 = vadd.f32 %v2274, %v2342
      %v2344 = vpop.f32.mrf.mxu0
      %2345 = vmatprep.mubr.f32.mxu0 %v1998
      %2346 = vmatmul.mubr.f32.gmra.mxu0 %v1997
      %v2347 = vpop.f32.mrf.mxu0
      %v2348 = vadd.f32 %v2274, %v2347
      %v2349 = vpop.f32.mrf.mxu0
      %2350 = vdwg.mxu0
      %2351 = vmatprep.subr.mxu0 0.0
      %2352 = vmatpush1.msra.mxu0 %v2060
      %2353 = vmatprep.subr.mxu0 0.0
      %2354 = vmatpush1.msra.mxu0 %v2059
      %2355 = vmatprep.subr.mxu0 0.0
      %2356 = vmatpush1.msra.mxu0 %v2058
      %2357 = vmatprep.subr.mxu0 0.0
      %2358 = vmatpush1.msra.mxu0 %v2057
      %2359 = vmatprep.subr.mxu0 0.0
      %2360 = vmatpush1.msra.mxu0 %v2056
      %2361 = vmatprep.subr.mxu0 0.0
      %2362 = vmatpush1.msra.mxu0 %v2055
      %2363 = vmatprep.subr.mxu0 0.0
      %2364 = vmatpush1.msra.mxu0 %v2054
      %2365 = vmatprep.subr.mxu0 0.0
      %2366 = vmatpush1.msra.mxu0 %v2053
      %2367 = vmatprep.subr.mxu0 0.0
      %2368 = vmatpush1.msra.mxu0 %v2052
      %2369 = vmatprep.subr.mxu0 0.0
      %2370 = vmatpush1.msra.mxu0 %v2051
      %2371 = vmatprep.subr.mxu0 0.0
      %2372 = vmatpush1.msra.mxu0 %v2050
      %2373 = vmatprep.subr.mxu0 0.0
      %2374 = vmatpush1.msra.mxu0 %v2049
      %2375 = vmatprep.subr.mxu0 0.0
      %2376 = vmatpush1.msra.mxu0 %v2048
      %2377 = vmatprep.subr.mxu0 0.0
      %2378 = vmatpush1.msra.mxu0 %v2047
      %2379 = vmatprep.subr.mxu0 0.0
      %2380 = vmatpush1.msra.mxu0 %v2046
      %2381 = vmatprep.subr.mxu0 0.0
      %2382 = vmatpush1.msra.mxu0 %v2045
      %2383 = vmatprep.subr.mxu0 0.0
      %2384 = vmatpush2.msra.mxu0 %v2076
      %2385 = vmatprep.subr.mxu0 0.0
      %2386 = vmatpush2.msra.mxu0 %v2075
      %2387 = vmatprep.subr.mxu0 0.0
      %2388 = vmatpush2.msra.mxu0 %v2074
      %2389 = vmatprep.subr.mxu0 0.0
      %2390 = vmatpush2.msra.mxu0 %v2073
      %2391 = vmatprep.subr.mxu0 0.0
      %2392 = vmatpush2.msra.mxu0 %v2072
      %2393 = vmatprep.subr.mxu0 0.0
      %2394 = vmatpush2.msra.mxu0 %v2071
      %2395 = vmatprep.subr.mxu0 0.0
      %2396 = vmatpush2.msra.mxu0 %v2070
      %2397 = vmatprep.subr.mxu0 0.0
      %2398 = vmatpush2.msra.mxu0 %v2069
      %2399 = vmatprep.subr.mxu0 0.0
      %2400 = vmatpush2.msra.mxu0 %v2068
      %2401 = vmatprep.subr.mxu0 0.0
      %2402 = vmatpush2.msra.mxu0 %v2067
      %2403 = vmatprep.subr.mxu0 0.0
      %2404 = vmatpush2.msra.mxu0 %v2066
      %2405 = vmatprep.subr.mxu0 0.0
      %2406 = vmatpush2.msra.mxu0 %v2065
      %2407 = vmatprep.subr.mxu0 0.0
      %2408 = vmatpush2.msra.mxu0 %v2064
      %2409 = vmatprep.subr.mxu0 0.0
      %2410 = vmatpush2.msra.mxu0 %v2063
      %2411 = vmatprep.subr.mxu0 0.0
      %2412 = vmatpush2.msra.mxu0 %v2062
      %2413 = vmatprep.subr.mxu0 0.0
      %2414 = vmatpush2.msra.mxu0 %v2061
      %2415 = vmatprep.mubr.f32.mxu0 %v1984
      %2416 = vmatmul.mubr.f32.gmra.mxu0 %v1983
      %v2417 = vpop.f32.mrf.mxu0
      %v2418 = vadd.f32 %v2343, %v2417
      %v2419 = vpop.f32.mrf.mxu0
      %2420 = vmatprep.mubr.f32.mxu0 %v2000
      %2421 = vmatmul.mubr.f32.gmra.mxu0 %v1999
      %v2422 = vpop.f32.mrf.mxu0
      %v2423 = vadd.f32 %v2348, %v2422
      %v2424 = vpop.f32.mrf.mxu0
      %2425 = vdwg.mxu0
      %2426 = vmatprep.subr.mxu0 0.0
      %2427 = vmatpush1.msra.mxu0 %v2092
      %2428 = vmatprep.subr.mxu0 0.0
      %2429 = vmatpush1.msra.mxu0 %v2091
      %2430 = vmatprep.subr.mxu0 0.0
      %2431 = vmatpush1.msra.mxu0 %v2090
      %2432 = vmatprep.subr.mxu0 0.0
      %2433 = vmatpush1.msra.mxu0 %v2089
      %2434 = vmatprep.subr.mxu0 0.0
      %2435 = vmatpush1.msra.mxu0 %v2088
      %2436 = vmatprep.subr.mxu0 0.0
      %2437 = vmatpush1.msra.mxu0 %v2087
      %2438 = vmatprep.subr.mxu0 0.0
      %2439 = vmatpush1.msra.mxu0 %v2086
      %2440 = vmatprep.subr.mxu0 0.0
      %2441 = vmatpush1.msra.mxu0 %v2085
      %2442 = vmatprep.subr.mxu0 0.0
      %2443 = vmatpush1.msra.mxu0 %v2084
      %2444 = vmatprep.subr.mxu0 0.0
      %2445 = vmatpush1.msra.mxu0 %v2083
      %2446 = vmatprep.subr.mxu0 0.0
      %2447 = vmatpush1.msra.mxu0 %v2082
      %2448 = vmatprep.subr.mxu0 0.0
      %2449 = vmatpush1.msra.mxu0 %v2081
      %2450 = vmatprep.subr.mxu0 0.0
      %2451 = vmatpush1.msra.mxu0 %v2080
      %2452 = vmatprep.subr.mxu0 0.0
      %2453 = vmatpush1.msra.mxu0 %v2079
      %2454 = vmatprep.subr.mxu0 0.0
      %2455 = vmatpush1.msra.mxu0 %v2078
      %2456 = vmatprep.subr.mxu0 0.0
      %2457 = vmatpush1.msra.mxu0 %v2077
      %2458 = vmatprep.subr.mxu0 0.0
      %2459 = vmatpush2.msra.mxu0 %v2108
      %2460 = vmatprep.subr.mxu0 0.0
      %2461 = vmatpush2.msra.mxu0 %v2107
      %2462 = vmatprep.subr.mxu0 0.0
      %2463 = vmatpush2.msra.mxu0 %v2106
      %2464 = vmatprep.subr.mxu0 0.0
      %2465 = vmatpush2.msra.mxu0 %v2105
      %2466 = vmatprep.subr.mxu0 0.0
      %2467 = vmatpush2.msra.mxu0 %v2104
      %2468 = vmatprep.subr.mxu0 0.0
      %2469 = vmatpush2.msra.mxu0 %v2103
      %2470 = vmatprep.subr.mxu0 0.0
      %2471 = vmatpush2.msra.mxu0 %v2102
      %2472 = vmatprep.subr.mxu0 0.0
      %2473 = vmatpush2.msra.mxu0 %v2101
      %2474 = vmatprep.subr.mxu0 0.0
      %2475 = vmatpush2.msra.mxu0 %v2100
      %2476 = vmatprep.subr.mxu0 0.0
      %2477 = vmatpush2.msra.mxu0 %v2099
      %2478 = vmatprep.subr.mxu0 0.0
      %2479 = vmatpush2.msra.mxu0 %v2098
      %2480 = vmatprep.subr.mxu0 0.0
      %2481 = vmatpush2.msra.mxu0 %v2097
      %2482 = vmatprep.subr.mxu0 0.0
      %2483 = vmatpush2.msra.mxu0 %v2096
      %2484 = vmatprep.subr.mxu0 0.0
      %2485 = vmatpush2.msra.mxu0 %v2095
      %2486 = vmatprep.subr.mxu0 0.0
      %2487 = vmatpush2.msra.mxu0 %v2094
      %2488 = vmatprep.subr.mxu0 0.0
      %2489 = vmatpush2.msra.mxu0 %v2093
      %2490 = vmatprep.mubr.f32.mxu0 %v1986
      %2491 = vmatmul.mubr.f32.gmra.mxu0 %v1985
      %v2492 = vpop.f32.mrf.mxu0
      %v2493 = vadd.f32 %v2418, %v2492
      %v2494 = vpop.f32.mrf.mxu0
      %2495 = vmatprep.mubr.f32.mxu0 %v2002
      %2496 = vmatmul.mubr.f32.gmra.mxu0 %v2001
      %v2497 = vpop.f32.mrf.mxu0
      %v2498 = vadd.f32 %v2423, %v2497
      %v2499 = vpop.f32.mrf.mxu0
      %2500 = vdwg.mxu0
      %2501 = vmatprep.subr.mxu0 0.0
      %2502 = vmatpush1.msra.mxu0 %v2124
      %2503 = vmatprep.subr.mxu0 0.0
      %2504 = vmatpush1.msra.mxu0 %v2123
      %2505 = vmatprep.subr.mxu0 0.0
      %2506 = vmatpush1.msra.mxu0 %v2122
      %2507 = vmatprep.subr.mxu0 0.0
      %2508 = vmatpush1.msra.mxu0 %v2121
      %2509 = vmatprep.subr.mxu0 0.0
      %2510 = vmatpush1.msra.mxu0 %v2120
      %2511 = vmatprep.subr.mxu0 0.0
      %2512 = vmatpush1.msra.mxu0 %v2119
      %2513 = vmatprep.subr.mxu0 0.0
      %2514 = vmatpush1.msra.mxu0 %v2118
      %2515 = vmatprep.subr.mxu0 0.0
      %2516 = vmatpush1.msra.mxu0 %v2117
      %2517 = vmatprep.subr.mxu0 0.0
      %2518 = vmatpush1.msra.mxu0 %v2116
      %2519 = vmatprep.subr.mxu0 0.0
      %2520 = vmatpush1.msra.mxu0 %v2115
      %2521 = vmatprep.subr.mxu0 0.0
      %2522 = vmatpush1.msra.mxu0 %v2114
      %2523 = vmatprep.subr.mxu0 0.0
      %2524 = vmatpush1.msra.mxu0 %v2113
      %2525 = vmatprep.subr.mxu0 0.0
      %2526 = vmatpush1.msra.mxu0 %v2112
      %2527 = vmatprep.subr.mxu0 0.0
      %2528 = vmatpush1.msra.mxu0 %v2111
      %2529 = vmatprep.subr.mxu0 0.0
      %2530 = vmatpush1.msra.mxu0 %v2110
      %2531 = vmatprep.subr.mxu0 0.0
      %2532 = vmatpush1.msra.mxu0 %v2109
      %2533 = vmatprep.subr.mxu0 0.0
      %2534 = vmatpush2.msra.mxu0 %v2140
      %2535 = vmatprep.subr.mxu0 0.0
      %2536 = vmatpush2.msra.mxu0 %v2139
      %2537 = vmatprep.subr.mxu0 0.0
      %2538 = vmatpush2.msra.mxu0 %v2138
      %2539 = vmatprep.subr.mxu0 0.0
      %2540 = vmatpush2.msra.mxu0 %v2137
      %2541 = vmatprep.subr.mxu0 0.0
      %2542 = vmatpush2.msra.mxu0 %v2136
      %2543 = vmatprep.subr.mxu0 0.0
      %2544 = vmatpush2.msra.mxu0 %v2135
      %2545 = vmatprep.subr.mxu0 0.0
      %2546 = vmatpush2.msra.mxu0 %v2134
      %2547 = vmatprep.subr.mxu0 0.0
      %2548 = vmatpush2.msra.mxu0 %v2133
      %2549 = vmatprep.subr.mxu0 0.0
      %2550 = vmatpush2.msra.mxu0 %v2132
      %2551 = vmatprep.subr.mxu0 0.0
      %2552 = vmatpush2.msra.mxu0 %v2131
      %2553 = vmatprep.subr.mxu0 0.0
      %2554 = vmatpush2.msra.mxu0 %v2130
      %2555 = vmatprep.subr.mxu0 0.0
      %2556 = vmatpush2.msra.mxu0 %v2129
      %2557 = vmatprep.subr.mxu0 0.0
      %2558 = vmatpush2.msra.mxu0 %v2128
      %2559 = vmatprep.subr.mxu0 0.0
      %2560 = vmatpush2.msra.mxu0 %v2127
      %2561 = vmatprep.subr.mxu0 0.0
      %2562 = vmatpush2.msra.mxu0 %v2126
      %2563 = vmatprep.subr.mxu0 0.0
      %2564 = vmatpush2.msra.mxu0 %v2125
      %2565 = vmatprep.mubr.f32.mxu0 %v1988
      %2566 = vmatmul.mubr.f32.gmra.mxu0 %v1987
      %v2567 = vpop.f32.mrf.mxu0
      %v2568 = vadd.f32 %v2493, %v2567
      %v2569 = vpop.f32.mrf.mxu0
      %2570 = vmatprep.mubr.f32.mxu0 %v2004
      %2571 = vmatmul.mubr.f32.gmra.mxu0 %v2003
      %v2572 = vpop.f32.mrf.mxu0
      %v2573 = vadd.f32 %v2498, %v2572
      %v2574 = vpop.f32.mrf.mxu0
      %2575 = vdwg.mxu0
      %2576 = vmatprep.subr.mxu0 0.0
      %2577 = vmatpush1.msra.mxu0 %v2156
      %2578 = vmatprep.subr.mxu0 0.0
      %2579 = vmatpush1.msra.mxu0 %v2155
      %2580 = vmatprep.subr.mxu0 0.0
      %2581 = vmatpush1.msra.mxu0 %v2154
      %2582 = vmatprep.subr.mxu0 0.0
      %2583 = vmatpush1.msra.mxu0 %v2153
      %2584 = vmatprep.subr.mxu0 0.0
      %2585 = vmatpush1.msra.mxu0 %v2152
      %2586 = vmatprep.subr.mxu0 0.0
      %2587 = vmatpush1.msra.mxu0 %v2151
      %2588 = vmatprep.subr.mxu0 0.0
      %2589 = vmatpush1.msra.mxu0 %v2150
      %2590 = vmatprep.subr.mxu0 0.0
      %2591 = vmatpush1.msra.mxu0 %v2149
      %2592 = vmatprep.subr.mxu0 0.0
      %2593 = vmatpush1.msra.mxu0 %v2148
      %2594 = vmatprep.subr.mxu0 0.0
      %2595 = vmatpush1.msra.mxu0 %v2147
      %2596 = vmatprep.subr.mxu0 0.0
      %2597 = vmatpush1.msra.mxu0 %v2146
      %2598 = vmatprep.subr.mxu0 0.0
      %2599 = vmatpush1.msra.mxu0 %v2145
      %2600 = vmatprep.subr.mxu0 0.0
      %2601 = vmatpush1.msra.mxu0 %v2144
      %2602 = vmatprep.subr.mxu0 0.0
      %2603 = vmatpush1.msra.mxu0 %v2143
      %2604 = vmatprep.subr.mxu0 0.0
      %2605 = vmatpush1.msra.mxu0 %v2142
      %2606 = vmatprep.subr.mxu0 0.0
      %2607 = vmatpush1.msra.mxu0 %v2141
      %2608 = vmatprep.subr.mxu0 0.0
      %2609 = vmatpush2.msra.mxu0 %v2172
      %2610 = vmatprep.subr.mxu0 0.0
      %2611 = vmatpush2.msra.mxu0 %v2171
      %2612 = vmatprep.subr.mxu0 0.0
      %2613 = vmatpush2.msra.mxu0 %v2170
      %2614 = vmatprep.subr.mxu0 0.0
      %2615 = vmatpush2.msra.mxu0 %v2169
      %2616 = vmatprep.subr.mxu0 0.0
      %2617 = vmatpush2.msra.mxu0 %v2168
      %2618 = vmatprep.subr.mxu0 0.0
      %2619 = vmatpush2.msra.mxu0 %v2167
      %2620 = vmatprep.subr.mxu0 0.0
      %2621 = vmatpush2.msra.mxu0 %v2166
      %2622 = vmatprep.subr.mxu0 0.0
      %2623 = vmatpush2.msra.mxu0 %v2165
      %2624 = vmatprep.subr.mxu0 0.0
      %2625 = vmatpush2.msra.mxu0 %v2164
      %2626 = vmatprep.subr.mxu0 0.0
      %2627 = vmatpush2.msra.mxu0 %v2163
      %2628 = vmatprep.subr.mxu0 0.0
      %2629 = vmatpush2.msra.mxu0 %v2162
      %2630 = vmatprep.subr.mxu0 0.0
      %2631 = vmatpush2.msra.mxu0 %v2161
      %2632 = vmatprep.subr.mxu0 0.0
      %2633 = vmatpush2.msra.mxu0 %v2160
      %2634 = vmatprep.subr.mxu0 0.0
      %2635 = vmatpush2.msra.mxu0 %v2159
      %2636 = vmatprep.subr.mxu0 0.0
      %2637 = vmatpush2.msra.mxu0 %v2158
      %2638 = vmatprep.subr.mxu0 0.0
      %2639 = vmatpush2.msra.mxu0 %v2157
      %2640 = vmatprep.mubr.f32.mxu0 %v1990
      %2641 = vmatmul.mubr.f32.gmra.mxu0 %v1989
      %v2642 = vpop.f32.mrf.mxu0
      %v2643 = vadd.f32 %v2568, %v2642
      %v2644 = vpop.f32.mrf.mxu0
      %2645 = vmatprep.mubr.f32.mxu0 %v2006
      %2646 = vmatmul.mubr.f32.gmra.mxu0 %v2005
      %v2647 = vpop.f32.mrf.mxu0
      %v2648 = vadd.f32 %v2573, %v2647
      %v2649 = vpop.f32.mrf.mxu0
      %2650 = vdwg.mxu0
      %2651 = vmatprep.subr.mxu0 0.0
      %2652 = vmatpush1.msra.mxu0 %v2188
      %2653 = vmatprep.subr.mxu0 0.0
      %2654 = vmatpush1.msra.mxu0 %v2187
      %2655 = vmatprep.subr.mxu0 0.0
      %2656 = vmatpush1.msra.mxu0 %v2186
      %2657 = vmatprep.subr.mxu0 0.0
      %2658 = vmatpush1.msra.mxu0 %v2185
      %2659 = vmatprep.subr.mxu0 0.0
      %2660 = vmatpush1.msra.mxu0 %v2184
      %2661 = vmatprep.subr.mxu0 0.0
      %2662 = vmatpush1.msra.mxu0 %v2183
      %2663 = vmatprep.subr.mxu0 0.0
      %2664 = vmatpush1.msra.mxu0 %v2182
      %2665 = vmatprep.subr.mxu0 0.0
      %2666 = vmatpush1.msra.mxu0 %v2181
      %2667 = vmatprep.subr.mxu0 0.0
      %2668 = vmatpush1.msra.mxu0 %v2180
      %2669 = vmatprep.subr.mxu0 0.0
      %2670 = vmatpush1.msra.mxu0 %v2179
      %2671 = vmatprep.subr.mxu0 0.0
      %2672 = vmatpush1.msra.mxu0 %v2178
      %2673 = vmatprep.subr.mxu0 0.0
      %2674 = vmatpush1.msra.mxu0 %v2177
      %2675 = vmatprep.subr.mxu0 0.0
      %2676 = vmatpush1.msra.mxu0 %v2176
      %2677 = vmatprep.subr.mxu0 0.0
      %2678 = vmatpush1.msra.mxu0 %v2175
      %2679 = vmatprep.subr.mxu0 0.0
      %2680 = vmatpush1.msra.mxu0 %v2174
      %2681 = vmatprep.subr.mxu0 0.0
      %2682 = vmatpush1.msra.mxu0 %v2173
      %2683 = vmatprep.subr.mxu0 0.0
      %2684 = vmatpush2.msra.mxu0 %v2204
      %2685 = vmatprep.subr.mxu0 0.0
      %2686 = vmatpush2.msra.mxu0 %v2203
      %2687 = vmatprep.subr.mxu0 0.0
      %2688 = vmatpush2.msra.mxu0 %v2202
      %2689 = vmatprep.subr.mxu0 0.0
      %2690 = vmatpush2.msra.mxu0 %v2201
      %2691 = vmatprep.subr.mxu0 0.0
      %2692 = vmatpush2.msra.mxu0 %v2200
      %2693 = vmatprep.subr.mxu0 0.0
      %2694 = vmatpush2.msra.mxu0 %v2199
      %2695 = vmatprep.subr.mxu0 0.0
      %2696 = vmatpush2.msra.mxu0 %v2198
      %2697 = vmatprep.subr.mxu0 0.0
      %2698 = vmatpush2.msra.mxu0 %v2197
      %2699 = vmatprep.subr.mxu0 0.0
      %2700 = vmatpush2.msra.mxu0 %v2196
      %2701 = vmatprep.subr.mxu0 0.0
      %2702 = vmatpush2.msra.mxu0 %v2195
      %2703 = vmatprep.subr.mxu0 0.0
      %2704 = vmatpush2.msra.mxu0 %v2194
      %2705 = vmatprep.subr.mxu0 0.0
      %2706 = vmatpush2.msra.mxu0 %v2193
      %2707 = vmatprep.subr.mxu0 0.0
      %2708 = vmatpush2.msra.mxu0 %v2192
      %2709 = vmatprep.subr.mxu0 0.0
      %2710 = vmatpush2.msra.mxu0 %v2191
      %2711 = vmatprep.subr.mxu0 0.0
      %2712 = vmatpush2.msra.mxu0 %v2190
      %2713 = vmatprep.subr.mxu0 0.0
      %2714 = vmatpush2.msra.mxu0 %v2189
      %2715 = vmatprep.mubr.f32.mxu0 %v1992
      %2716 = vmatmul.mubr.f32.gmra.mxu0 %v1991
      %v2717 = vpop.f32.mrf.mxu0
      %v2718 = vadd.f32 %v2643, %v2717
      %v2719 = vpop.f32.mrf.mxu0
      %2720 = vmatprep.mubr.f32.mxu0 %v2008
      %2721 = vmatmul.mubr.f32.gmra.mxu0 %v2007
      %v2722 = vpop.f32.mrf.mxu0
      %v2723 = vadd.f32 %v2648, %v2722
      %v2724 = vpop.f32.mrf.mxu0
      %2725 = vdwg.mxu0
      %2726 = vmatprep.subr.mxu0 0.0
      %2727 = vmatpush1.msra.mxu0 %v2220
      %2728 = vmatprep.subr.mxu0 0.0
      %2729 = vmatpush1.msra.mxu0 %v2219
      %2730 = vmatprep.subr.mxu0 0.0
      %2731 = vmatpush1.msra.mxu0 %v2218
      %2732 = vmatprep.subr.mxu0 0.0
      %2733 = vmatpush1.msra.mxu0 %v2217
      %2734 = vmatprep.subr.mxu0 0.0
      %2735 = vmatpush1.msra.mxu0 %v2216
      %2736 = vmatprep.subr.mxu0 0.0
      %2737 = vmatpush1.msra.mxu0 %v2215
      %2738 = vmatprep.subr.mxu0 0.0
      %2739 = vmatpush1.msra.mxu0 %v2214
      %2740 = vmatprep.subr.mxu0 0.0
      %2741 = vmatpush1.msra.mxu0 %v2213
      %2742 = vmatprep.subr.mxu0 0.0
      %2743 = vmatpush1.msra.mxu0 %v2212
      %2744 = vmatprep.subr.mxu0 0.0
      %2745 = vmatpush1.msra.mxu0 %v2211
      %2746 = vmatprep.subr.mxu0 0.0
      %2747 = vmatpush1.msra.mxu0 %v2210
      %2748 = vmatprep.subr.mxu0 0.0
      %2749 = vmatpush1.msra.mxu0 %v2209
      %2750 = vmatprep.subr.mxu0 0.0
      %2751 = vmatpush1.msra.mxu0 %v2208
      %2752 = vmatprep.subr.mxu0 0.0
      %2753 = vmatpush1.msra.mxu0 %v2207
      %2754 = vmatprep.subr.mxu0 0.0
      %2755 = vmatpush1.msra.mxu0 %v2206
      %2756 = vmatprep.subr.mxu0 0.0
      %2757 = vmatpush1.msra.mxu0 %v2205
      %2758 = vmatprep.subr.mxu0 0.0
      %2759 = vmatpush2.msra.mxu0 %v2236
      %2760 = vmatprep.subr.mxu0 0.0
      %2761 = vmatpush2.msra.mxu0 %v2235
      %2762 = vmatprep.subr.mxu0 0.0
      %2763 = vmatpush2.msra.mxu0 %v2234
      %2764 = vmatprep.subr.mxu0 0.0
      %2765 = vmatpush2.msra.mxu0 %v2233
      %2766 = vmatprep.subr.mxu0 0.0
      %2767 = vmatpush2.msra.mxu0 %v2232
      %2768 = vmatprep.subr.mxu0 0.0
      %2769 = vmatpush2.msra.mxu0 %v2231
      %2770 = vmatprep.subr.mxu0 0.0
      %2771 = vmatpush2.msra.mxu0 %v2230
      %2772 = vmatprep.subr.mxu0 0.0
      %2773 = vmatpush2.msra.mxu0 %v2229
      %2774 = vmatprep.subr.mxu0 0.0
      %2775 = vmatpush2.msra.mxu0 %v2228
      %2776 = vmatprep.subr.mxu0 0.0
      %2777 = vmatpush2.msra.mxu0 %v2227
      %2778 = vmatprep.subr.mxu0 0.0
      %2779 = vmatpush2.msra.mxu0 %v2226
      %2780 = vmatprep.subr.mxu0 0.0
      %2781 = vmatpush2.msra.mxu0 %v2225
      %2782 = vmatprep.subr.mxu0 0.0
      %2783 = vmatpush2.msra.mxu0 %v2224
      %2784 = vmatprep.subr.mxu0 0.0
      %2785 = vmatpush2.msra.mxu0 %v2223
      %2786 = vmatprep.subr.mxu0 0.0
      %2787 = vmatpush2.msra.mxu0 %v2222
      %2788 = vmatprep.subr.mxu0 0.0
      %2789 = vmatpush2.msra.mxu0 %v2221
      %2790 = vmatprep.mubr.f32.mxu0 %v1994
      %2791 = vmatmul.mubr.f32.gmra.mxu0 %v1993
      %v2792 = vpop.f32.mrf.mxu0
      %v2793 = vadd.f32 %v2718, %v2792
      %v2794 = vpop.f32.mrf.mxu0
      %2795 = vmatprep.mubr.f32.mxu0 %v2010
      %2796 = vmatmul.mubr.f32.gmra.mxu0 %v2009
      %v2797 = vpop.f32.mrf.mxu0
      %v2798 = vadd.f32 %v2723, %v2797
      %v2799 = vpop.f32.mrf.mxu0
      %2800 = vdwg.mxu0
      %2801 = vmatprep.subr.mxu0 0.0
      %2802 = vmatpush1.msra.mxu0 %v2252
      %2803 = vmatprep.subr.mxu0 0.0
      %2804 = vmatpush1.msra.mxu0 %v2251
      %2805 = vmatprep.subr.mxu0 0.0
      %2806 = vmatpush1.msra.mxu0 %v2250
      %2807 = vmatprep.subr.mxu0 0.0
      %2808 = vmatpush1.msra.mxu0 %v2249
      %2809 = vmatprep.subr.mxu0 0.0
      %2810 = vmatpush1.msra.mxu0 %v2248
      %2811 = vmatprep.subr.mxu0 0.0
      %2812 = vmatpush1.msra.mxu0 %v2247
      %2813 = vmatprep.subr.mxu0 0.0
      %2814 = vmatpush1.msra.mxu0 %v2246
      %2815 = vmatprep.subr.mxu0 0.0
      %2816 = vmatpush1.msra.mxu0 %v2245
      %2817 = vmatprep.subr.mxu0 0.0
      %2818 = vmatpush1.msra.mxu0 %v2244
      %2819 = vmatprep.subr.mxu0 0.0
      %2820 = vmatpush1.msra.mxu0 %v2243
      %2821 = vmatprep.subr.mxu0 0.0
      %2822 = vmatpush1.msra.mxu0 %v2242
      %2823 = vmatprep.subr.mxu0 0.0
      %2824 = vmatpush1.msra.mxu0 %v2241
      %2825 = vmatprep.subr.mxu0 0.0
      %2826 = vmatpush1.msra.mxu0 %v2240
      %2827 = vmatprep.subr.mxu0 0.0
      %2828 = vmatpush1.msra.mxu0 %v2239
      %2829 = vmatprep.subr.mxu0 0.0
      %2830 = vmatpush1.msra.mxu0 %v2238
      %2831 = vmatprep.subr.mxu0 0.0
      %2832 = vmatpush1.msra.mxu0 %v2237
      %2833 = vmatprep.subr.mxu0 0.0
      %2834 = vmatpush2.msra.mxu0 %v2268
      %2835 = vmatprep.subr.mxu0 0.0
      %2836 = vmatpush2.msra.mxu0 %v2267
      %2837 = vmatprep.subr.mxu0 0.0
      %2838 = vmatpush2.msra.mxu0 %v2266
      %2839 = vmatprep.subr.mxu0 0.0
      %2840 = vmatpush2.msra.mxu0 %v2265
      %2841 = vmatprep.subr.mxu0 0.0
      %2842 = vmatpush2.msra.mxu0 %v2264
      %2843 = vmatprep.subr.mxu0 0.0
      %2844 = vmatpush2.msra.mxu0 %v2263
      %2845 = vmatprep.subr.mxu0 0.0
      %2846 = vmatpush2.msra.mxu0 %v2262
      %2847 = vmatprep.subr.mxu0 0.0
      %2848 = vmatpush2.msra.mxu0 %v2261
      %2849 = vmatprep.subr.mxu0 0.0
      %2850 = vmatpush2.msra.mxu0 %v2260
      %2851 = vmatprep.subr.mxu0 0.0
      %2852 = vmatpush2.msra.mxu0 %v2259
      %2853 = vmatprep.subr.mxu0 0.0
      %2854 = vmatpush2.msra.mxu0 %v2258
      %2855 = vmatprep.subr.mxu0 0.0
      %2856 = vmatpush2.msra.mxu0 %v2257
      %2857 = vmatprep.subr.mxu0 0.0
      %2858 = vmatpush2.msra.mxu0 %v2256
      %2859 = vmatprep.subr.mxu0 0.0
      %2860 = vmatpush2.msra.mxu0 %v2255
      %2861 = vmatprep.subr.mxu0 0.0
      %2862 = vmatpush2.msra.mxu0 %v2254
      %2863 = vmatprep.subr.mxu0 0.0
      %2864 = vmatpush2.msra.mxu0 %v2253
      %2865 = vmatprep.mubr.f32.mxu0 %v1996
      %2866 = vmatmul.mubr.f32.gmra.mxu0 %v1995
      %v2867 = vpop.f32.mrf.mxu0
      %v2868 = vadd.f32 %v2793, %v2867
      %v2869 = vpop.f32.mrf.mxu0
      %2870 = vmatprep.mubr.f32.mxu0 %v2012
      %2871 = vmatmul.mubr.f32.gmra.mxu0 %v2011
      %v2872 = vpop.f32.mrf.mxu0
      %v2873 = vadd.f32 %v2798, %v2872
      %v2874 = vpop.f32.mrf.mxu0
      %2875 = vdwg.mxu0
      %v2876 = vadd.f32 %v1209, %v2868
      %v2877 = vadd.f32 %v1210, %v2873
      %v2878 = vld [vmem:[%s591] sm:$0x1]
      %v2879 = vld [vmem:[%s594] sm:$0x1]
      %v2880 = vsel %vm614, %v2876, 0.0
      %2881 = vadd.xlane.f32.xlu0 %v2880
      %v2882 = vpop.xlane.xlu0 %2881
      %v2883 = vsel %vm614, %v2877, 0.0
      %2884 = vadd.xlane.f32.xlu0 %v2883
      %v2885 = vpop.xlane.xlu0 %2884
      %v2886 = vmul.f32 %v2882, %v1174
      %v2887 = vmul.f32 %v2885, %v1174
      %v2888 = vsub.f32 %v2876, %v2886
      %v2889 = vsub.f32 %v2877, %v2887
      %v2890 = vmul.f32 %v2888, %v2888
      %v2891 = vmul.f32 %v2889, %v2889
      %v2892 = vsel %vm614, %v2890, 0.0
      %2893 = vadd.xlane.f32.xlu0 %v2892
      %v2894 = vpop.xlane.xlu0 %2893
      %v2895 = vsel %vm614, %v2891, 0.0
      %2896 = vadd.xlane.f32.xlu0 %v2895
      %v2897 = vpop.xlane.xlu0 %2896
      %v2898 = vmul.f32 %v2894, %v1174
      %v2899 = vmul.f32 %v2897, %v1174
      %v2900 = vadd.f32 %v2898, 1e-05
      %v2901 = vadd.f32 %v2899, 1e-05
      %v2902 = vrsqrt.pop %v2900
      %v2903 = vrsqrt.pop %v2901
      %v2904 = vmul.f32 %v2888, %v2902
      %v2905 = vmul.f32 %v2889, %v2903
      %v2907 = vlaneseq
      %v2908 = vshrl.u32 %v2907, 7
      %v2909 = vsub.s32 0, %v2908
      %v2910 = vrot.slane %v2878, %v2909
      %v2912 = vmul.f32 %v2904, %v2910
      %v2913 = vmul.f32 %v2905, %v2910
      %v2915 = vlaneseq
      %v2916 = vshrl.u32 %v2915, 7
      %v2917 = vsub.s32 0, %v2916
      %v2918 = vrot.slane %v2879, %v2917
      %v2920 = vadd.f32 %v2912, %v2918
      %v2921 = vadd.f32 %v2913, %v2918
      %2922 = vst.msk [vmem:[#allocation2] sm:$0xff] %vm614, %v2920
      %2923 = vst.msk [vmem:[#allocation2 + $0x8] sm:$0xff] %vm614, %v2921
      %p2924 = scmp.eq.s32.totalorder %s24, 15
      // Predicated region
      $region77: #{forward.2} parent=71 // pred_check
        %p2925 = pneg %p2924
      $region78: #{forward.2} parent=71 // pred_check_branch
        %2927 = sbr.rel (%p2925) target = $region80
      $region79: #{forward.2} parent=71 // pred_region
        %2928 = vst.msk [vmem:[%s13] sm:$0xff] %vm614, %v2920
        %2929 = vst.msk [vmem:[%s13 + $0x8] sm:$0xff] %vm614, %v2921
      $region80: #{forward.2} parent=71 // pred_fallthru
        _
      // Predicated region
      $region81: #{forward.2} parent=71 // pred_check
        %p2930 = pneg %p370
      $region82: #{forward.2} parent=71 // pred_check_branch
        %2932 = sbr.rel (%p2930) target = $region84
      $region83: #{forward.2} parent=71 // pred_region
        _
      $region84: #{forward.2} parent=71 // pred_fallthru
        _
      // Predicated region
      $region85: #{forward.2} parent=71 // pred_check
        %p2933 = pneg %p370
      $region86: #{forward.2} parent=71 // pred_check_branch
        %2935 = sbr.rel (%p2933) target = $region88
      $region87: #{forward.2} parent=71 // pred_region
        _
      $region88: #{forward.2} parent=71 // pred_fallthru
        _
    $region72: #{forward.2} parent=5 // pred_fallthru
      _
    %p2936 = scmp.le.s32.totalorder 2, %s19
    // Predicated region
    $region89: #{forward.2} parent=5 // pred_check
      %p2937 = pneg %p2936
    $region90: #{forward.2} parent=5 // pred_check_branch
      %2939 = sbr.rel (%p2937) target = $region92
    $region91: #{forward.2} parent=5 // pred_region
      %s2940 = ssub.s32 %s19, 2
    $region92: #{forward.2} parent=5 // pred_fallthru
      _
  $region6: #{forward.2} parent=0 // loop_footer
    %s23 = sadd.s32 1, %s19
  $region7: #{forward.2} parent=0 // loop_footer_branch
    %18 = sbr.rel target = $region3
  $region8: #{forward.2} parent=0 // loop_exit
    _

</llo_original>
